<compile_context>
chip_gen: v6e
topology: v6e:2x2x1
jax: 0.10.0
libtpu: 0.0.40
codegen_flags: <defaults>
</compile_context>

<pallas_src>
import jax
import jax.numpy as jnp
from jax.experimental import pallas as pl
from jax.experimental.pallas import tpu as pltpu

EPS = 1e-30


def _silu(z):
    # exp lands on the EUP; elementwise math stays f32 (v5e has no bf16 VPU/EUP).
    return z * (1.0 / (1.0 + jnp.exp(-z)))


def _periodic_wrap(d):
    # TODO(synk): `periodic_difference_torch` is not defined in the reference
    # source; minimum-image convention on a unit periodic box is assumed.
    # d - floor(d + 0.5) maps any difference into (-0.5, 0.5], so it stays
    # correct even after coordinates drift outside the box across layers.
    return d - jnp.floor(d + 0.5)


def _round_up(v, m):
    return ((v + m - 1) // m) * m


def _default_vmem_limit_bytes():
    # Generation-aware scoped-VMEM limit: ~3/4 of physical (≈48 MiB on v7x's
    # 64 MiB), capped at 64 MiB which is plenty for this kernel.
    try:
        cap = getattr(pltpu.get_tpu_info(), "vmem_capacity_bytes", None)
        if cap:
            return int(min(cap * 3 // 4, 64 * 1024 * 1024))
    except Exception:
        pass
    return 48 * 1024 * 1024


# --------------------------- weight packing (host side) --------------------------
def _pack_egnn_weights(layers, mxu_dtype):
    """Pack per-layer weights into
         vec_slab : (8*L, 128) f32   -- rows used in elementwise math (biases etc.)
         mm_slabs : L arrays (rows, 128) mxu_dtype -- matmul operands, 16-row blocks
       plus static layout metadata for in-kernel carving."""
    f32 = jnp.float32
    vec_width = _round_up(max(max(int(p["hidden"]), int(p["out_size"])) for p in layers), 128)

    vec_rows, mm_slabs, metas = [], [], []
    for p in layers:
        Fin, H, Fout = int(p["in_size"]), int(p["hidden"]), int(p["out_size"])
        G, Ea = int(p["graph_feat"]), int(p["edge_feat"])
        We1 = p["We1"]

        # ---- f32 vector slab rows (exactly 8 per layer) ----
        def _vrow(v):
            v = jnp.asarray(v, f32).reshape(-1)
            return jnp.zeros((vec_width,), f32).at[: v.shape[0]].set(v)

        vec_rows += [
            _vrow(We1[2 * Fin]),      # 0: we1_r  (radial row of We1)
            _vrow(p["be1"][0]),       # 1
            _vrow(p["be2"][0]),       # 2
            _vrow(p["bc1"][0]),       # 3
            _vrow(p["Wc2"][:, 0]),    # 4: wc2_row (width-1 coord projection)
            _vrow(p["bn1"][0]),       # 5
            _vrow(p["bn2"][0]),       # 6
            _vrow(p["bg1"][0]),       # 7
        ]

        # ---- mxu-dtype matmul slab ----
        padc = _round_up(max(2 * H, H, Fout), 128)
        mats, blocks = {}, []
        off = 0

        def _add(name, m):
            nonlocal off
            m = jnp.asarray(m, f32)
            r, c = m.shape
            rp = _round_up(r, 16)     # 16-row blocks: aligned for bf16 (16,128) tiles
            blocks.append(jnp.zeros((rp, padc), f32).at[:r, :c].set(m))
            mats[name] = (off, r, c)
            off += rp

        _add("w_e1_h", jnp.concatenate([We1[:Fin], We1[Fin:2 * Fin]], axis=1))  # (Fin,2H)
        if Ea > 0:
            _add("we1_a", We1[2 * Fin + 1:])                                    # (Ea,H)
        _add("We2", p["We2"])
        _add("Wc1", p["Wc1"])
        _add("Wn1", p["Wn1"])
        _add("Wn2", p["Wn2"])
        _add("Wg1", p["Wg1"])
        _add("Wg2", p["Wg2"])

        mm_slabs.append(jnp.concatenate(blocks, axis=0).astype(mxu_dtype))
        metas.append(dict(Fin=Fin, H=H, Fout=Fout, G=G, Ea=Ea, mats=mats))

    vec_slab = jnp.stack(vec_rows, axis=0)    # (8*L, 128) f32
    return vec_slab, mm_slabs, metas


# --------------------- fused Pallas kernel: full EGNN stack ---------------------
def _make_fused_egnn_kernel(n_nodes, n_coord, metas, has_edge_input, mxu_dtype):
    N, D = n_nodes, n_coord
    E = N * N
    L = len(metas)
    f32 = jnp.float32

    def mm(a, b):
        # MXU matmul; weights arrive already in mxu_dtype (host-side cast), the
        # activation cast is a no-op on the f32 path.  f32 accumulate always.
        return jnp.dot(a.astype(mxu_dtype), b.astype(mxu_dtype),
                       preferred_element_type=f32)

    def kernel(*refs):
        h_ref, x_ref, u_ref, agg_ref, dinv_ref = refs[:5]
        pos = 5
        ea_ref = None
        if has_edge_input:
            ea_ref = refs[pos]
            pos += 1
        vec_ref = refs[pos]
        pos += 1
        w_refs = refs[pos:pos + L]
        h_out_ref, x_out_ref, u_out_ref = refs[pos + L:]

        h = h_ref[...]          # (N, Fin)
        x = x_ref[...]          # (N, D)
        u = u_ref[...]          # (1, G)
        agg = agg_ref[...]      # (N, E)  mask-folded segment-sum matrix
        dinv = dinv_ref[...]    # (N, 1)  1 / max(in_degree, 1)

        for li, meta in enumerate(metas):      # statically unrolled layer loop
            H, Fout, G, Ea = meta["H"], meta["Fout"], meta["G"], meta["Ea"]
            mats = meta["mats"]
            W = w_refs[li]

            def M(name):                       # static slab slice -> matmul weight
                r0, nr, nc = mats[name]
                return W[r0:r0 + nr, 0:nc]

            def V(j, width):                   # static vector-slab row (f32)
                r = 8 * li + j
                return vec_ref[r:r + 1, 0:width]

            we1_r, be1, be2 = V(0, H), V(1, H), V(2, H)
            bc1, wc2_row = V(3, H), V(4, H)
            bn1, bn2, bg1 = V(5, H), V(6, Fout), V(7, H)

            # ---- geometry on the dense (dst, src) pair grid (pure broadcasts) ----
            xd3 = _periodic_wrap(x[None, :, :] - x[:, None, :])     # (N,N,D) x_src-x_dst
            radial3 = jnp.sum(xd3 * xd3, axis=-1, keepdims=True)    # (N,N,1)
            # self-pairs have xd == 0 exactly, so 0 * rsqrt(EPS) == 0 is safe.
            xdn = (xd3 * jax.lax.rsqrt(radial3 + EPS)).reshape(E, D)  # (E,D)

            # ---- edge MLP phi_e: one fused (N,Fin)x(Fin,2H) projection ----
            hw = mm(h, M("w_e1_h"))                                  # (N, 2H)
            pre1 = (hw[None, :, :H]           # src term, broadcast over dst
                    + hw[:, None, H:]         # dst term, broadcast over src
                    + radial3 * we1_r + be1).reshape(E, H)
            if Ea > 0:
                pre1 = pre1 + mm(ea_ref[...], M("we1_a"))            # (E,H)
            msg_h = _silu(mm(_silu(pre1), M("We2")) + be2)           # (E,H)

            # ---- coord MLP phi_x: width-1 output as a lane reduce ----
            c1 = _silu(mm(msg_h, M("Wc1")) + bc1)
            coef = jnp.sum(c1 * wc2_row, axis=-1, keepdims=True)     # (E,1)

            # ---- masked aggregation: ONE matmul for sum(msg_h) and sum(msg_x) ----
            msg = jnp.concatenate([msg_h, coef * xdn], axis=-1)      # (E, H+D)
            aggd = mm(agg, msg)                                      # (N, H+D)
            h_neigh = aggd[:, :H]
            x_neigh = aggd[:, H:] * dinv                             # mean via dinv

            # ---- node MLP phi_h: fused first-layer matmul ----
            n_in = jnp.concatenate(
                [h, h_neigh, jnp.broadcast_to(u, (N, G))], axis=-1)  # (N, Fin+H+G)
            h_new = mm(_silu(mm(n_in, M("Wn1")) + bn1), M("Wn2")) + bn2

            # ---- graph MLP: fused first-layer matmul ----
            h_mean = jnp.sum(h_new, axis=0, keepdims=True) * (1.0 / N)
            g_in = jnp.concatenate([u, h_mean], axis=-1)             # (1, G+Fout)
            u = mm(_silu(mm(g_in, M("Wg1")) + bg1), M("Wg2"))        # (1, H)

            x = x + x_neigh
            h = h_new

        h_out_ref[...] = h
        x_out_ref[...] = x
        u_out_ref[...] = u

    return kernel


# --------------------------- wrapper for the full stack --------------------------
def egnn_forward_pallas(layers, h0, x0, u0, A, ea_flat=None,
                        mxu_dtype=jnp.bfloat16, vmem_limit_bytes=None):
    """bf16 MXU operands are safe on v5e/v6e/v7x (elementwise math / accumulate
    stay f32); pass mxu_dtype=jnp.float32 for bit-accurate matmuls."""
    f32 = jnp.float32
    N, D = x0.shape
    E = N * N
    if vmem_limit_bytes is None:
        vmem_limit_bytes = _default_vmem_limit_bytes()

    # Graph constants (tiny; computed once per call, constant-folded under jit):
    #   agg[n, k] = A[dst(k), src(k)] if n == dst(k) else 0, with k = dst*N + src
    #   dinv[n]   = 1 / max(in_degree(n), 1)
    # NOTE: this dense (N, E) form is only for small N; the scaling path uses a
    # per-dst-block contraction against A rows instead (see header comment).
    dst_of_edge = jnp.arange(E, dtype=jnp.int32) // N
    seg = (dst_of_edge[None, :] == jnp.arange(N, dtype=jnp.int32)[:, None]).astype(f32)
    agg = (seg * A.reshape(1, E).astype(f32)).astype(mxu_dtype)          # (N, E)
    dinv = 1.0 / jnp.maximum(A.sum(axis=1, keepdims=True).astype(f32), 1.0)  # (N, 1)

    layer_eas = tuple(int(p["edge_feat"]) for p in layers)
    has_edge_input = any(ea > 0 for ea in layer_eas)
    if has_edge_input and ea_flat is None:
        raise ValueError("edge features required but not provided")

    vec_slab, mm_slabs, metas = _pack_egnn_weights(layers, mxu_dtype)

    args = [h0.astype(f32), x0.astype(f32), u0.astype(f32), agg, dinv]
    if has_edge_input:
        args.append(ea_flat.astype(f32))
    args.append(vec_slab)
    args.extend(mm_slabs)

    Fout = int(layers[-1]["out_size"])
    Hlast = int(layers[-1]["hidden"])
    out_shape = (
        jax.ShapeDtypeStruct((N, Fout), f32),
        jax.ShapeDtypeStruct((N, D), f32),
        jax.ShapeDtypeStruct((1, Hlast), f32),
    )
    vspec = pl.BlockSpec(memory_space=pltpu.MemorySpace.VMEM)
    kernel = _make_fused_egnn_kernel(N, D, metas, has_edge_input, mxu_dtype)
    return pl.pallas_call(
        kernel,
        out_shape=out_shape,
        in_specs=[vspec] * len(args),
        out_specs=(vspec, vspec, vspec),
        compiler_params=pltpu.CompilerParams(vmem_limit_bytes=int(vmem_limit_bytes)),
    )(*args)


# --------------------------- parameter init (deterministic) ----------------------
def _init_linear(key, fan_in, fan_out):
    k1, k2 = jax.random.split(key)
    bound = 1.0 / (fan_in ** 0.5)
    w = jax.random.uniform(k1, (fan_in, fan_out), jnp.float32, -bound, bound)
    b = jax.random.uniform(k2, (1, fan_out), jnp.float32, -bound, bound)
    return w, b


def init_egnn_conv(key, in_size, hidden, out_size, edge_feat, graph_feat):
    ks = jax.random.split(key, 8)
    We1, be1 = _init_linear(ks[0], 2 * in_size + edge_feat + 1, hidden)
    We2, be2 = _init_linear(ks[1], hidden, hidden)
    Wn1, bn1 = _init_linear(ks[2], in_size + hidden + graph_feat, hidden)
    Wn2, bn2 = _init_linear(ks[3], hidden, out_size)
    Wc1, bc1 = _init_linear(ks[4], hidden, hidden)
    Wc2, _ = _init_linear(ks[5], hidden, 1)          # no bias in torch module
    Wg1, bg1 = _init_linear(ks[6], graph_feat + hidden, hidden)
    Wg2, _ = _init_linear(ks[7], hidden, hidden)     # no bias in torch module
    return dict(
        We1=We1, be1=be1, We2=We2, be2=be2,
        Wn1=Wn1, bn1=bn1, Wn2=Wn2, bn2=bn2,
        Wc1=Wc1, bc1=bc1, Wc2=Wc2,
        Wg1=Wg1, bg1=bg1, Wg2=Wg2,
        in_size=in_size, hidden=hidden, out_size=out_size,
        edge_feat=edge_feat, graph_feat=graph_feat,
    )


# --------------------------- pure-JAX reference ----------------------------------
def egnn_conv_ref(p, h, x, u, A, ea_dense=None):
    N = h.shape[0]
    xd = _periodic_wrap(x[None, :, :] - x[:, None, :])        # [dst, src]: x_src - x_dst
    radial = jnp.sum(xd * xd, axis=-1, keepdims=True)
    xdn = xd / (jnp.sqrt(radial + EPS) + EPS)                  # torch-faithful form
    h_src = jnp.broadcast_to(h[None, :, :], (N, N, h.shape[1]))
    h_dst = jnp.broadcast_to(h[:, None, :], (N, N, h.shape[1]))
    parts = [h_src, h_dst, radial]
    if ea_dense is not None:
        parts.append(ea_dense)
    f = jnp.concatenate(parts, axis=-1)
    m1 = _silu(f @ p["We1"] + p["be1"])
    msg_h = _silu(m1 @ p["We2"] + p["be2"])
    coef = _silu(msg_h @ p["Wc1"] + p["bc1"]) @ p["Wc2"]
    msg_x = coef * xdn
    mask = A[:, :, None]
    deg = jnp.maximum(A.sum(axis=1, keepdims=True), 1.0)
    h_neigh = (mask * msg_h).sum(axis=1)
    x_neigh = (mask * msg_x).sum(axis=1) / deg
    nf = jnp.concatenate([h, h_neigh, jnp.broadcast_to(u, (N, u.shape[1]))], axis=-1)
    h_out = _silu(nf @ p["Wn1"] + p["bn1"]) @ p["Wn2"] + p["bn2"]
    x_out = x + x_neigh
    gf = jnp.concatenate([u, h_out.mean(axis=0, keepdims=True)], axis=-1)
    u_out = _silu(gf @ p["Wg1"] + p["bg1"]) @ p["Wg2"]
    return h_out, x_out, u_out


def egnn_forward_ref(layers, h, x, u, A, ea_dense):
    for li, p in enumerate(layers):
        ea = ea_dense if (li == 0 and p["edge_feat"] > 0) else None
        h, x, u = egnn_conv_ref(p, h, x, u, A, ea)
    return h, x, u


# --------------------------------- main -------------------------------------------
if __name__ == "__main__":
    key = jax.random.PRNGKey(0)
    N, D = 8, 3
    in_node_dim, mlp_h_dim, hidden_node_dim = 16, 32, 32
    edge_feat_size, graph_feat_size = 2, 8
    n_layers = 3

    k_h, k_x, k_u, k_e, k_p = jax.random.split(key, 5)
    node_feat = jax.random.normal(k_h, (N, in_node_dim), jnp.float32)
    coords = jax.random.uniform(k_x, (N, D), jnp.float32)          # unit periodic box
    graph_feat = jax.random.normal(k_u, (1, graph_feat_size), jnp.float32)

    # small deterministic graph: ring + skip edges; A[dst, src] = 1
    src = jnp.array([i for i in range(N)] + [i for i in range(N)], jnp.int32)
    dst = jnp.array([(i + 1) % N for i in range(N)] + [(i + 3) % N for i in range(N)], jnp.int32)
    A = jnp.zeros((N, N), jnp.float32).at[dst, src].set(1.0)

    edge_vals = jax.random.normal(k_e, (src.shape[0], edge_feat_size), jnp.float32)
    ea_dense = jnp.zeros((N, N, edge_feat_size), jnp.float32).at[dst, src].set(edge_vals)
    ea_flat = ea_dense.reshape(N * N, edge_feat_size)

    # EGNN stack: first layer uses edge/graph features, later layers use
    # graph_feat_size = hidden_node_dim (matches the torch EGNN constructor).
    lkeys = jax.random.split(k_p, n_layers)
    layers = [init_egnn_conv(lkeys[0], in_node_dim, mlp_h_dim, hidden_node_dim,
                             edge_feat_size, graph_feat_size)]
    for i in range(1, n_layers):
        layers.append(init_egnn_conv(lkeys[i], hidden_node_dim, mlp_h_dim,
                                     hidden_node_dim, 0, hidden_node_dim))

    h_r, x_r, u_r = egnn_forward_ref(layers, node_feat, coords, graph_feat, A, ea_dense)

    # f32 MXU path (bit-accurate; strict tolerance)
    fwd_f32 = jax.jit(lambda h_, x_, u_, adj, ea: egnn_forward_pallas(
        layers, h_, x_, u_, adj, ea, mxu_dtype=jnp.float32))
    h, x, u = jax.block_until_ready(fwd_f32(node_feat, coords, graph_feat, A, ea_flat))

    assert h.shape == (N, hidden_node_dim) and x.shape == (N, D) and u.shape == (1, mlp_h_dim)
    assert bool(jnp.all(jnp.isfinite(h)) & jnp.all(jnp.isfinite(x)) & jnp.all(jnp.isfinite(u)))
    assert float(jnp.max(jnp.abs(h - h_r))) < 5e-2
    assert float(jnp.max(jnp.abs(x - x_r))) < 5e-2
    assert float(jnp.max(jnp.abs(u - u_r))) < 5e-2

    # default path: bf16 MXU operands (f32 accumulate / f32 elementwise) —
    # valid on v5e, v6e and v7x.
    fwd_bf16 = jax.jit(lambda h_, x_, u_, adj, ea: egnn_forward_pallas(
        layers, h_, x_, u_, adj, ea))
    h_b, x_b, u_b = jax.block_until_ready(fwd_bf16(node_feat, coords, graph_feat, A, ea_flat))
    assert bool(jnp.all(jnp.isfinite(h_b)) & jnp.all(jnp.isfinite(x_b)) & jnp.all(jnp.isfinite(u_b)))
    assert float(jnp.max(jnp.abs(h_b - h_r))) < 0.5
    assert float(jnp.max(jnp.abs(x_b - x_r))) < 0.5

    print("KERNEL_OK")
</pallas_src>

<mosaic_0001>
module attributes {stable_mosaic.version = 11 : i64} {
  func.func @kernel(%arg0: memref<8x16xf32, #tpu.memory_space<vmem>>, %arg1: memref<8x3xf32, #tpu.memory_space<vmem>>, %arg2: memref<1x8xf32, #tpu.memory_space<vmem>>, %arg3: memref<8x64xf32, #tpu.memory_space<vmem>>, %arg4: memref<8x1xf32, #tpu.memory_space<vmem>>, %arg5: memref<64x2xf32, #tpu.memory_space<vmem>>, %arg6: memref<24x128xf32, #tpu.memory_space<vmem>>, %arg7: memref<272x128xf32, #tpu.memory_space<vmem>>, %arg8: memref<320x128xf32, #tpu.memory_space<vmem>>, %arg9: memref<320x128xf32, #tpu.memory_space<vmem>>, %arg10: memref<8x32xf32, #tpu.memory_space<vmem>>, %arg11: memref<8x3xf32, #tpu.memory_space<vmem>>, %arg12: memref<1x32xf32, #tpu.memory_space<vmem>>) attributes {dimension_semantics = [], scalar_prefetch = 0 : i64, scratch_operands = 0 : i64, tpu.core_type = #tpu.core_type<tc>} {
    %c0 = arith.constant 0 : index
    %c0_0 = arith.constant 0 : index
    %0 = vector.load %arg0[%c0, %c0_0] : memref<8x16xf32, #tpu.memory_space<vmem>>, vector<8x16xf32>
    %c0_1 = arith.constant 0 : index
    %c0_2 = arith.constant 0 : index
    %1 = vector.load %arg1[%c0_1, %c0_2] : memref<8x3xf32, #tpu.memory_space<vmem>>, vector<8x3xf32>
    %c0_3 = arith.constant 0 : index
    %c0_4 = arith.constant 0 : index
    %2 = vector.load %arg2[%c0_3, %c0_4] : memref<1x8xf32, #tpu.memory_space<vmem>>, vector<1x8xf32>
    %c0_5 = arith.constant 0 : index
    %c0_6 = arith.constant 0 : index
    %3 = vector.load %arg3[%c0_5, %c0_6] : memref<8x64xf32, #tpu.memory_space<vmem>>, vector<8x64xf32>
    %c0_7 = arith.constant 0 : index
    %c0_8 = arith.constant 0 : index
    %4 = vector.load %arg4[%c0_7, %c0_8] : memref<8x1xf32, #tpu.memory_space<vmem>>, vector<8x1xf32>
    %c0_9 = arith.constant 0 : index
    %c0_10 = arith.constant 0 : index
    %5 = vector.load %arg6[%c0_9, %c0_10] : memref<24x128xf32, #tpu.memory_space<vmem>>, vector<1x32xf32>
    %c1 = arith.constant 1 : index
    %c0_11 = arith.constant 0 : index
    %6 = vector.load %arg6[%c1, %c0_11] : memref<24x128xf32, #tpu.memory_space<vmem>>, vector<1x32xf32>
    %c2 = arith.constant 2 : index
    %c0_12 = arith.constant 0 : index
    %7 = vector.load %arg6[%c2, %c0_12] : memref<24x128xf32, #tpu.memory_space<vmem>>, vector<1x32xf32>
    %c3 = arith.constant 3 : index
    %c0_13 = arith.constant 0 : index
    %8 = vector.load %arg6[%c3, %c0_13] : memref<24x128xf32, #tpu.memory_space<vmem>>, vector<1x32xf32>
    %c4 = arith.constant 4 : index
    %c0_14 = arith.constant 0 : index
    %9 = vector.load %arg6[%c4, %c0_14] : memref<24x128xf32, #tpu.memory_space<vmem>>, vector<1x32xf32>
    %c5 = arith.constant 5 : index
    %c0_15 = arith.constant 0 : index
    %10 = vector.load %arg6[%c5, %c0_15] : memref<24x128xf32, #tpu.memory_space<vmem>>, vector<1x32xf32>
    %c6 = arith.constant 6 : index
    %c0_16 = arith.constant 0 : index
    %11 = vector.load %arg6[%c6, %c0_16] : memref<24x128xf32, #tpu.memory_space<vmem>>, vector<1x32xf32>
    %c7 = arith.constant 7 : index
    %c0_17 = arith.constant 0 : index
    %12 = vector.load %arg6[%c7, %c0_17] : memref<24x128xf32, #tpu.memory_space<vmem>>, vector<1x32xf32>
    %13 = vector.shape_cast %1 : vector<8x3xf32> to vector<1x8x3xf32>
    %14 = vector.shape_cast %1 : vector<8x3xf32> to vector<8x1x3xf32>
    %15 = vector.broadcast %13 : vector<1x8x3xf32> to vector<8x8x3xf32>
    %16 = vector.broadcast %14 : vector<8x1x3xf32> to vector<8x8x3xf32>
    %17 = arith.subf %15, %16 : vector<8x8x3xf32>
    %cst = arith.constant 5.000000e-01 : f32
    %18 = vector.broadcast %cst : f32 to vector<8x8x3xf32>
    %19 = arith.addf %17, %18 : vector<8x8x3xf32>
    %20 = math.floor %19 : vector<8x8x3xf32>
    %21 = arith.subf %17, %20 : vector<8x8x3xf32>
    %22 = arith.mulf %21, %21 : vector<8x8x3xf32>
    %cst_18 = arith.constant dense<0.000000e+00> : vector<8x8xf32>
    %23 = vector.multi_reduction <add>, %22, %cst_18 [2] : vector<8x8x3xf32> to vector<8x8xf32>
    %24 = vector.shape_cast %23 : vector<8x8xf32> to vector<8x8x1xf32>
    %cst_19 = arith.constant 1.000000e-30 : f32
    %25 = vector.broadcast %cst_19 : f32 to vector<8x8x1xf32>
    %26 = arith.addf %24, %25 : vector<8x8x1xf32>
    %27 = math.rsqrt %26 : vector<8x8x1xf32>
    %28 = vector.broadcast %27 : vector<8x8x1xf32> to vector<8x8x3xf32>
    %29 = arith.mulf %21, %28 : vector<8x8x3xf32>
    %30 = vector.shape_cast %29 : vector<8x8x3xf32> to vector<64x3xf32>
    %c0_20 = arith.constant 0 : index
    %c0_21 = arith.constant 0 : index
    %31 = vector.load %arg7[%c0_20, %c0_21] : memref<272x128xf32, #tpu.memory_space<vmem>>, vector<16x64xf32>
    %cst_22 = arith.constant dense<0.000000e+00> : vector<8x64xf32>
    %32 = tpu.matmul %0, %31, %cst_22 {dimension_numbers = #tpu.dot_dimension_numbers<[1], [0], [0], [1], [0, 0, 1, 1], [], []>} : vector<8x16xf32>, vector<16x64xf32>, vector<8x64xf32> -> vector<8x64xf32>
    %33 = vector.extract_strided_slice %32 {offsets = [0, 0], sizes = [8, 32], strides = [1, 1]} : vector<8x64xf32> to vector<8x32xf32>
    %34 = vector.shape_cast %33 : vector<8x32xf32> to vector<1x8x32xf32>
    %35 = vector.extract_strided_slice %32 {offsets = [0, 32], sizes = [8, 32], strides = [1, 1]} : vector<8x64xf32> to vector<8x32xf32>
    %36 = vector.shape_cast %35 : vector<8x32xf32> to vector<8x1x32xf32>
    %37 = vector.broadcast %34 : vector<1x8x32xf32> to vector<8x8x32xf32>
    %38 = vector.broadcast %36 : vector<8x1x32xf32> to vector<8x8x32xf32>
    %39 = arith.addf %37, %38 : vector<8x8x32xf32>
    %40 = vector.shape_cast %5 : vector<1x32xf32> to vector<1x1x32xf32>
    %41 = vector.broadcast %24 : vector<8x8x1xf32> to vector<8x8x32xf32>
    %42 = vector.broadcast %40 : vector<1x1x32xf32> to vector<8x8x32xf32>
    %43 = arith.mulf %41, %42 : vector<8x8x32xf32>
    %44 = arith.addf %39, %43 : vector<8x8x32xf32>
    %45 = vector.shape_cast %6 : vector<1x32xf32> to vector<1x1x32xf32>
    %46 = vector.broadcast %45 : vector<1x1x32xf32> to vector<8x8x32xf32>
    %47 = arith.addf %44, %46 : vector<8x8x32xf32>
    %48 = vector.shape_cast %47 : vector<8x8x32xf32> to vector<64x32xf32>
    %c0_23 = arith.constant 0 : index
    %c0_24 = arith.constant 0 : index
    %49 = vector.load %arg5[%c0_23, %c0_24] : memref<64x2xf32, #tpu.memory_space<vmem>>, vector<64x2xf32>
    %c16 = arith.constant 16 : index
    %c0_25 = arith.constant 0 : index
    %50 = vector.load %arg7[%c16, %c0_25] : memref<272x128xf32, #tpu.memory_space<vmem>>, vector<2x32xf32>
    %cst_26 = arith.constant dense<0.000000e+00> : vector<64x32xf32>
    %51 = tpu.matmul %49, %50, %cst_26 {dimension_numbers = #tpu.dot_dimension_numbers<[1], [0], [0], [1], [0, 0, 1, 1], [], []>} : vector<64x2xf32>, vector<2x32xf32>, vector<64x32xf32> -> vector<64x32xf32>
    %52 = arith.addf %48, %51 : vector<64x32xf32>
    %cst_27 = arith.constant 0.000000e+00 : f32
    %53 = vector.broadcast %cst_27 : f32 to vector<64x32xf32>
    %54 = arith.subf %53, %52 : vector<64x32xf32>
    %55 = math.exp %54 : vector<64x32xf32>
    %cst_28 = arith.constant 1.000000e+00 : f32
    %56 = vector.broadcast %cst_28 : f32 to vector<64x32xf32>
    %57 = arith.addf %56, %55 : vector<64x32xf32>
    %cst_29 = arith.constant 1.000000e+00 : f32
    %58 = vector.broadcast %cst_29 : f32 to vector<64x32xf32>
    %59 = arith.divf %58, %57 : vector<64x32xf32>
    %60 = arith.mulf %52, %59 : vector<64x32xf32>
    %c32 = arith.constant 32 : index
    %c0_30 = arith.constant 0 : index
    %61 = vector.load %arg7[%c32, %c0_30] : memref<272x128xf32, #tpu.memory_space<vmem>>, vector<32x32xf32>
    %cst_31 = arith.constant dense<0.000000e+00> : vector<64x32xf32>
    %62 = tpu.matmul %60, %61, %cst_31 {dimension_numbers = #tpu.dot_dimension_numbers<[1], [0], [0], [1], [0, 0, 1, 1], [], []>} : vector<64x32xf32>, vector<32x32xf32>, vector<64x32xf32> -> vector<64x32xf32>
    %63 = vector.broadcast %7 : vector<1x32xf32> to vector<64x32xf32>
    %64 = arith.addf %62, %63 : vector<64x32xf32>
    %cst_32 = arith.constant 0.000000e+00 : f32
    %65 = vector.broadcast %cst_32 : f32 to vector<64x32xf32>
    %66 = arith.subf %65, %64 : vector<64x32xf32>
    %67 = math.exp %66 : vector<64x32xf32>
    %cst_33 = arith.constant 1.000000e+00 : f32
    %68 = vector.broadcast %cst_33 : f32 to vector<64x32xf32>
    %69 = arith.addf %68, %67 : vector<64x32xf32>
    %cst_34 = arith.constant 1.000000e+00 : f32
    %70 = vector.broadcast %cst_34 : f32 to vector<64x32xf32>
    %71 = arith.divf %70, %69 : vector<64x32xf32>
    %72 = arith.mulf %64, %71 : vector<64x32xf32>
    %c64 = arith.constant 64 : index
    %c0_35 = arith.constant 0 : index
    %73 = vector.load %arg7[%c64, %c0_35] : memref<272x128xf32, #tpu.memory_space<vmem>>, vector<32x32xf32>
    %cst_36 = arith.constant dense<0.000000e+00> : vector<64x32xf32>
    %74 = tpu.matmul %72, %73, %cst_36 {dimension_numbers = #tpu.dot_dimension_numbers<[1], [0], [0], [1], [0, 0, 1, 1], [], []>} : vector<64x32xf32>, vector<32x32xf32>, vector<64x32xf32> -> vector<64x32xf32>
    %75 = vector.broadcast %8 : vector<1x32xf32> to vector<64x32xf32>
    %76 = arith.addf %74, %75 : vector<64x32xf32>
    %cst_37 = arith.constant 0.000000e+00 : f32
    %77 = vector.broadcast %cst_37 : f32 to vector<64x32xf32>
    %78 = arith.subf %77, %76 : vector<64x32xf32>
    %79 = math.exp %78 : vector<64x32xf32>
    %cst_38 = arith.constant 1.000000e+00 : f32
    %80 = vector.broadcast %cst_38 : f32 to vector<64x32xf32>
    %81 = arith.addf %80, %79 : vector<64x32xf32>
    %cst_39 = arith.constant 1.000000e+00 : f32
    %82 = vector.broadcast %cst_39 : f32 to vector<64x32xf32>
    %83 = arith.divf %82, %81 : vector<64x32xf32>
    %84 = arith.mulf %76, %83 : vector<64x32xf32>
    %85 = vector.broadcast %9 : vector<1x32xf32> to vector<64x32xf32>
    %86 = arith.mulf %84, %85 : vector<64x32xf32>
    %cst_40 = arith.constant dense<0.000000e+00> : vector<64xf32>
    %87 = vector.multi_reduction <add>, %86, %cst_40 [1] : vector<64x32xf32> to vector<64xf32>
    %88 = vector.shape_cast %87 : vector<64xf32> to vector<64x1xf32>
    %89 = vector.broadcast %88 : vector<64x1xf32> to vector<64x3xf32>
    %90 = arith.mulf %89, %30 : vector<64x3xf32>
    %91 = tpu.concatenate %72, %90 in 1 : vector<64x32xf32>, vector<64x3xf32> -> vector<64x35xf32>
    %cst_41 = arith.constant dense<0.000000e+00> : vector<8x35xf32>
    %92 = tpu.matmul %3, %91, %cst_41 {dimension_numbers = #tpu.dot_dimension_numbers<[1], [0], [0], [1], [0, 0, 1, 1], [], []>} : vector<8x64xf32>, vector<64x35xf32>, vector<8x35xf32> -> vector<8x35xf32>
    %93 = vector.extract_strided_slice %92 {offsets = [0, 0], sizes = [8, 32], strides = [1, 1]} : vector<8x35xf32> to vector<8x32xf32>
    %94 = vector.extract_strided_slice %92 {offsets = [0, 32], sizes = [8, 3], strides = [1, 1]} : vector<8x35xf32> to vector<8x3xf32>
    %95 = vector.broadcast %4 : vector<8x1xf32> to vector<8x3xf32>
    %96 = arith.mulf %94, %95 : vector<8x3xf32>
    %97 = vector.shape_cast %2 : vector<1x8xf32> to vector<1x8xf32>
    %98 = vector.broadcast %97 : vector<1x8xf32> to vector<8x8xf32>
    %99 = tpu.concatenate %0, %93, %98 in 1 : vector<8x16xf32>, vector<8x32xf32>, vector<8x8xf32> -> vector<8x56xf32>
    %c96 = arith.constant 96 : index
    %c0_42 = arith.constant 0 : index
    %100 = vector.load %arg7[%c96, %c0_42] : memref<272x128xf32, #tpu.memory_space<vmem>>, vector<56x32xf32>
    %cst_43 = arith.constant dense<0.000000e+00> : vector<8x32xf32>
    %101 = tpu.matmul %99, %100, %cst_43 {dimension_numbers = #tpu.dot_dimension_numbers<[1], [0], [0], [1], [0, 0, 1, 1], [], []>} : vector<8x56xf32>, vector<56x32xf32>, vector<8x32xf32> -> vector<8x32xf32>
    %102 = vector.broadcast %10 : vector<1x32xf32> to vector<8x32xf32>
    %103 = arith.addf %101, %102 : vector<8x32xf32>
    %cst_44 = arith.constant 0.000000e+00 : f32
    %104 = vector.broadcast %cst_44 : f32 to vector<8x32xf32>
    %105 = arith.subf %104, %103 : vector<8x32xf32>
    %106 = math.exp %105 : vector<8x32xf32>
    %cst_45 = arith.constant 1.000000e+00 : f32
    %107 = vector.broadcast %cst_45 : f32 to vector<8x32xf32>
    %108 = arith.addf %107, %106 : vector<8x32xf32>
    %cst_46 = arith.constant 1.000000e+00 : f32
    %109 = vector.broadcast %cst_46 : f32 to vector<8x32xf32>
    %110 = arith.divf %109, %108 : vector<8x32xf32>
    %111 = arith.mulf %103, %110 : vector<8x32xf32>
    %c160 = arith.constant 160 : index
    %c0_47 = arith.constant 0 : index
    %112 = vector.load %arg7[%c160, %c0_47] : memref<272x128xf32, #tpu.memory_space<vmem>>, vector<32x32xf32>
    %cst_48 = arith.constant dense<0.000000e+00> : vector<8x32xf32>
    %113 = tpu.matmul %111, %112, %cst_48 {dimension_numbers = #tpu.dot_dimension_numbers<[1], [0], [0], [1], [0, 0, 1, 1], [], []>} : vector<8x32xf32>, vector<32x32xf32>, vector<8x32xf32> -> vector<8x32xf32>
    %114 = vector.broadcast %11 : vector<1x32xf32> to vector<8x32xf32>
    %115 = arith.addf %113, %114 : vector<8x32xf32>
    %cst_49 = arith.constant dense<0.000000e+00> : vector<32xf32>
    %116 = vector.multi_reduction <add>, %115, %cst_49 [0] : vector<8x32xf32> to vector<32xf32>
    %117 = vector.shape_cast %116 : vector<32xf32> to vector<1x32xf32>
    %cst_50 = arith.constant 1.250000e-01 : f32
    %118 = vector.broadcast %cst_50 : f32 to vector<1x32xf32>
    %119 = arith.mulf %117, %118 : vector<1x32xf32>
    %120 = tpu.concatenate %2, %119 in 1 : vector<1x8xf32>, vector<1x32xf32> -> vector<1x40xf32>
    %c192 = arith.constant 192 : index
    %c0_51 = arith.constant 0 : index
    %121 = vector.load %arg7[%c192, %c0_51] : memref<272x128xf32, #tpu.memory_space<vmem>>, vector<40x32xf32>
    %cst_52 = arith.constant dense<0.000000e+00> : vector<1x32xf32>
    %122 = tpu.matmul %120, %121, %cst_52 {dimension_numbers = #tpu.dot_dimension_numbers<[1], [0], [0], [1], [0, 0, 1, 1], [], []>} : vector<1x40xf32>, vector<40x32xf32>, vector<1x32xf32> -> vector<1x32xf32>
    %123 = arith.addf %122, %12 : vector<1x32xf32>
    %cst_53 = arith.constant 0.000000e+00 : f32
    %124 = vector.broadcast %cst_53 : f32 to vector<1x32xf32>
    %125 = arith.subf %124, %123 : vector<1x32xf32>
    %126 = math.exp %125 : vector<1x32xf32>
    %cst_54 = arith.constant 1.000000e+00 : f32
    %127 = vector.broadcast %cst_54 : f32 to vector<1x32xf32>
    %128 = arith.addf %127, %126 : vector<1x32xf32>
    %cst_55 = arith.constant 1.000000e+00 : f32
    %129 = vector.broadcast %cst_55 : f32 to vector<1x32xf32>
    %130 = arith.divf %129, %128 : vector<1x32xf32>
    %131 = arith.mulf %123, %130 : vector<1x32xf32>
    %c240 = arith.constant 240 : index
    %c0_56 = arith.constant 0 : index
    %132 = vector.load %arg7[%c240, %c0_56] : memref<272x128xf32, #tpu.memory_space<vmem>>, vector<32x32xf32>
    %cst_57 = arith.constant dense<0.000000e+00> : vector<1x32xf32>
    %133 = tpu.matmul %131, %132, %cst_57 {dimension_numbers = #tpu.dot_dimension_numbers<[1], [0], [0], [1], [0, 0, 1, 1], [], []>} : vector<1x32xf32>, vector<32x32xf32>, vector<1x32xf32> -> vector<1x32xf32>
    %134 = arith.addf %1, %96 : vector<8x3xf32>
    %c8 = arith.constant 8 : index
    %c0_58 = arith.constant 0 : index
    %135 = vector.load %arg6[%c8, %c0_58] : memref<24x128xf32, #tpu.memory_space<vmem>>, vector<1x32xf32>
    %c9 = arith.constant 9 : index
    %c0_59 = arith.constant 0 : index
    %136 = vector.load %arg6[%c9, %c0_59] : memref<24x128xf32, #tpu.memory_space<vmem>>, vector<1x32xf32>
    %c10 = arith.constant 10 : index
    %c0_60 = arith.constant 0 : index
    %137 = vector.load %arg6[%c10, %c0_60] : memref<24x128xf32, #tpu.memory_space<vmem>>, vector<1x32xf32>
    %c11 = arith.constant 11 : index
    %c0_61 = arith.constant 0 : index
    %138 = vector.load %arg6[%c11, %c0_61] : memref<24x128xf32, #tpu.memory_space<vmem>>, vector<1x32xf32>
    %c12 = arith.constant 12 : index
    %c0_62 = arith.constant 0 : index
    %139 = vector.load %arg6[%c12, %c0_62] : memref<24x128xf32, #tpu.memory_space<vmem>>, vector<1x32xf32>
    %c13 = arith.constant 13 : index
    %c0_63 = arith.constant 0 : index
    %140 = vector.load %arg6[%c13, %c0_63] : memref<24x128xf32, #tpu.memory_space<vmem>>, vector<1x32xf32>
    %c14 = arith.constant 14 : index
    %c0_64 = arith.constant 0 : index
    %141 = vector.load %arg6[%c14, %c0_64] : memref<24x128xf32, #tpu.memory_space<vmem>>, vector<1x32xf32>
    %c15 = arith.constant 15 : index
    %c0_65 = arith.constant 0 : index
    %142 = vector.load %arg6[%c15, %c0_65] : memref<24x128xf32, #tpu.memory_space<vmem>>, vector<1x32xf32>
    %143 = vector.shape_cast %134 : vector<8x3xf32> to vector<1x8x3xf32>
    %144 = vector.shape_cast %134 : vector<8x3xf32> to vector<8x1x3xf32>
    %145 = vector.broadcast %143 : vector<1x8x3xf32> to vector<8x8x3xf32>
    %146 = vector.broadcast %144 : vector<8x1x3xf32> to vector<8x8x3xf32>
    %147 = arith.subf %145, %146 : vector<8x8x3xf32>
    %cst_66 = arith.constant 5.000000e-01 : f32
    %148 = vector.broadcast %cst_66 : f32 to vector<8x8x3xf32>
    %149 = arith.addf %147, %148 : vector<8x8x3xf32>
    %150 = math.floor %149 : vector<8x8x3xf32>
    %151 = arith.subf %147, %150 : vector<8x8x3xf32>
    %152 = arith.mulf %151, %151 : vector<8x8x3xf32>
    %cst_67 = arith.constant dense<0.000000e+00> : vector<8x8xf32>
    %153 = vector.multi_reduction <add>, %152, %cst_67 [2] : vector<8x8x3xf32> to vector<8x8xf32>
    %154 = vector.shape_cast %153 : vector<8x8xf32> to vector<8x8x1xf32>
    %cst_68 = arith.constant 1.000000e-30 : f32
    %155 = vector.broadcast %cst_68 : f32 to vector<8x8x1xf32>
    %156 = arith.addf %154, %155 : vector<8x8x1xf32>
    %157 = math.rsqrt %156 : vector<8x8x1xf32>
    %158 = vector.broadcast %157 : vector<8x8x1xf32> to vector<8x8x3xf32>
    %159 = arith.mulf %151, %158 : vector<8x8x3xf32>
    %160 = vector.shape_cast %159 : vector<8x8x3xf32> to vector<64x3xf32>
    %c0_69 = arith.constant 0 : index
    %c0_70 = arith.constant 0 : index
    %161 = vector.load %arg8[%c0_69, %c0_70] : memref<320x128xf32, #tpu.memory_space<vmem>>, vector<32x64xf32>
    %cst_71 = arith.constant dense<0.000000e+00> : vector<8x64xf32>
    %162 = tpu.matmul %115, %161, %cst_71 {dimension_numbers = #tpu.dot_dimension_numbers<[1], [0], [0], [1], [0, 0, 1, 1], [], []>} : vector<8x32xf32>, vector<32x64xf32>, vector<8x64xf32> -> vector<8x64xf32>
    %163 = vector.extract_strided_slice %162 {offsets = [0, 0], sizes = [8, 32], strides = [1, 1]} : vector<8x64xf32> to vector<8x32xf32>
    %164 = vector.shape_cast %163 : vector<8x32xf32> to vector<1x8x32xf32>
    %165 = vector.extract_strided_slice %162 {offsets = [0, 32], sizes = [8, 32], strides = [1, 1]} : vector<8x64xf32> to vector<8x32xf32>
    %166 = vector.shape_cast %165 : vector<8x32xf32> to vector<8x1x32xf32>
    %167 = vector.broadcast %164 : vector<1x8x32xf32> to vector<8x8x32xf32>
    %168 = vector.broadcast %166 : vector<8x1x32xf32> to vector<8x8x32xf32>
    %169 = arith.addf %167, %168 : vector<8x8x32xf32>
    %170 = vector.shape_cast %135 : vector<1x32xf32> to vector<1x1x32xf32>
    %171 = vector.broadcast %154 : vector<8x8x1xf32> to vector<8x8x32xf32>
    %172 = vector.broadcast %170 : vector<1x1x32xf32> to vector<8x8x32xf32>
    %173 = arith.mulf %171, %172 : vector<8x8x32xf32>
    %174 = arith.addf %169, %173 : vector<8x8x32xf32>
    %175 = vector.shape_cast %136 : vector<1x32xf32> to vector<1x1x32xf32>
    %176 = vector.broadcast %175 : vector<1x1x32xf32> to vector<8x8x32xf32>
    %177 = arith.addf %174, %176 : vector<8x8x32xf32>
    %178 = vector.shape_cast %177 : vector<8x8x32xf32> to vector<64x32xf32>
    %cst_72 = arith.constant 0.000000e+00 : f32
    %179 = vector.broadcast %cst_72 : f32 to vector<64x32xf32>
    %180 = arith.subf %179, %178 : vector<64x32xf32>
    %181 = math.exp %180 : vector<64x32xf32>
    %cst_73 = arith.constant 1.000000e+00 : f32
    %182 = vector.broadcast %cst_73 : f32 to vector<64x32xf32>
    %183 = arith.addf %182, %181 : vector<64x32xf32>
    %cst_74 = arith.constant 1.000000e+00 : f32
    %184 = vector.broadcast %cst_74 : f32 to vector<64x32xf32>
    %185 = arith.divf %184, %183 : vector<64x32xf32>
    %186 = arith.mulf %178, %185 : vector<64x32xf32>
    %c32_75 = arith.constant 32 : index
    %c0_76 = arith.constant 0 : index
    %187 = vector.load %arg8[%c32_75, %c0_76] : memref<320x128xf32, #tpu.memory_space<vmem>>, vector<32x32xf32>
    %cst_77 = arith.constant dense<0.000000e+00> : vector<64x32xf32>
    %188 = tpu.matmul %186, %187, %cst_77 {dimension_numbers = #tpu.dot_dimension_numbers<[1], [0], [0], [1], [0, 0, 1, 1], [], []>} : vector<64x32xf32>, vector<32x32xf32>, vector<64x32xf32> -> vector<64x32xf32>
    %189 = vector.broadcast %137 : vector<1x32xf32> to vector<64x32xf32>
    %190 = arith.addf %188, %189 : vector<64x32xf32>
    %cst_78 = arith.constant 0.000000e+00 : f32
    %191 = vector.broadcast %cst_78 : f32 to vector<64x32xf32>
    %192 = arith.subf %191, %190 : vector<64x32xf32>
    %193 = math.exp %192 : vector<64x32xf32>
    %cst_79 = arith.constant 1.000000e+00 : f32
    %194 = vector.broadcast %cst_79 : f32 to vector<64x32xf32>
    %195 = arith.addf %194, %193 : vector<64x32xf32>
    %cst_80 = arith.constant 1.000000e+00 : f32
    %196 = vector.broadcast %cst_80 : f32 to vector<64x32xf32>
    %197 = arith.divf %196, %195 : vector<64x32xf32>
    %198 = arith.mulf %190, %197 : vector<64x32xf32>
    %c64_81 = arith.constant 64 : index
    %c0_82 = arith.constant 0 : index
    %199 = vector.load %arg8[%c64_81, %c0_82] : memref<320x128xf32, #tpu.memory_space<vmem>>, vector<32x32xf32>
    %cst_83 = arith.constant dense<0.000000e+00> : vector<64x32xf32>
    %200 = tpu.matmul %198, %199, %cst_83 {dimension_numbers = #tpu.dot_dimension_numbers<[1], [0], [0], [1], [0, 0, 1, 1], [], []>} : vector<64x32xf32>, vector<32x32xf32>, vector<64x32xf32> -> vector<64x32xf32>
    %201 = vector.broadcast %138 : vector<1x32xf32> to vector<64x32xf32>
    %202 = arith.addf %200, %201 : vector<64x32xf32>
    %cst_84 = arith.constant 0.000000e+00 : f32
    %203 = vector.broadcast %cst_84 : f32 to vector<64x32xf32>
    %204 = arith.subf %203, %202 : vector<64x32xf32>
    %205 = math.exp %204 : vector<64x32xf32>
    %cst_85 = arith.constant 1.000000e+00 : f32
    %206 = vector.broadcast %cst_85 : f32 to vector<64x32xf32>
    %207 = arith.addf %206, %205 : vector<64x32xf32>
    %cst_86 = arith.constant 1.000000e+00 : f32
    %208 = vector.broadcast %cst_86 : f32 to vector<64x32xf32>
    %209 = arith.divf %208, %207 : vector<64x32xf32>
    %210 = arith.mulf %202, %209 : vector<64x32xf32>
    %211 = vector.broadcast %139 : vector<1x32xf32> to vector<64x32xf32>
    %212 = arith.mulf %210, %211 : vector<64x32xf32>
    %cst_87 = arith.constant dense<0.000000e+00> : vector<64xf32>
    %213 = vector.multi_reduction <add>, %212, %cst_87 [1] : vector<64x32xf32> to vector<64xf32>
    %214 = vector.shape_cast %213 : vector<64xf32> to vector<64x1xf32>
    %215 = vector.broadcast %214 : vector<64x1xf32> to vector<64x3xf32>
    %216 = arith.mulf %215, %160 : vector<64x3xf32>
    %217 = tpu.concatenate %198, %216 in 1 : vector<64x32xf32>, vector<64x3xf32> -> vector<64x35xf32>
    %cst_88 = arith.constant dense<0.000000e+00> : vector<8x35xf32>
    %218 = tpu.matmul %3, %217, %cst_88 {dimension_numbers = #tpu.dot_dimension_numbers<[1], [0], [0], [1], [0, 0, 1, 1], [], []>} : vector<8x64xf32>, vector<64x35xf32>, vector<8x35xf32> -> vector<8x35xf32>
    %219 = vector.extract_strided_slice %218 {offsets = [0, 0], sizes = [8, 32], strides = [1, 1]} : vector<8x35xf32> to vector<8x32xf32>
    %220 = vector.extract_strided_slice %218 {offsets = [0, 32], sizes = [8, 3], strides = [1, 1]} : vector<8x35xf32> to vector<8x3xf32>
    %221 = vector.broadcast %4 : vector<8x1xf32> to vector<8x3xf32>
    %222 = arith.mulf %220, %221 : vector<8x3xf32>
    %223 = vector.shape_cast %133 : vector<1x32xf32> to vector<1x32xf32>
    %224 = vector.broadcast %223 : vector<1x32xf32> to vector<8x32xf32>
    %225 = tpu.concatenate %115, %219, %224 in 1 : vector<8x32xf32>, vector<8x32xf32>, vector<8x32xf32> -> vector<8x96xf32>
    %c96_89 = arith.constant 96 : index
    %c0_90 = arith.constant 0 : index
    %226 = vector.load %arg8[%c96_89, %c0_90] : memref<320x128xf32, #tpu.memory_space<vmem>>, vector<96x32xf32>
    %cst_91 = arith.constant dense<0.000000e+00> : vector<8x32xf32>
    %227 = tpu.matmul %225, %226, %cst_91 {dimension_numbers = #tpu.dot_dimension_numbers<[1], [0], [0], [1], [0, 0, 1, 1], [], []>} : vector<8x96xf32>, vector<96x32xf32>, vector<8x32xf32> -> vector<8x32xf32>
    %228 = vector.broadcast %140 : vector<1x32xf32> to vector<8x32xf32>
    %229 = arith.addf %227, %228 : vector<8x32xf32>
    %cst_92 = arith.constant 0.000000e+00 : f32
    %230 = vector.broadcast %cst_92 : f32 to vector<8x32xf32>
    %231 = arith.subf %230, %229 : vector<8x32xf32>
    %232 = math.exp %231 : vector<8x32xf32>
    %cst_93 = arith.constant 1.000000e+00 : f32
    %233 = vector.broadcast %cst_93 : f32 to vector<8x32xf32>
    %234 = arith.addf %233, %232 : vector<8x32xf32>
    %cst_94 = arith.constant 1.000000e+00 : f32
    %235 = vector.broadcast %cst_94 : f32 to vector<8x32xf32>
    %236 = arith.divf %235, %234 : vector<8x32xf32>
    %237 = arith.mulf %229, %236 : vector<8x32xf32>
    %c192_95 = arith.constant 192 : index
    %c0_96 = arith.constant 0 : index
    %238 = vector.load %arg8[%c192_95, %c0_96] : memref<320x128xf32, #tpu.memory_space<vmem>>, vector<32x32xf32>
    %cst_97 = arith.constant dense<0.000000e+00> : vector<8x32xf32>
    %239 = tpu.matmul %237, %238, %cst_97 {dimension_numbers = #tpu.dot_dimension_numbers<[1], [0], [0], [1], [0, 0, 1, 1], [], []>} : vector<8x32xf32>, vector<32x32xf32>, vector<8x32xf32> -> vector<8x32xf32>
    %240 = vector.broadcast %141 : vector<1x32xf32> to vector<8x32xf32>
    %241 = arith.addf %239, %240 : vector<8x32xf32>
    %cst_98 = arith.constant dense<0.000000e+00> : vector<32xf32>
    %242 = vector.multi_reduction <add>, %241, %cst_98 [0] : vector<8x32xf32> to vector<32xf32>
    %243 = vector.shape_cast %242 : vector<32xf32> to vector<1x32xf32>
    %cst_99 = arith.constant 1.250000e-01 : f32
    %244 = vector.broadcast %cst_99 : f32 to vector<1x32xf32>
    %245 = arith.mulf %243, %244 : vector<1x32xf32>
    %246 = tpu.concatenate %133, %245 in 1 : vector<1x32xf32>, vector<1x32xf32> -> vector<1x64xf32>
    %c224 = arith.constant 224 : index
    %c0_100 = arith.constant 0 : index
    %247 = vector.load %arg8[%c224, %c0_100] : memref<320x128xf32, #tpu.memory_space<vmem>>, vector<64x32xf32>
    %cst_101 = arith.constant dense<0.000000e+00> : vector<1x32xf32>
    %248 = tpu.matmul %246, %247, %cst_101 {dimension_numbers = #tpu.dot_dimension_numbers<[1], [0], [0], [1], [0, 0, 1, 1], [], []>} : vector<1x64xf32>, vector<64x32xf32>, vector<1x32xf32> -> vector<1x32xf32>
    %249 = arith.addf %248, %142 : vector<1x32xf32>
    %cst_102 = arith.constant 0.000000e+00 : f32
    %250 = vector.broadcast %cst_102 : f32 to vector<1x32xf32>
    %251 = arith.subf %250, %249 : vector<1x32xf32>
    %252 = math.exp %251 : vector<1x32xf32>
    %cst_103 = arith.constant 1.000000e+00 : f32
    %253 = vector.broadcast %cst_103 : f32 to vector<1x32xf32>
    %254 = arith.addf %253, %252 : vector<1x32xf32>
    %cst_104 = arith.constant 1.000000e+00 : f32
    %255 = vector.broadcast %cst_104 : f32 to vector<1x32xf32>
    %256 = arith.divf %255, %254 : vector<1x32xf32>
    %257 = arith.mulf %249, %256 : vector<1x32xf32>
    %c288 = arith.constant 288 : index
    %c0_105 = arith.constant 0 : index
    %258 = vector.load %arg8[%c288, %c0_105] : memref<320x128xf32, #tpu.memory_space<vmem>>, vector<32x32xf32>
    %cst_106 = arith.constant dense<0.000000e+00> : vector<1x32xf32>
    %259 = tpu.matmul %257, %258, %cst_106 {dimension_numbers = #tpu.dot_dimension_numbers<[1], [0], [0], [1], [0, 0, 1, 1], [], []>} : vector<1x32xf32>, vector<32x32xf32>, vector<1x32xf32> -> vector<1x32xf32>
    %260 = arith.addf %134, %222 : vector<8x3xf32>
    %c16_107 = arith.constant 16 : index
    %c0_108 = arith.constant 0 : index
    %261 = vector.load %arg6[%c16_107, %c0_108] : memref<24x128xf32, #tpu.memory_space<vmem>>, vector<1x32xf32>
    %c17 = arith.constant 17 : index
    %c0_109 = arith.constant 0 : index
    %262 = vector.load %arg6[%c17, %c0_109] : memref<24x128xf32, #tpu.memory_space<vmem>>, vector<1x32xf32>
    %c18 = arith.constant 18 : index
    %c0_110 = arith.constant 0 : index
    %263 = vector.load %arg6[%c18, %c0_110] : memref<24x128xf32, #tpu.memory_space<vmem>>, vector<1x32xf32>
    %c19 = arith.constant 19 : index
    %c0_111 = arith.constant 0 : index
    %264 = vector.load %arg6[%c19, %c0_111] : memref<24x128xf32, #tpu.memory_space<vmem>>, vector<1x32xf32>
    %c20 = arith.constant 20 : index
    %c0_112 = arith.constant 0 : index
    %265 = vector.load %arg6[%c20, %c0_112] : memref<24x128xf32, #tpu.memory_space<vmem>>, vector<1x32xf32>
    %c21 = arith.constant 21 : index
    %c0_113 = arith.constant 0 : index
    %266 = vector.load %arg6[%c21, %c0_113] : memref<24x128xf32, #tpu.memory_space<vmem>>, vector<1x32xf32>
    %c22 = arith.constant 22 : index
    %c0_114 = arith.constant 0 : index
    %267 = vector.load %arg6[%c22, %c0_114] : memref<24x128xf32, #tpu.memory_space<vmem>>, vector<1x32xf32>
    %c23 = arith.constant 23 : index
    %c0_115 = arith.constant 0 : index
    %268 = vector.load %arg6[%c23, %c0_115] : memref<24x128xf32, #tpu.memory_space<vmem>>, vector<1x32xf32>
    %269 = vector.shape_cast %260 : vector<8x3xf32> to vector<1x8x3xf32>
    %270 = vector.shape_cast %260 : vector<8x3xf32> to vector<8x1x3xf32>
    %271 = vector.broadcast %269 : vector<1x8x3xf32> to vector<8x8x3xf32>
    %272 = vector.broadcast %270 : vector<8x1x3xf32> to vector<8x8x3xf32>
    %273 = arith.subf %271, %272 : vector<8x8x3xf32>
    %cst_116 = arith.constant 5.000000e-01 : f32
    %274 = vector.broadcast %cst_116 : f32 to vector<8x8x3xf32>
    %275 = arith.addf %273, %274 : vector<8x8x3xf32>
    %276 = math.floor %275 : vector<8x8x3xf32>
    %277 = arith.subf %273, %276 : vector<8x8x3xf32>
    %278 = arith.mulf %277, %277 : vector<8x8x3xf32>
    %cst_117 = arith.constant dense<0.000000e+00> : vector<8x8xf32>
    %279 = vector.multi_reduction <add>, %278, %cst_117 [2] : vector<8x8x3xf32> to vector<8x8xf32>
    %280 = vector.shape_cast %279 : vector<8x8xf32> to vector<8x8x1xf32>
    %cst_118 = arith.constant 1.000000e-30 : f32
    %281 = vector.broadcast %cst_118 : f32 to vector<8x8x1xf32>
    %282 = arith.addf %280, %281 : vector<8x8x1xf32>
    %283 = math.rsqrt %282 : vector<8x8x1xf32>
    %284 = vector.broadcast %283 : vector<8x8x1xf32> to vector<8x8x3xf32>
    %285 = arith.mulf %277, %284 : vector<8x8x3xf32>
    %286 = vector.shape_cast %285 : vector<8x8x3xf32> to vector<64x3xf32>
    %c0_119 = arith.constant 0 : index
    %c0_120 = arith.constant 0 : index
    %287 = vector.load %arg9[%c0_119, %c0_120] : memref<320x128xf32, #tpu.memory_space<vmem>>, vector<32x64xf32>
    %cst_121 = arith.constant dense<0.000000e+00> : vector<8x64xf32>
    %288 = tpu.matmul %241, %287, %cst_121 {dimension_numbers = #tpu.dot_dimension_numbers<[1], [0], [0], [1], [0, 0, 1, 1], [], []>} : vector<8x32xf32>, vector<32x64xf32>, vector<8x64xf32> -> vector<8x64xf32>
    %289 = vector.extract_strided_slice %288 {offsets = [0, 0], sizes = [8, 32], strides = [1, 1]} : vector<8x64xf32> to vector<8x32xf32>
    %290 = vector.shape_cast %289 : vector<8x32xf32> to vector<1x8x32xf32>
    %291 = vector.extract_strided_slice %288 {offsets = [0, 32], sizes = [8, 32], strides = [1, 1]} : vector<8x64xf32> to vector<8x32xf32>
    %292 = vector.shape_cast %291 : vector<8x32xf32> to vector<8x1x32xf32>
    %293 = vector.broadcast %290 : vector<1x8x32xf32> to vector<8x8x32xf32>
    %294 = vector.broadcast %292 : vector<8x1x32xf32> to vector<8x8x32xf32>
    %295 = arith.addf %293, %294 : vector<8x8x32xf32>
    %296 = vector.shape_cast %261 : vector<1x32xf32> to vector<1x1x32xf32>
    %297 = vector.broadcast %280 : vector<8x8x1xf32> to vector<8x8x32xf32>
    %298 = vector.broadcast %296 : vector<1x1x32xf32> to vector<8x8x32xf32>
    %299 = arith.mulf %297, %298 : vector<8x8x32xf32>
    %300 = arith.addf %295, %299 : vector<8x8x32xf32>
    %301 = vector.shape_cast %262 : vector<1x32xf32> to vector<1x1x32xf32>
    %302 = vector.broadcast %301 : vector<1x1x32xf32> to vector<8x8x32xf32>
    %303 = arith.addf %300, %302 : vector<8x8x32xf32>
    %304 = vector.shape_cast %303 : vector<8x8x32xf32> to vector<64x32xf32>
    %cst_122 = arith.constant 0.000000e+00 : f32
    %305 = vector.broadcast %cst_122 : f32 to vector<64x32xf32>
    %306 = arith.subf %305, %304 : vector<64x32xf32>
    %307 = math.exp %306 : vector<64x32xf32>
    %cst_123 = arith.constant 1.000000e+00 : f32
    %308 = vector.broadcast %cst_123 : f32 to vector<64x32xf32>
    %309 = arith.addf %308, %307 : vector<64x32xf32>
    %cst_124 = arith.constant 1.000000e+00 : f32
    %310 = vector.broadcast %cst_124 : f32 to vector<64x32xf32>
    %311 = arith.divf %310, %309 : vector<64x32xf32>
    %312 = arith.mulf %304, %311 : vector<64x32xf32>
    %c32_125 = arith.constant 32 : index
    %c0_126 = arith.constant 0 : index
    %313 = vector.load %arg9[%c32_125, %c0_126] : memref<320x128xf32, #tpu.memory_space<vmem>>, vector<32x32xf32>
    %cst_127 = arith.constant dense<0.000000e+00> : vector<64x32xf32>
    %314 = tpu.matmul %312, %313, %cst_127 {dimension_numbers = #tpu.dot_dimension_numbers<[1], [0], [0], [1], [0, 0, 1, 1], [], []>} : vector<64x32xf32>, vector<32x32xf32>, vector<64x32xf32> -> vector<64x32xf32>
    %315 = vector.broadcast %263 : vector<1x32xf32> to vector<64x32xf32>
    %316 = arith.addf %314, %315 : vector<64x32xf32>
    %cst_128 = arith.constant 0.000000e+00 : f32
    %317 = vector.broadcast %cst_128 : f32 to vector<64x32xf32>
    %318 = arith.subf %317, %316 : vector<64x32xf32>
    %319 = math.exp %318 : vector<64x32xf32>
    %cst_129 = arith.constant 1.000000e+00 : f32
    %320 = vector.broadcast %cst_129 : f32 to vector<64x32xf32>
    %321 = arith.addf %320, %319 : vector<64x32xf32>
    %cst_130 = arith.constant 1.000000e+00 : f32
    %322 = vector.broadcast %cst_130 : f32 to vector<64x32xf32>
    %323 = arith.divf %322, %321 : vector<64x32xf32>
    %324 = arith.mulf %316, %323 : vector<64x32xf32>
    %c64_131 = arith.constant 64 : index
    %c0_132 = arith.constant 0 : index
    %325 = vector.load %arg9[%c64_131, %c0_132] : memref<320x128xf32, #tpu.memory_space<vmem>>, vector<32x32xf32>
    %cst_133 = arith.constant dense<0.000000e+00> : vector<64x32xf32>
    %326 = tpu.matmul %324, %325, %cst_133 {dimension_numbers = #tpu.dot_dimension_numbers<[1], [0], [0], [1], [0, 0, 1, 1], [], []>} : vector<64x32xf32>, vector<32x32xf32>, vector<64x32xf32> -> vector<64x32xf32>
    %327 = vector.broadcast %264 : vector<1x32xf32> to vector<64x32xf32>
    %328 = arith.addf %326, %327 : vector<64x32xf32>
    %cst_134 = arith.constant 0.000000e+00 : f32
    %329 = vector.broadcast %cst_134 : f32 to vector<64x32xf32>
    %330 = arith.subf %329, %328 : vector<64x32xf32>
    %331 = math.exp %330 : vector<64x32xf32>
    %cst_135 = arith.constant 1.000000e+00 : f32
    %332 = vector.broadcast %cst_135 : f32 to vector<64x32xf32>
    %333 = arith.addf %332, %331 : vector<64x32xf32>
    %cst_136 = arith.constant 1.000000e+00 : f32
    %334 = vector.broadcast %cst_136 : f32 to vector<64x32xf32>
    %335 = arith.divf %334, %333 : vector<64x32xf32>
    %336 = arith.mulf %328, %335 : vector<64x32xf32>
    %337 = vector.broadcast %265 : vector<1x32xf32> to vector<64x32xf32>
    %338 = arith.mulf %336, %337 : vector<64x32xf32>
    %cst_137 = arith.constant dense<0.000000e+00> : vector<64xf32>
    %339 = vector.multi_reduction <add>, %338, %cst_137 [1] : vector<64x32xf32> to vector<64xf32>
    %340 = vector.shape_cast %339 : vector<64xf32> to vector<64x1xf32>
    %341 = vector.broadcast %340 : vector<64x1xf32> to vector<64x3xf32>
    %342 = arith.mulf %341, %286 : vector<64x3xf32>
    %343 = tpu.concatenate %324, %342 in 1 : vector<64x32xf32>, vector<64x3xf32> -> vector<64x35xf32>
    %cst_138 = arith.constant dense<0.000000e+00> : vector<8x35xf32>
    %344 = tpu.matmul %3, %343, %cst_138 {dimension_numbers = #tpu.dot_dimension_numbers<[1], [0], [0], [1], [0, 0, 1, 1], [], []>} : vector<8x64xf32>, vector<64x35xf32>, vector<8x35xf32> -> vector<8x35xf32>
    %345 = vector.extract_strided_slice %344 {offsets = [0, 0], sizes = [8, 32], strides = [1, 1]} : vector<8x35xf32> to vector<8x32xf32>
    %346 = vector.extract_strided_slice %344 {offsets = [0, 32], sizes = [8, 3], strides = [1, 1]} : vector<8x35xf32> to vector<8x3xf32>
    %347 = vector.broadcast %4 : vector<8x1xf32> to vector<8x3xf32>
    %348 = arith.mulf %346, %347 : vector<8x3xf32>
    %349 = vector.shape_cast %259 : vector<1x32xf32> to vector<1x32xf32>
    %350 = vector.broadcast %349 : vector<1x32xf32> to vector<8x32xf32>
    %351 = tpu.concatenate %241, %345, %350 in 1 : vector<8x32xf32>, vector<8x32xf32>, vector<8x32xf32> -> vector<8x96xf32>
    %c96_139 = arith.constant 96 : index
    %c0_140 = arith.constant 0 : index
    %352 = vector.load %arg9[%c96_139, %c0_140] : memref<320x128xf32, #tpu.memory_space<vmem>>, vector<96x32xf32>
    %cst_141 = arith.constant dense<0.000000e+00> : vector<8x32xf32>
    %353 = tpu.matmul %351, %352, %cst_141 {dimension_numbers = #tpu.dot_dimension_numbers<[1], [0], [0], [1], [0, 0, 1, 1], [], []>} : vector<8x96xf32>, vector<96x32xf32>, vector<8x32xf32> -> vector<8x32xf32>
    %354 = vector.broadcast %266 : vector<1x32xf32> to vector<8x32xf32>
    %355 = arith.addf %353, %354 : vector<8x32xf32>
    %cst_142 = arith.constant 0.000000e+00 : f32
    %356 = vector.broadcast %cst_142 : f32 to vector<8x32xf32>
    %357 = arith.subf %356, %355 : vector<8x32xf32>
    %358 = math.exp %357 : vector<8x32xf32>
    %cst_143 = arith.constant 1.000000e+00 : f32
    %359 = vector.broadcast %cst_143 : f32 to vector<8x32xf32>
    %360 = arith.addf %359, %358 : vector<8x32xf32>
    %cst_144 = arith.constant 1.000000e+00 : f32
    %361 = vector.broadcast %cst_144 : f32 to vector<8x32xf32>
    %362 = arith.divf %361, %360 : vector<8x32xf32>
    %363 = arith.mulf %355, %362 : vector<8x32xf32>
    %c192_145 = arith.constant 192 : index
    %c0_146 = arith.constant 0 : index
    %364 = vector.load %arg9[%c192_145, %c0_146] : memref<320x128xf32, #tpu.memory_space<vmem>>, vector<32x32xf32>
    %cst_147 = arith.constant dense<0.000000e+00> : vector<8x32xf32>
    %365 = tpu.matmul %363, %364, %cst_147 {dimension_numbers = #tpu.dot_dimension_numbers<[1], [0], [0], [1], [0, 0, 1, 1], [], []>} : vector<8x32xf32>, vector<32x32xf32>, vector<8x32xf32> -> vector<8x32xf32>
    %366 = vector.broadcast %267 : vector<1x32xf32> to vector<8x32xf32>
    %367 = arith.addf %365, %366 : vector<8x32xf32>
    %cst_148 = arith.constant dense<0.000000e+00> : vector<32xf32>
    %368 = vector.multi_reduction <add>, %367, %cst_148 [0] : vector<8x32xf32> to vector<32xf32>
    %369 = vector.shape_cast %368 : vector<32xf32> to vector<1x32xf32>
    %cst_149 = arith.constant 1.250000e-01 : f32
    %370 = vector.broadcast %cst_149 : f32 to vector<1x32xf32>
    %371 = arith.mulf %369, %370 : vector<1x32xf32>
    %372 = tpu.concatenate %259, %371 in 1 : vector<1x32xf32>, vector<1x32xf32> -> vector<1x64xf32>
    %c224_150 = arith.constant 224 : index
    %c0_151 = arith.constant 0 : index
    %373 = vector.load %arg9[%c224_150, %c0_151] : memref<320x128xf32, #tpu.memory_space<vmem>>, vector<64x32xf32>
    %cst_152 = arith.constant dense<0.000000e+00> : vector<1x32xf32>
    %374 = tpu.matmul %372, %373, %cst_152 {dimension_numbers = #tpu.dot_dimension_numbers<[1], [0], [0], [1], [0, 0, 1, 1], [], []>} : vector<1x64xf32>, vector<64x32xf32>, vector<1x32xf32> -> vector<1x32xf32>
    %375 = arith.addf %374, %268 : vector<1x32xf32>
    %cst_153 = arith.constant 0.000000e+00 : f32
    %376 = vector.broadcast %cst_153 : f32 to vector<1x32xf32>
    %377 = arith.subf %376, %375 : vector<1x32xf32>
    %378 = math.exp %377 : vector<1x32xf32>
    %cst_154 = arith.constant 1.000000e+00 : f32
    %379 = vector.broadcast %cst_154 : f32 to vector<1x32xf32>
    %380 = arith.addf %379, %378 : vector<1x32xf32>
    %cst_155 = arith.constant 1.000000e+00 : f32
    %381 = vector.broadcast %cst_155 : f32 to vector<1x32xf32>
    %382 = arith.divf %381, %380 : vector<1x32xf32>
    %383 = arith.mulf %375, %382 : vector<1x32xf32>
    %c288_156 = arith.constant 288 : index
    %c0_157 = arith.constant 0 : index
    %384 = vector.load %arg9[%c288_156, %c0_157] : memref<320x128xf32, #tpu.memory_space<vmem>>, vector<32x32xf32>
    %cst_158 = arith.constant dense<0.000000e+00> : vector<1x32xf32>
    %385 = tpu.matmul %383, %384, %cst_158 {dimension_numbers = #tpu.dot_dimension_numbers<[1], [0], [0], [1], [0, 0, 1, 1], [], []>} : vector<1x32xf32>, vector<32x32xf32>, vector<1x32xf32> -> vector<1x32xf32>
    %386 = arith.addf %260, %348 : vector<8x3xf32>
    %c0_159 = arith.constant 0 : index
    %c0_160 = arith.constant 0 : index
    %387 = vector.load %arg10[%c0_159, %c0_160] : memref<8x32xf32, #tpu.memory_space<vmem>>, vector<8x32xf32>
    tpu.vector_store %arg10[%c0_159, %c0_160], %367 {strides = array<i32>} : memref<8x32xf32, #tpu.memory_space<vmem>>, vector<8x32xf32>,
    %c0_161 = arith.constant 0 : index
    %c0_162 = arith.constant 0 : index
    %388 = vector.load %arg11[%c0_161, %c0_162] : memref<8x3xf32, #tpu.memory_space<vmem>>, vector<8x3xf32>
    tpu.vector_store %arg11[%c0_161, %c0_162], %386 {strides = array<i32>} : memref<8x3xf32, #tpu.memory_space<vmem>>, vector<8x3xf32>,
    %c0_163 = arith.constant 0 : index
    %c0_164 = arith.constant 0 : index
    %389 = vector.load %arg12[%c0_163, %c0_164] : memref<1x32xf32, #tpu.memory_space<vmem>>, vector<1x32xf32>
    tpu.vector_store %arg12[%c0_163, %c0_164], %385 {strides = array<i32>} : memref<1x32xf32, #tpu.memory_space<vmem>>, vector<1x32xf32>,
    return
  }
}

</mosaic_0001>

<llo_original>
// kernel: mul.5
$region0: #{mul.5}
  %s0 = inlined_call_operand.vmem [shape: f32[8,8], index: 0, kind: input, shape index: {}]
  %s1 = inlined_call_operand.vmem [shape: f32[64], index: 1, kind: output, shape index: {}]
  $region1: #{mul.5} parent=0
    #allocation0 [shape = 'u8[4096]{0}', space=vmem, size = 0x1000, scoped, tag = 'scoped mem for output reshape']
    %v2 = vld [vmem:[%s0] sm:$0x1]
    %vm3 = vcmask 64512
    %4 = vst.msk [vmem:[#allocation0] sm:$0x1] %vm3, %v2
    %s5 = scalar_lea.vmem %s0, 7
    %v6 = vld [vmem:[%s5] sm:$0x1]
    %7 = vrot.lane.b32.xlu0 %v6, 56
    %v8 = vpop.permute.xlu0 %7
    %vm9 = vcmask 523712
    %10 = vst.msk [vmem:[#allocation0] sm:$0x1] %vm9, %v8
    %s11 = scalar_lea.vmem %s0, 6
    %v12 = vld [vmem:[%s11] sm:$0x1]
    %13 = vrot.lane.b32.xlu0 %v12, 48
    %v14 = vpop.permute.xlu0 %13
    %vm15 = vcmask 458112
    %16 = vst.msk [vmem:[#allocation0] sm:$0x1] %vm15, %v14
    %s17 = scalar_lea.vmem %s0, 5
    %v18 = vld [vmem:[%s17] sm:$0x1]
    %19 = vrot.lane.b32.xlu0 %v18, 40
    %v20 = vpop.permute.xlu0 %19
    %vm21 = vcmask 392512
    %22 = vst.msk [vmem:[#allocation0] sm:$0x1] %vm21, %v20
    %s23 = scalar_lea.vmem %s0, 4
    %v24 = vld [vmem:[%s23] sm:$0x1]
    %25 = vrot.lane.b32.xlu0 %v24, 32
    %v26 = vpop.permute.xlu0 %25
    %vm27 = vcmask 326912
    %28 = vst.msk [vmem:[#allocation0] sm:$0x1] %vm27, %v26
    %s29 = scalar_lea.vmem %s0, 3
    %v30 = vld [vmem:[%s29] sm:$0x1]
    %31 = vrot.lane.b32.xlu0 %v30, 24
    %v32 = vpop.permute.xlu0 %31
    %vm33 = vcmask 261312
    %34 = vst.msk [vmem:[#allocation0] sm:$0x1] %vm33, %v32
    %s35 = scalar_lea.vmem %s0, 2
    %v36 = vld [vmem:[%s35] sm:$0x1]
    %37 = vrot.lane.b32.xlu0 %v36, 16
    %v38 = vpop.permute.xlu0 %37
    %vm39 = vcmask 195712
    %40 = vst.msk [vmem:[#allocation0] sm:$0x1] %vm39, %v38
    %s41 = scalar_lea.vmem %s0, 1
    %v42 = vld [vmem:[%s41] sm:$0x1]
    %43 = vrot.lane.b32.xlu0 %v42, 8
    %v44 = vpop.permute.xlu0 %43
    %vm45 = vcmask 130112
    %46 = vst.msk [vmem:[#allocation0] sm:$0x1] %vm45, %v44
    %s48 = sshll.u32 1, 1
    %s49 = ssub.s32 %s48, 1
    %v51 = vld [vmem:[#allocation0] sm:%s49]
    %s52 = sshll.u32 1, 1
    %s53 = ssub.s32 %s52, 1
    %54 = vst [vmem:[%s1] sm:%s53] %v51

// kernel: _lambda_.1
$region0: #{_lambda_.1}
  #allocation0 [shape = 'u32[]', space=smem, size = 0x4, offset = 0x4, fixed_abs, tag = 'smem constant byte address 0x4 - core index']
  #allocation1 [shape = 'u32[144,128]{1,0:T(1,128)}', space=vmem, size = 0x12000, scoped, tag = 'internal scratch']
  %s0 = inlined_call_operand.vmem [shape: f32[8,16], index: 0, kind: input, shape index: {}]
  %s1 = inlined_call_operand.vmem [shape: f32[8,3], index: 1, kind: input, shape index: {}]
  %s2 = inlined_call_operand.vmem [shape: f32[1,8], index: 2, kind: input, shape index: {}]
  %s3 = inlined_call_operand.vmem [shape: f32[8,64], index: 3, kind: input, shape index: {}]
  %s4 = inlined_call_operand.vmem [shape: f32[8,1], index: 4, kind: input, shape index: {}]
  %s5 = inlined_call_operand.vmem [shape: f32[64,2], index: 5, kind: input, shape index: {}]
  %s6 = inlined_call_operand.vmem [shape: f32[24,128], index: 6, kind: input, shape index: {}]
  %s7 = inlined_call_operand.vmem [shape: f32[272,128], index: 7, kind: input, shape index: {}]
  %s8 = inlined_call_operand.vmem [shape: f32[320,128], index: 8, kind: input, shape index: {}]
  %s9 = inlined_call_operand.vmem [shape: f32[320,128], index: 9, kind: input, shape index: {}]
  %s10 = inlined_call_operand.hbm [shape: f32[8,32], index: 10, kind: output, shape index: {0}]
  %s11 = inlined_call_operand.vmem [shape: f32[8,3], index: 11, kind: output, shape index: {1}]
  %s12 = inlined_call_operand.hbm [shape: f32[1,32], index: 12, kind: output, shape index: {2}]
  %13 = xla_tuple %s10, %s11, %s12
  %s14 = sld [smem:[#allocation0]]
  $region66: #{_lambda_.1} parent=0
    _
  %s16 = ssub.s32 1, %s14
  %s17 = scalar_select 0, %s16, %s14
  $region1: #{_lambda_.1} parent=0
    #allocation2 [shape = 'u8[4096]{0}', space=vmem, size = 0x1000, scoped, tag = 'output window, operand 0, single buffered']
    #allocation3 [shape = 's32[1]{0}', space=sflag, size = 0x4, scoped, tag = 'scoped memory for _lambda_.1']
    #allocation4 [shape = 'u8[512]{0}', space=vmem, size = 0x400, scoped, tag = 'output window, operand 2, single buffered']
    #allocation5 [shape = 's32[1]{0}', space=sflag, size = 0x4, scoped, tag = 'scoped memory for _lambda_.1']
    %18 = vsyncpa [#allocation3], 0
    %19 = vsyncpa [#allocation5], 0
    // Predicated region
    $region2: #{_lambda_.1} parent=1 // pred_check
      _
    $region3: #{_lambda_.1} parent=1 // pred_check_branch
      %21 = sbr.rel (0) target = $region5
    $region4: #{_lambda_.1} parent=1 // pred_region
      _
    $region5: #{_lambda_.1} parent=1 // pred_fallthru
      _
    // Predicated region
    $region6: #{_lambda_.1} parent=1 // pred_check
      _
    $region7: #{_lambda_.1} parent=1 // pred_check_branch
      %23 = sbr.rel (0) target = $region9
    $region8: #{_lambda_.1} parent=1 // pred_region
      _
    $region9: #{_lambda_.1} parent=1 // pred_fallthru
      _
    // Predicated region
    $region10: #{_lambda_.1} parent=1 // pred_check
      _
    $region11: #{_lambda_.1} parent=1 // pred_check_branch
      %25 = sbr.rel (0) target = $region13
    $region12: #{_lambda_.1} parent=1 // pred_region
      _
    $region13: #{_lambda_.1} parent=1 // pred_fallthru
      _
    // Predicated region
    $region14: #{_lambda_.1} parent=1 // pred_check
      _
    $region15: #{_lambda_.1} parent=1 // pred_check_branch
      %27 = sbr.rel (0) target = $region17
    $region16: #{_lambda_.1} parent=1 // pred_region
      _
    $region17: #{_lambda_.1} parent=1 // pred_fallthru
      _
    // Predicated region
    $region18: #{_lambda_.1} parent=1 // pred_check
      _
    $region19: #{_lambda_.1} parent=1 // pred_check_branch
      %29 = sbr.rel (0) target = $region21
    $region20: #{_lambda_.1} parent=1 // pred_region
      _
    $region21: #{_lambda_.1} parent=1 // pred_fallthru
      _
    // Predicated region
    $region22: #{_lambda_.1} parent=1 // pred_check
      _
    $region23: #{_lambda_.1} parent=1 // pred_check_branch
      %31 = sbr.rel (0) target = $region25
    $region24: #{_lambda_.1} parent=1 // pred_region
      _
    $region25: #{_lambda_.1} parent=1 // pred_fallthru
      _
    // Predicated region
    $region26: #{_lambda_.1} parent=1 // pred_check
      _
    $region27: #{_lambda_.1} parent=1 // pred_check_branch
      %33 = sbr.rel (0) target = $region29
    $region28: #{_lambda_.1} parent=1 // pred_region
      _
    $region29: #{_lambda_.1} parent=1 // pred_fallthru
      _
    // Predicated region
    $region30: #{_lambda_.1} parent=1 // pred_check
      _
    $region31: #{_lambda_.1} parent=1 // pred_check_branch
      %35 = sbr.rel (0) target = $region33
    $region32: #{_lambda_.1} parent=1 // pred_region
      _
    $region33: #{_lambda_.1} parent=1 // pred_fallthru
      _
    // Predicated region
    $region34: #{_lambda_.1} parent=1 // pred_check
      _
    $region35: #{_lambda_.1} parent=1 // pred_check_branch
      %37 = sbr.rel (0) target = $region37
    $region36: #{_lambda_.1} parent=1 // pred_region
      _
    $region37: #{_lambda_.1} parent=1 // pred_fallthru
      _
    // Predicated region
    $region38: #{_lambda_.1} parent=1 // pred_check
      _
    $region39: #{_lambda_.1} parent=1 // pred_check_branch
      %39 = sbr.rel (0) target = $region41
    $region40: #{_lambda_.1} parent=1 // pred_region
      _
    $region41: #{_lambda_.1} parent=1 // pred_fallthru
      _
    %v40 = vld [vmem:[%s0] sm:$0xff]
    %v41 = vld [vmem:[%s1] sm:$0xff]
    %v42 = vld [vmem:[%s2] sm:$0x1]
    %v43 = vld [vmem:[%s3] sm:$0xff]
    %v44 = vld [vmem:[%s4] sm:$0xff]
    %v45 = vld [vmem:[%s6] sm:$0x1]
    %v46 = vld [vmem:[%s6 + $0x1] sm:$0x1]
    %v47 = vld [vmem:[%s6 + $0x2] sm:$0x1]
    %v48 = vld [vmem:[%s6 + $0x3] sm:$0x1]
    %v49 = vld [vmem:[%s6 + $0x4] sm:$0x1]
    %v50 = vld [vmem:[%s6 + $0x5] sm:$0x1]
    %v51 = vld [vmem:[%s6 + $0x6] sm:$0x1]
    %v52 = vld [vmem:[%s6 + $0x7] sm:$0x1]
    %v54 = vcombine.high %v41, %v41
    %v56 = vunpack.c.l.s4 1966171168
    %v57 = vunpack.c.0.s8 %v56
    %v58 = vlaneseq
    %v59 = vshrl.u32 %v58, 7
    %v60 = vsub.s32 %v57, %v59
    %v61 = vrot.slane %v41, %v60
    %v63 = vunpack.c.l.s4 1966171168
    %v64 = vunpack.c.0.s8 %v63
    %v65 = vlaneseq
    %v66 = vshrl.u32 %v65, 7
    %v67 = vsub.s32 %v64, %v66
    %v68 = vrot.slane %v54, %v67
    %v69 = vcombine.high %v61, %v61
    %v70 = vcombine.high %v68, %v68
    %v72 = vunpack.c.l.s4 1966171168
    %v73 = vunpack.c.0.s8 %v72
    %v74 = vlaneseq
    %v75 = vshrl.u32 %v74, 7
    %v76 = vsub.s32 %v73, %v75
    %v77 = vrot.slane %v61, %v76
    %v79 = vunpack.c.l.s4 1966171168
    %v80 = vunpack.c.0.s8 %v79
    %v81 = vlaneseq
    %v82 = vshrl.u32 %v81, 7
    %v83 = vsub.s32 %v80, %v82
    %v84 = vrot.slane %v68, %v83
    %v86 = vunpack.c.l.s4 1966171168
    %v87 = vunpack.c.0.s8 %v86
    %v88 = vlaneseq
    %v89 = vshrl.u32 %v88, 7
    %v90 = vsub.s32 %v87, %v89
    %v91 = vrot.slane %v69, %v90
    %v93 = vunpack.c.l.s4 1966171168
    %v94 = vunpack.c.0.s8 %v93
    %v95 = vlaneseq
    %v96 = vshrl.u32 %v95, 7
    %v97 = vsub.s32 %v94, %v96
    %v98 = vrot.slane %v70, %v97
    %v99 = vcombine.high %v77, %v77
    %v100 = vcombine.high %v84, %v84
    %v101 = vcombine.high %v91, %v91
    %v102 = vcombine.high %v98, %v98
    %v103 = vlaneseq
    %v104 = vshrl.u32 %v103, 7
    %v105 = vsub.s32 0, %v104
    %v106 = vrot.slane %v77, %v105
    %v107 = vlaneseq
    %v108 = vshrl.u32 %v107, 7
    %v109 = vsub.s32 0, %v108
    %v110 = vrot.slane %v91, %v109
    %v111 = vlaneseq
    %v112 = vshrl.u32 %v111, 7
    %v113 = vsub.s32 0, %v112
    %v114 = vrot.slane %v99, %v113
    %v115 = vlaneseq
    %v116 = vshrl.u32 %v115, 7
    %v117 = vsub.s32 0, %v116
    %v118 = vrot.slane %v101, %v117
    %v119 = vlaneseq
    %v120 = vshrl.u32 %v119, 7
    %v121 = vsub.s32 0, %v120
    %v122 = vrot.slane %v84, %v121
    %v123 = vlaneseq
    %v124 = vshrl.u32 %v123, 7
    %v125 = vsub.s32 0, %v124
    %v126 = vrot.slane %v98, %v125
    %v127 = vlaneseq
    %v128 = vshrl.u32 %v127, 7
    %v129 = vsub.s32 0, %v128
    %v130 = vrot.slane %v100, %v129
    %v131 = vlaneseq
    %v132 = vshrl.u32 %v131, 7
    %v133 = vsub.s32 0, %v132
    %v134 = vrot.slane %v102, %v133
    %v143 = vsub.f32 %v41, %v106
    %v144 = vsub.f32 %v41, %v110
    %v145 = vsub.f32 %v41, %v114
    %v146 = vsub.f32 %v41, %v118
    %v147 = vsub.f32 %v41, %v122
    %v148 = vsub.f32 %v41, %v126
    %v149 = vsub.f32 %v41, %v130
    %v150 = vsub.f32 %v41, %v134
    %v151 = vadd.f32 %v143, 0.5
    %v152 = vadd.f32 %v144, 0.5
    %v153 = vadd.f32 %v145, 0.5
    %v154 = vadd.f32 %v146, 0.5
    %v155 = vadd.f32 %v147, 0.5
    %v156 = vadd.f32 %v148, 0.5
    %v157 = vadd.f32 %v149, 0.5
    %v158 = vadd.f32 %v150, 0.5
    %v159 = vfloor.f32 %v151
    %v160 = vfloor.f32 %v152
    %v161 = vfloor.f32 %v153
    %v162 = vfloor.f32 %v154
    %v163 = vfloor.f32 %v155
    %v164 = vfloor.f32 %v156
    %v165 = vfloor.f32 %v157
    %v166 = vfloor.f32 %v158
    %v167 = vsub.f32 %v143, %v159
    %v168 = vsub.f32 %v144, %v160
    %v169 = vsub.f32 %v145, %v161
    %v170 = vsub.f32 %v146, %v162
    %v171 = vsub.f32 %v147, %v163
    %v172 = vsub.f32 %v148, %v164
    %v173 = vsub.f32 %v149, %v165
    %v174 = vsub.f32 %v150, %v166
    %v175 = vmul.f32 %v167, %v167
    %v176 = vmul.f32 %v168, %v168
    %v177 = vmul.f32 %v169, %v169
    %v178 = vmul.f32 %v170, %v170
    %v179 = vmul.f32 %v171, %v171
    %v180 = vmul.f32 %v172, %v172
    %v181 = vmul.f32 %v173, %v173
    %v182 = vmul.f32 %v174, %v174
    %vm183 = vcmask 23552
    %v184 = vsel %vm183, %v175, 0.0
    %185 = vadd.xlane.f32.xlu0 %v184
    %v186 = vpop.xlane.xlu0 %185
    %v187 = vsel %vm183, %v176, 0.0
    %188 = vadd.xlane.f32.xlu0 %v187
    %v189 = vpop.xlane.xlu0 %188
    %v190 = vsel %vm183, %v177, 0.0
    %191 = vadd.xlane.f32.xlu0 %v190
    %v192 = vpop.xlane.xlu0 %191
    %v193 = vsel %vm183, %v178, 0.0
    %194 = vadd.xlane.f32.xlu0 %v193
    %v195 = vpop.xlane.xlu0 %194
    %v196 = vsel %vm183, %v179, 0.0
    %197 = vadd.xlane.f32.xlu0 %v196
    %v198 = vpop.xlane.xlu0 %197
    %v199 = vsel %vm183, %v180, 0.0
    %200 = vadd.xlane.f32.xlu0 %v199
    %v201 = vpop.xlane.xlu0 %200
    %v202 = vsel %vm183, %v181, 0.0
    %203 = vadd.xlane.f32.xlu0 %v202
    %v204 = vpop.xlane.xlu0 %203
    %v205 = vsel %vm183, %v182, 0.0
    %206 = vadd.xlane.f32.xlu0 %v205
    %v207 = vpop.xlane.xlu0 %206
    %v208 = vadd.f32 %v186, 1e-30
    %v209 = vadd.f32 %v189, 1e-30
    %v210 = vadd.f32 %v192, 1e-30
    %v211 = vadd.f32 %v195, 1e-30
    %v212 = vadd.f32 %v198, 1e-30
    %v213 = vadd.f32 %v201, 1e-30
    %v214 = vadd.f32 %v204, 1e-30
    %v215 = vadd.f32 %v207, 1e-30
    %v216 = vrsqrt.pop %v208
    %v217 = vrsqrt.pop %v209
    %v218 = vrsqrt.pop %v210
    %v219 = vrsqrt.pop %v211
    %v220 = vrsqrt.pop %v212
    %v221 = vrsqrt.pop %v213
    %v222 = vrsqrt.pop %v214
    %v223 = vrsqrt.pop %v215
    %v224 = vmul.f32 %v167, %v216
    %v225 = vmul.f32 %v168, %v217
    %v226 = vmul.f32 %v169, %v218
    %v227 = vmul.f32 %v170, %v219
    %v228 = vmul.f32 %v171, %v220
    %v229 = vmul.f32 %v172, %v221
    %v230 = vmul.f32 %v173, %v222
    %v231 = vmul.f32 %v174, %v223
    %v232 = vld [vmem:[%s7] sm:$0xff]
    %v233 = vld [vmem:[%s7 + $0x8] sm:$0xff]
    %vm234 = vcmask 130048
    %v236 = vsel %vm234, %v40, 0
    %238 = vmatprep.subr.mxu0 0.0
    %239 = vmatpush1.msra.mxu0 0.0
    %240 = vmatprep.subr.mxu0 0.0
    %241 = vmatpush1.msra.mxu0 0.0
    %242 = vmatprep.subr.mxu0 0.0
    %243 = vmatpush1.msra.mxu0 0.0
    %244 = vmatprep.subr.mxu0 0.0
    %245 = vmatpush1.msra.mxu0 0.0
    %246 = vmatprep.subr.mxu0 0.0
    %247 = vmatpush1.msra.mxu0 0.0
    %248 = vmatprep.subr.mxu0 0.0
    %249 = vmatpush1.msra.mxu0 0.0
    %250 = vmatprep.subr.mxu0 0.0
    %251 = vmatpush1.msra.mxu0 0.0
    %252 = vmatprep.subr.mxu0 0.0
    %253 = vmatpush1.msra.mxu0 0.0
    %254 = vmatprep.subr.mxu0 0.0
    %255 = vmatpush1.msra.mxu0 0.0
    %256 = vmatprep.subr.mxu0 0.0
    %257 = vmatpush1.msra.mxu0 0.0
    %258 = vmatprep.subr.mxu0 0.0
    %259 = vmatpush1.msra.mxu0 0.0
    %260 = vmatprep.subr.mxu0 0.0
    %261 = vmatpush1.msra.mxu0 0.0
    %262 = vmatprep.subr.mxu0 0.0
    %263 = vmatpush1.msra.mxu0 0.0
    %264 = vmatprep.subr.mxu0 0.0
    %265 = vmatpush1.msra.mxu0 0.0
    %266 = vmatprep.subr.mxu0 0.0
    %267 = vmatpush1.msra.mxu0 %v233
    %268 = vmatprep.subr.mxu0 0.0
    %269 = vmatpush1.msra.mxu0 %v232
    %270 = vmatprep.subr.mxu0 0.0
    %271 = vmatpush2.msra.mxu0 0.0
    %272 = vmatprep.subr.mxu0 0.0
    %273 = vmatpush2.msra.mxu0 0.0
    %274 = vmatprep.subr.mxu0 0.0
    %275 = vmatpush2.msra.mxu0 0.0
    %276 = vmatprep.subr.mxu0 0.0
    %277 = vmatpush2.msra.mxu0 0.0
    %278 = vmatprep.subr.mxu0 0.0
    %279 = vmatpush2.msra.mxu0 0.0
    %280 = vmatprep.subr.mxu0 0.0
    %281 = vmatpush2.msra.mxu0 0.0
    %282 = vmatprep.subr.mxu0 0.0
    %283 = vmatpush2.msra.mxu0 0.0
    %284 = vmatprep.subr.mxu0 0.0
    %285 = vmatpush2.msra.mxu0 0.0
    %286 = vmatprep.subr.mxu0 0.0
    %287 = vmatpush2.msra.mxu0 0.0
    %288 = vmatprep.subr.mxu0 0.0
    %289 = vmatpush2.msra.mxu0 0.0
    %290 = vmatprep.subr.mxu0 0.0
    %291 = vmatpush2.msra.mxu0 0.0
    %292 = vmatprep.subr.mxu0 0.0
    %293 = vmatpush2.msra.mxu0 0.0
    %294 = vmatprep.subr.mxu0 0.0
    %295 = vmatpush2.msra.mxu0 0.0
    %296 = vmatprep.subr.mxu0 0.0
    %297 = vmatpush2.msra.mxu0 0.0
    %298 = vmatprep.subr.mxu0 0.0
    %299 = vmatpush2.msra.mxu0 0.0
    %300 = vmatprep.subr.mxu0 0.0
    %301 = vmatpush2.msra.mxu0 0.0
    %302 = vmatprep.mubr.f32.mxu0 0.0
    %303 = vmatmul.mubr.f32.gmra.mxu0 %v236
    %v304 = vpop.f32.mrf.mxu0
    %v305 = vadd.f32 0.0, %v304
    %v306 = vpop.f32.mrf.mxu0
    %307 = vdwg.mxu0
    %v309 = vcombine.high %v305, %v305
    %v311 = vunpack.c.l.s4 1966171168
    %v312 = vunpack.c.0.s8 %v311
    %v313 = vlaneseq
    %v314 = vshrl.u32 %v313, 7
    %v315 = vsub.s32 %v312, %v314
    %v316 = vrot.slane %v305, %v315
    %v318 = vunpack.c.l.s4 1966171168
    %v319 = vunpack.c.0.s8 %v318
    %v320 = vlaneseq
    %v321 = vshrl.u32 %v320, 7
    %v322 = vsub.s32 %v319, %v321
    %v323 = vrot.slane %v309, %v322
    %v324 = vcombine.high %v316, %v316
    %v325 = vcombine.high %v323, %v323
    %v327 = vunpack.c.l.s4 1966171168
    %v328 = vunpack.c.0.s8 %v327
    %v329 = vlaneseq
    %v330 = vshrl.u32 %v329, 7
    %v331 = vsub.s32 %v328, %v330
    %v332 = vrot.slane %v316, %v331
    %v334 = vunpack.c.l.s4 1966171168
    %v335 = vunpack.c.0.s8 %v334
    %v336 = vlaneseq
    %v337 = vshrl.u32 %v336, 7
    %v338 = vsub.s32 %v335, %v337
    %v339 = vrot.slane %v323, %v338
    %v341 = vunpack.c.l.s4 1966171168
    %v342 = vunpack.c.0.s8 %v341
    %v343 = vlaneseq
    %v344 = vshrl.u32 %v343, 7
    %v345 = vsub.s32 %v342, %v344
    %v346 = vrot.slane %v324, %v345
    %v348 = vunpack.c.l.s4 1966171168
    %v349 = vunpack.c.0.s8 %v348
    %v350 = vlaneseq
    %v351 = vshrl.u32 %v350, 7
    %v352 = vsub.s32 %v349, %v351
    %v353 = vrot.slane %v325, %v352
    %v354 = vcombine.high %v332, %v332
    %v355 = vcombine.high %v339, %v339
    %v356 = vcombine.high %v346, %v346
    %v357 = vcombine.high %v353, %v353
    %v358 = vlaneseq
    %v359 = vshrl.u32 %v358, 7
    %v360 = vsub.s32 0, %v359
    %v361 = vrot.slane %v332, %v360
    %v362 = vlaneseq
    %v363 = vshrl.u32 %v362, 7
    %v364 = vsub.s32 0, %v363
    %v365 = vrot.slane %v346, %v364
    %v366 = vlaneseq
    %v367 = vshrl.u32 %v366, 7
    %v368 = vsub.s32 0, %v367
    %v369 = vrot.slane %v354, %v368
    %v370 = vlaneseq
    %v371 = vshrl.u32 %v370, 7
    %v372 = vsub.s32 0, %v371
    %v373 = vrot.slane %v356, %v372
    %v374 = vlaneseq
    %v375 = vshrl.u32 %v374, 7
    %v376 = vsub.s32 0, %v375
    %v377 = vrot.slane %v339, %v376
    %v378 = vlaneseq
    %v379 = vshrl.u32 %v378, 7
    %v380 = vsub.s32 0, %v379
    %v381 = vrot.slane %v353, %v380
    %v382 = vlaneseq
    %v383 = vshrl.u32 %v382, 7
    %v384 = vsub.s32 0, %v383
    %v385 = vrot.slane %v355, %v384
    %v386 = vlaneseq
    %v387 = vshrl.u32 %v386, 7
    %v388 = vsub.s32 0, %v387
    %v389 = vrot.slane %v357, %v388
    %390 = vrot.lane.b32.xlu0 %v361, 96
    %v391 = vpop.permute.xlu0 %390
    %392 = vrot.lane.b32.xlu0 %v365, 96
    %v393 = vpop.permute.xlu0 %392
    %394 = vrot.lane.b32.xlu0 %v369, 96
    %v395 = vpop.permute.xlu0 %394
    %396 = vrot.lane.b32.xlu0 %v373, 96
    %v397 = vpop.permute.xlu0 %396
    %398 = vrot.lane.b32.xlu0 %v377, 96
    %v399 = vpop.permute.xlu0 %398
    %400 = vrot.lane.b32.xlu0 %v381, 96
    %v401 = vpop.permute.xlu0 %400
    %402 = vrot.lane.b32.xlu0 %v385, 96
    %v403 = vpop.permute.xlu0 %402
    %404 = vrot.lane.b32.xlu0 %v389, 96
    %v405 = vpop.permute.xlu0 %404
    %v414 = vadd.f32 %v305, %v391
    %v415 = vadd.f32 %v305, %v393
    %v416 = vadd.f32 %v305, %v395
    %v417 = vadd.f32 %v305, %v397
    %v418 = vadd.f32 %v305, %v399
    %v419 = vadd.f32 %v305, %v401
    %v420 = vadd.f32 %v305, %v403
    %v421 = vadd.f32 %v305, %v405
    %v422 = vlaneseq
    %v423 = vshrl.u32 %v422, 7
    %v424 = vsub.s32 0, %v423
    %v425 = vrot.slane %v45, %v424
    %v426 = vmul.f32 %v186, %v425
    %v427 = vmul.f32 %v189, %v425
    %v428 = vmul.f32 %v192, %v425
    %v429 = vmul.f32 %v195, %v425
    %v430 = vmul.f32 %v198, %v425
    %v431 = vmul.f32 %v201, %v425
    %v432 = vmul.f32 %v204, %v425
    %v433 = vmul.f32 %v207, %v425
    %v434 = vadd.f32 %v414, %v426
    %v435 = vadd.f32 %v415, %v427
    %v436 = vadd.f32 %v416, %v428
    %v437 = vadd.f32 %v417, %v429
    %v438 = vadd.f32 %v418, %v430
    %v439 = vadd.f32 %v419, %v431
    %v440 = vadd.f32 %v420, %v432
    %v441 = vadd.f32 %v421, %v433
    %v442 = vlaneseq
    %v443 = vshrl.u32 %v442, 7
    %v444 = vsub.s32 0, %v443
    %v445 = vrot.slane %v46, %v444
    %v446 = vadd.f32 %v434, %v445
    %v447 = vadd.f32 %v435, %v445
    %v448 = vadd.f32 %v436, %v445
    %v449 = vadd.f32 %v437, %v445
    %v450 = vadd.f32 %v438, %v445
    %v451 = vadd.f32 %v439, %v445
    %v452 = vadd.f32 %v440, %v445
    %v453 = vadd.f32 %v441, %v445
    %v454 = vld [vmem:[%s5] sm:$0xff]
    %v455 = vld [vmem:[%s5 + $0x8] sm:$0xff]
    %v456 = vld [vmem:[%s5 + $0x10] sm:$0xff]
    %v457 = vld [vmem:[%s5 + $0x18] sm:$0xff]
    %v458 = vld [vmem:[%s5 + $0x20] sm:$0xff]
    %v459 = vld [vmem:[%s5 + $0x28] sm:$0xff]
    %v460 = vld [vmem:[%s5 + $0x30] sm:$0xff]
    %v461 = vld [vmem:[%s5 + $0x38] sm:$0xff]
    %v462 = vld [vmem:[%s7 + $0x10] sm:$0x3]
    %vm463 = vcmask 15360
    %v465 = vsel %vm463, %v454, 0
    %v468 = vsel %vm463, %v455, 0
    %v471 = vsel %vm463, %v456, 0
    %v474 = vsel %vm463, %v457, 0
    %v477 = vsel %vm463, %v458, 0
    %v480 = vsel %vm463, %v459, 0
    %v483 = vsel %vm463, %v460, 0
    %v486 = vsel %vm463, %v461, 0
    %vm488 = vcmask 1041408
    %v490 = vsel %vm488, %v462, 0
    %492 = vmatprep.subr.mxu0 0.0
    %493 = vmatpush1.msra.mxu0 0.0
    %494 = vmatprep.subr.mxu0 0.0
    %495 = vmatpush1.msra.mxu0 0.0
    %496 = vmatprep.subr.mxu0 0.0
    %497 = vmatpush1.msra.mxu0 0.0
    %498 = vmatprep.subr.mxu0 0.0
    %499 = vmatpush1.msra.mxu0 0.0
    %500 = vmatprep.subr.mxu0 0.0
    %501 = vmatpush1.msra.mxu0 0.0
    %502 = vmatprep.subr.mxu0 0.0
    %503 = vmatpush1.msra.mxu0 0.0
    %504 = vmatprep.subr.mxu0 0.0
    %505 = vmatpush1.msra.mxu0 0.0
    %506 = vmatprep.subr.mxu0 0.0
    %507 = vmatpush1.msra.mxu0 0.0
    %508 = vmatprep.subr.mxu0 0.0
    %509 = vmatpush1.msra.mxu0 0.0
    %510 = vmatprep.subr.mxu0 0.0
    %511 = vmatpush1.msra.mxu0 0.0
    %512 = vmatprep.subr.mxu0 0.0
    %513 = vmatpush1.msra.mxu0 0.0
    %514 = vmatprep.subr.mxu0 0.0
    %515 = vmatpush1.msra.mxu0 0.0
    %516 = vmatprep.subr.mxu0 0.0
    %517 = vmatpush1.msra.mxu0 0.0
    %518 = vmatprep.subr.mxu0 0.0
    %519 = vmatpush1.msra.mxu0 0.0
    %520 = vmatprep.subr.mxu0 0.0
    %521 = vmatpush1.msra.mxu0 0.0
    %522 = vmatprep.subr.mxu0 0.0
    %523 = vmatpush1.msra.mxu0 %v490
    %524 = vmatprep.subr.mxu0 0.0
    %525 = vmatpush2.msra.mxu0 0.0
    %526 = vmatprep.subr.mxu0 0.0
    %527 = vmatpush2.msra.mxu0 0.0
    %528 = vmatprep.subr.mxu0 0.0
    %529 = vmatpush2.msra.mxu0 0.0
    %530 = vmatprep.subr.mxu0 0.0
    %531 = vmatpush2.msra.mxu0 0.0
    %532 = vmatprep.subr.mxu0 0.0
    %533 = vmatpush2.msra.mxu0 0.0
    %534 = vmatprep.subr.mxu0 0.0
    %535 = vmatpush2.msra.mxu0 0.0
    %536 = vmatprep.subr.mxu0 0.0
    %537 = vmatpush2.msra.mxu0 0.0
    %538 = vmatprep.subr.mxu0 0.0
    %539 = vmatpush2.msra.mxu0 0.0
    %540 = vmatprep.subr.mxu0 0.0
    %541 = vmatpush2.msra.mxu0 0.0
    %542 = vmatprep.subr.mxu0 0.0
    %543 = vmatpush2.msra.mxu0 0.0
    %544 = vmatprep.subr.mxu0 0.0
    %545 = vmatpush2.msra.mxu0 0.0
    %546 = vmatprep.subr.mxu0 0.0
    %547 = vmatpush2.msra.mxu0 0.0
    %548 = vmatprep.subr.mxu0 0.0
    %549 = vmatpush2.msra.mxu0 0.0
    %550 = vmatprep.subr.mxu0 0.0
    %551 = vmatpush2.msra.mxu0 0.0
    %552 = vmatprep.subr.mxu0 0.0
    %553 = vmatpush2.msra.mxu0 0.0
    %554 = vmatprep.subr.mxu0 0.0
    %555 = vmatpush2.msra.mxu0 0.0
    %556 = vmatprep.mubr.f32.mxu0 0.0
    %557 = vmatmul.mubr.f32.gmra.mxu0 %v465
    %v558 = vpop.f32.mrf.mxu0
    %v559 = vadd.f32 0.0, %v558
    %v560 = vpop.f32.mrf.mxu0
    %561 = vmatprep.mubr.f32.mxu0 0.0
    %562 = vmatmul.mubr.f32.gmra.mxu0 %v468
    %v563 = vpop.f32.mrf.mxu0
    %v564 = vadd.f32 0.0, %v563
    %v565 = vpop.f32.mrf.mxu0
    %566 = vmatprep.mubr.f32.mxu0 0.0
    %567 = vmatmul.mubr.f32.gmra.mxu0 %v471
    %v568 = vpop.f32.mrf.mxu0
    %v569 = vadd.f32 0.0, %v568
    %v570 = vpop.f32.mrf.mxu0
    %571 = vmatprep.mubr.f32.mxu0 0.0
    %572 = vmatmul.mubr.f32.gmra.mxu0 %v474
    %v573 = vpop.f32.mrf.mxu0
    %v574 = vadd.f32 0.0, %v573
    %v575 = vpop.f32.mrf.mxu0
    %576 = vmatprep.mubr.f32.mxu0 0.0
    %577 = vmatmul.mubr.f32.gmra.mxu0 %v477
    %v578 = vpop.f32.mrf.mxu0
    %v579 = vadd.f32 0.0, %v578
    %v580 = vpop.f32.mrf.mxu0
    %581 = vmatprep.mubr.f32.mxu0 0.0
    %582 = vmatmul.mubr.f32.gmra.mxu0 %v480
    %v583 = vpop.f32.mrf.mxu0
    %v584 = vadd.f32 0.0, %v583
    %v585 = vpop.f32.mrf.mxu0
    %586 = vmatprep.mubr.f32.mxu0 0.0
    %587 = vmatmul.mubr.f32.gmra.mxu0 %v483
    %v588 = vpop.f32.mrf.mxu0
    %v589 = vadd.f32 0.0, %v588
    %v590 = vpop.f32.mrf.mxu0
    %591 = vmatprep.mubr.f32.mxu0 0.0
    %592 = vmatmul.mubr.f32.gmra.mxu0 %v486
    %v593 = vpop.f32.mrf.mxu0
    %v594 = vadd.f32 0.0, %v593
    %v595 = vpop.f32.mrf.mxu0
    %596 = vdwg.mxu0
    %v597 = vadd.f32 %v446, %v559
    %v598 = vadd.f32 %v447, %v564
    %v599 = vadd.f32 %v448, %v569
    %v600 = vadd.f32 %v449, %v574
    %v601 = vadd.f32 %v450, %v579
    %v602 = vadd.f32 %v451, %v584
    %v603 = vadd.f32 %v452, %v589
    %v604 = vadd.f32 %v453, %v594
    %v605 = vsub.f32 0.0, %v597
    %v606 = vsub.f32 0.0, %v598
    %v607 = vsub.f32 0.0, %v599
    %v608 = vsub.f32 0.0, %v600
    %v609 = vsub.f32 0.0, %v601
    %v610 = vsub.f32 0.0, %v602
    %v611 = vsub.f32 0.0, %v603
    %v612 = vsub.f32 0.0, %v604
    %v613 = vmul.f32 %v605, 1.442695
    %v614 = vpow.pop %v613
    %v615 = vmul.f32 %v606, 1.442695
    %v616 = vpow.pop %v615
    %v617 = vmul.f32 %v607, 1.442695
    %v618 = vpow.pop %v617
    %v619 = vmul.f32 %v608, 1.442695
    %v620 = vpow.pop %v619
    %v621 = vmul.f32 %v609, 1.442695
    %v622 = vpow.pop %v621
    %v623 = vmul.f32 %v610, 1.442695
    %v624 = vpow.pop %v623
    %v625 = vmul.f32 %v611, 1.442695
    %v626 = vpow.pop %v625
    %v627 = vmul.f32 %v612, 1.442695
    %v628 = vpow.pop %v627
    %v629 = vadd.f32 %v614, 1.0
    %v630 = vadd.f32 %v616, 1.0
    %v631 = vadd.f32 %v618, 1.0
    %v632 = vadd.f32 %v620, 1.0
    %v633 = vadd.f32 %v622, 1.0
    %v634 = vadd.f32 %v624, 1.0
    %v635 = vadd.f32 %v626, 1.0
    %v636 = vadd.f32 %v628, 1.0
    %v637 = vrcp.pop %v629
    %v638 = vmul.f32 1.0, %v637
    %v639 = vrcp.pop %v630
    %v640 = vmul.f32 1.0, %v639
    %v641 = vrcp.pop %v631
    %v642 = vmul.f32 1.0, %v641
    %v643 = vrcp.pop %v632
    %v644 = vmul.f32 1.0, %v643
    %v645 = vrcp.pop %v633
    %v646 = vmul.f32 1.0, %v645
    %v647 = vrcp.pop %v634
    %v648 = vmul.f32 1.0, %v647
    %v649 = vrcp.pop %v635
    %v650 = vmul.f32 1.0, %v649
    %v651 = vrcp.pop %v636
    %v652 = vmul.f32 1.0, %v651
    %v653 = vmul.f32 %v597, %v638
    %v654 = vmul.f32 %v598, %v640
    %v655 = vmul.f32 %v599, %v642
    %v656 = vmul.f32 %v600, %v644
    %v657 = vmul.f32 %v601, %v646
    %v658 = vmul.f32 %v602, %v648
    %v659 = vmul.f32 %v603, %v650
    %v660 = vmul.f32 %v604, %v652
    %v661 = vld [vmem:[%s7 + $0x20] sm:$0xff]
    %v662 = vld [vmem:[%s7 + $0x28] sm:$0xff]
    %v663 = vld [vmem:[%s7 + $0x30] sm:$0xff]
    %v664 = vld [vmem:[%s7 + $0x38] sm:$0xff]
    %v665 = vlaneseq
    %v666 = vshrl.u32 %v665, 7
    %v667 = vsub.s32 0, %v666
    %v668 = vrot.slane %v47, %v667
    %vm669 = vcmask 261120
    %v671 = vsel %vm669, %v653, 0
    %v674 = vsel %vm669, %v654, 0
    %v677 = vsel %vm669, %v655, 0
    %v680 = vsel %vm669, %v656, 0
    %v683 = vsel %vm669, %v657, 0
    %v686 = vsel %vm669, %v658, 0
    %v689 = vsel %vm669, %v659, 0
    %v692 = vsel %vm669, %v660, 0
    %694 = vmatprep.subr.mxu0 0.0
    %695 = vmatpush1.msra.mxu0 0.0
    %696 = vmatprep.subr.mxu0 0.0
    %697 = vmatpush1.msra.mxu0 0.0
    %698 = vmatprep.subr.mxu0 0.0
    %699 = vmatpush1.msra.mxu0 0.0
    %700 = vmatprep.subr.mxu0 0.0
    %701 = vmatpush1.msra.mxu0 0.0
    %702 = vmatprep.subr.mxu0 0.0
    %703 = vmatpush1.msra.mxu0 0.0
    %704 = vmatprep.subr.mxu0 0.0
    %705 = vmatpush1.msra.mxu0 0.0
    %706 = vmatprep.subr.mxu0 0.0
    %707 = vmatpush1.msra.mxu0 0.0
    %708 = vmatprep.subr.mxu0 0.0
    %709 = vmatpush1.msra.mxu0 0.0
    %710 = vmatprep.subr.mxu0 0.0
    %711 = vmatpush1.msra.mxu0 0.0
    %712 = vmatprep.subr.mxu0 0.0
    %713 = vmatpush1.msra.mxu0 0.0
    %714 = vmatprep.subr.mxu0 0.0
    %715 = vmatpush1.msra.mxu0 0.0
    %716 = vmatprep.subr.mxu0 0.0
    %717 = vmatpush1.msra.mxu0 0.0
    %718 = vmatprep.subr.mxu0 0.0
    %719 = vmatpush1.msra.mxu0 %v664
    %720 = vmatprep.subr.mxu0 0.0
    %721 = vmatpush1.msra.mxu0 %v663
    %722 = vmatprep.subr.mxu0 0.0
    %723 = vmatpush1.msra.mxu0 %v662
    %724 = vmatprep.subr.mxu0 0.0
    %725 = vmatpush1.msra.mxu0 %v661
    %726 = vmatprep.subr.mxu0 0.0
    %727 = vmatpush2.msra.mxu0 0.0
    %728 = vmatprep.subr.mxu0 0.0
    %729 = vmatpush2.msra.mxu0 0.0
    %730 = vmatprep.subr.mxu0 0.0
    %731 = vmatpush2.msra.mxu0 0.0
    %732 = vmatprep.subr.mxu0 0.0
    %733 = vmatpush2.msra.mxu0 0.0
    %734 = vmatprep.subr.mxu0 0.0
    %735 = vmatpush2.msra.mxu0 0.0
    %736 = vmatprep.subr.mxu0 0.0
    %737 = vmatpush2.msra.mxu0 0.0
    %738 = vmatprep.subr.mxu0 0.0
    %739 = vmatpush2.msra.mxu0 0.0
    %740 = vmatprep.subr.mxu0 0.0
    %741 = vmatpush2.msra.mxu0 0.0
    %742 = vmatprep.subr.mxu0 0.0
    %743 = vmatpush2.msra.mxu0 0.0
    %744 = vmatprep.subr.mxu0 0.0
    %745 = vmatpush2.msra.mxu0 0.0
    %746 = vmatprep.subr.mxu0 0.0
    %747 = vmatpush2.msra.mxu0 0.0
    %748 = vmatprep.subr.mxu0 0.0
    %749 = vmatpush2.msra.mxu0 0.0
    %750 = vmatprep.subr.mxu0 0.0
    %751 = vmatpush2.msra.mxu0 0.0
    %752 = vmatprep.subr.mxu0 0.0
    %753 = vmatpush2.msra.mxu0 0.0
    %754 = vmatprep.subr.mxu0 0.0
    %755 = vmatpush2.msra.mxu0 0.0
    %756 = vmatprep.subr.mxu0 0.0
    %757 = vmatpush2.msra.mxu0 0.0
    %758 = vmatprep.mubr.f32.mxu0 0.0
    %759 = vmatmul.mubr.f32.gmra.mxu0 %v671
    %v760 = vpop.f32.mrf.mxu0
    %v761 = vadd.f32 %v668, %v760
    %v762 = vpop.f32.mrf.mxu0
    %763 = vmatprep.mubr.f32.mxu0 0.0
    %764 = vmatmul.mubr.f32.gmra.mxu0 %v674
    %v765 = vpop.f32.mrf.mxu0
    %v766 = vadd.f32 %v668, %v765
    %v767 = vpop.f32.mrf.mxu0
    %768 = vmatprep.mubr.f32.mxu0 0.0
    %769 = vmatmul.mubr.f32.gmra.mxu0 %v677
    %v770 = vpop.f32.mrf.mxu0
    %v771 = vadd.f32 %v668, %v770
    %v772 = vpop.f32.mrf.mxu0
    %773 = vmatprep.mubr.f32.mxu0 0.0
    %774 = vmatmul.mubr.f32.gmra.mxu0 %v680
    %v775 = vpop.f32.mrf.mxu0
    %v776 = vadd.f32 %v668, %v775
    %v777 = vpop.f32.mrf.mxu0
    %778 = vmatprep.mubr.f32.mxu0 0.0
    %779 = vmatmul.mubr.f32.gmra.mxu0 %v683
    %v780 = vpop.f32.mrf.mxu0
    %v781 = vadd.f32 %v668, %v780
    %v782 = vpop.f32.mrf.mxu0
    %783 = vmatprep.mubr.f32.mxu0 0.0
    %784 = vmatmul.mubr.f32.gmra.mxu0 %v686
    %v785 = vpop.f32.mrf.mxu0
    %v786 = vadd.f32 %v668, %v785
    %v787 = vpop.f32.mrf.mxu0
    %788 = vmatprep.mubr.f32.mxu0 0.0
    %789 = vmatmul.mubr.f32.gmra.mxu0 %v689
    %v790 = vpop.f32.mrf.mxu0
    %v791 = vadd.f32 %v668, %v790
    %v792 = vpop.f32.mrf.mxu0
    %793 = vmatprep.mubr.f32.mxu0 0.0
    %794 = vmatmul.mubr.f32.gmra.mxu0 %v692
    %v795 = vpop.f32.mrf.mxu0
    %v796 = vadd.f32 %v668, %v795
    %v797 = vpop.f32.mrf.mxu0
    %798 = vdwg.mxu0
    %v799 = vsub.f32 0.0, %v761
    %v800 = vsub.f32 0.0, %v766
    %v801 = vsub.f32 0.0, %v771
    %v802 = vsub.f32 0.0, %v776
    %v803 = vsub.f32 0.0, %v781
    %v804 = vsub.f32 0.0, %v786
    %v805 = vsub.f32 0.0, %v791
    %v806 = vsub.f32 0.0, %v796
    %v807 = vmul.f32 %v799, 1.442695
    %v808 = vpow.pop %v807
    %v809 = vmul.f32 %v800, 1.442695
    %v810 = vpow.pop %v809
    %v811 = vmul.f32 %v801, 1.442695
    %v812 = vpow.pop %v811
    %v813 = vmul.f32 %v802, 1.442695
    %v814 = vpow.pop %v813
    %v815 = vmul.f32 %v803, 1.442695
    %v816 = vpow.pop %v815
    %v817 = vmul.f32 %v804, 1.442695
    %v818 = vpow.pop %v817
    %v819 = vmul.f32 %v805, 1.442695
    %v820 = vpow.pop %v819
    %v821 = vmul.f32 %v806, 1.442695
    %v822 = vpow.pop %v821
    %v823 = vadd.f32 %v808, 1.0
    %v824 = vadd.f32 %v810, 1.0
    %v825 = vadd.f32 %v812, 1.0
    %v826 = vadd.f32 %v814, 1.0
    %v827 = vadd.f32 %v816, 1.0
    %v828 = vadd.f32 %v818, 1.0
    %v829 = vadd.f32 %v820, 1.0
    %v830 = vadd.f32 %v822, 1.0
    %v831 = vrcp.pop %v823
    %v832 = vmul.f32 1.0, %v831
    %v833 = vrcp.pop %v824
    %v834 = vmul.f32 1.0, %v833
    %v835 = vrcp.pop %v825
    %v836 = vmul.f32 1.0, %v835
    %v837 = vrcp.pop %v826
    %v838 = vmul.f32 1.0, %v837
    %v839 = vrcp.pop %v827
    %v840 = vmul.f32 1.0, %v839
    %v841 = vrcp.pop %v828
    %v842 = vmul.f32 1.0, %v841
    %v843 = vrcp.pop %v829
    %v844 = vmul.f32 1.0, %v843
    %v845 = vrcp.pop %v830
    %v846 = vmul.f32 1.0, %v845
    %v847 = vmul.f32 %v761, %v832
    %v848 = vmul.f32 %v766, %v834
    %v849 = vmul.f32 %v771, %v836
    %v850 = vmul.f32 %v776, %v838
    %v851 = vmul.f32 %v781, %v840
    %v852 = vmul.f32 %v786, %v842
    %v853 = vmul.f32 %v791, %v844
    %v854 = vmul.f32 %v796, %v846
    %v855 = vld [vmem:[%s7 + $0x40] sm:$0xff]
    %v856 = vld [vmem:[%s7 + $0x48] sm:$0xff]
    %v857 = vld [vmem:[%s7 + $0x50] sm:$0xff]
    %v858 = vld [vmem:[%s7 + $0x58] sm:$0xff]
    %v859 = vlaneseq
    %v860 = vshrl.u32 %v859, 7
    %v861 = vsub.s32 0, %v860
    %v862 = vrot.slane %v48, %v861
    %v864 = vsel %vm669, %v847, 0
    %v867 = vsel %vm669, %v848, 0
    %v870 = vsel %vm669, %v849, 0
    %v873 = vsel %vm669, %v850, 0
    %v876 = vsel %vm669, %v851, 0
    %v879 = vsel %vm669, %v852, 0
    %v882 = vsel %vm669, %v853, 0
    %v885 = vsel %vm669, %v854, 0
    %887 = vmatprep.subr.mxu0 0.0
    %888 = vmatpush1.msra.mxu0 0.0
    %889 = vmatprep.subr.mxu0 0.0
    %890 = vmatpush1.msra.mxu0 0.0
    %891 = vmatprep.subr.mxu0 0.0
    %892 = vmatpush1.msra.mxu0 0.0
    %893 = vmatprep.subr.mxu0 0.0
    %894 = vmatpush1.msra.mxu0 0.0
    %895 = vmatprep.subr.mxu0 0.0
    %896 = vmatpush1.msra.mxu0 0.0
    %897 = vmatprep.subr.mxu0 0.0
    %898 = vmatpush1.msra.mxu0 0.0
    %899 = vmatprep.subr.mxu0 0.0
    %900 = vmatpush1.msra.mxu0 0.0
    %901 = vmatprep.subr.mxu0 0.0
    %902 = vmatpush1.msra.mxu0 0.0
    %903 = vmatprep.subr.mxu0 0.0
    %904 = vmatpush1.msra.mxu0 0.0
    %905 = vmatprep.subr.mxu0 0.0
    %906 = vmatpush1.msra.mxu0 0.0
    %907 = vmatprep.subr.mxu0 0.0
    %908 = vmatpush1.msra.mxu0 0.0
    %909 = vmatprep.subr.mxu0 0.0
    %910 = vmatpush1.msra.mxu0 0.0
    %911 = vmatprep.subr.mxu0 0.0
    %912 = vmatpush1.msra.mxu0 %v858
    %913 = vmatprep.subr.mxu0 0.0
    %914 = vmatpush1.msra.mxu0 %v857
    %915 = vmatprep.subr.mxu0 0.0
    %916 = vmatpush1.msra.mxu0 %v856
    %917 = vmatprep.subr.mxu0 0.0
    %918 = vmatpush1.msra.mxu0 %v855
    %919 = vmatprep.subr.mxu0 0.0
    %920 = vmatpush2.msra.mxu0 0.0
    %921 = vmatprep.subr.mxu0 0.0
    %922 = vmatpush2.msra.mxu0 0.0
    %923 = vmatprep.subr.mxu0 0.0
    %924 = vmatpush2.msra.mxu0 0.0
    %925 = vmatprep.subr.mxu0 0.0
    %926 = vmatpush2.msra.mxu0 0.0
    %927 = vmatprep.subr.mxu0 0.0
    %928 = vmatpush2.msra.mxu0 0.0
    %929 = vmatprep.subr.mxu0 0.0
    %930 = vmatpush2.msra.mxu0 0.0
    %931 = vmatprep.subr.mxu0 0.0
    %932 = vmatpush2.msra.mxu0 0.0
    %933 = vmatprep.subr.mxu0 0.0
    %934 = vmatpush2.msra.mxu0 0.0
    %935 = vmatprep.subr.mxu0 0.0
    %936 = vmatpush2.msra.mxu0 0.0
    %937 = vmatprep.subr.mxu0 0.0
    %938 = vmatpush2.msra.mxu0 0.0
    %939 = vmatprep.subr.mxu0 0.0
    %940 = vmatpush2.msra.mxu0 0.0
    %941 = vmatprep.subr.mxu0 0.0
    %942 = vmatpush2.msra.mxu0 0.0
    %943 = vmatprep.subr.mxu0 0.0
    %944 = vmatpush2.msra.mxu0 0.0
    %945 = vmatprep.subr.mxu0 0.0
    %946 = vmatpush2.msra.mxu0 0.0
    %947 = vmatprep.subr.mxu0 0.0
    %948 = vmatpush2.msra.mxu0 0.0
    %949 = vmatprep.subr.mxu0 0.0
    %950 = vmatpush2.msra.mxu0 0.0
    %951 = vmatprep.mubr.f32.mxu0 0.0
    %952 = vmatmul.mubr.f32.gmra.mxu0 %v864
    %v953 = vpop.f32.mrf.mxu0
    %v954 = vadd.f32 %v862, %v953
    %v955 = vpop.f32.mrf.mxu0
    %956 = vmatprep.mubr.f32.mxu0 0.0
    %957 = vmatmul.mubr.f32.gmra.mxu0 %v867
    %v958 = vpop.f32.mrf.mxu0
    %v959 = vadd.f32 %v862, %v958
    %v960 = vpop.f32.mrf.mxu0
    %961 = vmatprep.mubr.f32.mxu0 0.0
    %962 = vmatmul.mubr.f32.gmra.mxu0 %v870
    %v963 = vpop.f32.mrf.mxu0
    %v964 = vadd.f32 %v862, %v963
    %v965 = vpop.f32.mrf.mxu0
    %966 = vmatprep.mubr.f32.mxu0 0.0
    %967 = vmatmul.mubr.f32.gmra.mxu0 %v873
    %v968 = vpop.f32.mrf.mxu0
    %v969 = vadd.f32 %v862, %v968
    %v970 = vpop.f32.mrf.mxu0
    %971 = vmatprep.mubr.f32.mxu0 0.0
    %972 = vmatmul.mubr.f32.gmra.mxu0 %v876
    %v973 = vpop.f32.mrf.mxu0
    %v974 = vadd.f32 %v862, %v973
    %v975 = vpop.f32.mrf.mxu0
    %976 = vmatprep.mubr.f32.mxu0 0.0
    %977 = vmatmul.mubr.f32.gmra.mxu0 %v879
    %v978 = vpop.f32.mrf.mxu0
    %v979 = vadd.f32 %v862, %v978
    %v980 = vpop.f32.mrf.mxu0
    %981 = vmatprep.mubr.f32.mxu0 0.0
    %982 = vmatmul.mubr.f32.gmra.mxu0 %v882
    %v983 = vpop.f32.mrf.mxu0
    %v984 = vadd.f32 %v862, %v983
    %v985 = vpop.f32.mrf.mxu0
    %986 = vmatprep.mubr.f32.mxu0 0.0
    %987 = vmatmul.mubr.f32.gmra.mxu0 %v885
    %v988 = vpop.f32.mrf.mxu0
    %v989 = vadd.f32 %v862, %v988
    %v990 = vpop.f32.mrf.mxu0
    %991 = vdwg.mxu0
    %v992 = vsub.f32 0.0, %v954
    %v993 = vsub.f32 0.0, %v959
    %v994 = vsub.f32 0.0, %v964
    %v995 = vsub.f32 0.0, %v969
    %v996 = vsub.f32 0.0, %v974
    %v997 = vsub.f32 0.0, %v979
    %v998 = vsub.f32 0.0, %v984
    %v999 = vsub.f32 0.0, %v989
    %v1000 = vmul.f32 %v992, 1.442695
    %v1001 = vpow.pop %v1000
    %v1002 = vmul.f32 %v993, 1.442695
    %v1003 = vpow.pop %v1002
    %v1004 = vmul.f32 %v994, 1.442695
    %v1005 = vpow.pop %v1004
    %v1006 = vmul.f32 %v995, 1.442695
    %v1007 = vpow.pop %v1006
    %v1008 = vmul.f32 %v996, 1.442695
    %v1009 = vpow.pop %v1008
    %v1010 = vmul.f32 %v997, 1.442695
    %v1011 = vpow.pop %v1010
    %v1012 = vmul.f32 %v998, 1.442695
    %v1013 = vpow.pop %v1012
    %v1014 = vmul.f32 %v999, 1.442695
    %v1015 = vpow.pop %v1014
    %v1016 = vadd.f32 %v1001, 1.0
    %v1017 = vadd.f32 %v1003, 1.0
    %v1018 = vadd.f32 %v1005, 1.0
    %v1019 = vadd.f32 %v1007, 1.0
    %v1020 = vadd.f32 %v1009, 1.0
    %v1021 = vadd.f32 %v1011, 1.0
    %v1022 = vadd.f32 %v1013, 1.0
    %v1023 = vadd.f32 %v1015, 1.0
    %v1024 = vrcp.pop %v1016
    %v1025 = vmul.f32 1.0, %v1024
    %v1026 = vrcp.pop %v1017
    %v1027 = vmul.f32 1.0, %v1026
    %v1028 = vrcp.pop %v1018
    %v1029 = vmul.f32 1.0, %v1028
    %v1030 = vrcp.pop %v1019
    %v1031 = vmul.f32 1.0, %v1030
    %v1032 = vrcp.pop %v1020
    %v1033 = vmul.f32 1.0, %v1032
    %v1034 = vrcp.pop %v1021
    %v1035 = vmul.f32 1.0, %v1034
    %v1036 = vrcp.pop %v1022
    %v1037 = vmul.f32 1.0, %v1036
    %v1038 = vrcp.pop %v1023
    %v1039 = vmul.f32 1.0, %v1038
    %v1040 = vmul.f32 %v954, %v1025
    %v1041 = vmul.f32 %v959, %v1027
    %v1042 = vmul.f32 %v964, %v1029
    %v1043 = vmul.f32 %v969, %v1031
    %v1044 = vmul.f32 %v974, %v1033
    %v1045 = vmul.f32 %v979, %v1035
    %v1046 = vmul.f32 %v984, %v1037
    %v1047 = vmul.f32 %v989, %v1039
    %v1048 = vlaneseq
    %v1049 = vshrl.u32 %v1048, 7
    %v1050 = vsub.s32 0, %v1049
    %v1051 = vrot.slane %v49, %v1050
    %v1052 = vmul.f32 %v1040, %v1051
    %v1053 = vmul.f32 %v1041, %v1051
    %v1054 = vmul.f32 %v1042, %v1051
    %v1055 = vmul.f32 %v1043, %v1051
    %v1056 = vmul.f32 %v1044, %v1051
    %v1057 = vmul.f32 %v1045, %v1051
    %v1058 = vmul.f32 %v1046, %v1051
    %v1059 = vmul.f32 %v1047, %v1051
    %v1060 = vsel %vm669, %v1052, 0.0
    %1061 = vadd.xlane.f32.xlu0 %v1060
    %v1062 = vpop.xlane.xlu0 %1061
    %v1063 = vsel %vm669, %v1053, 0.0
    %1064 = vadd.xlane.f32.xlu0 %v1063
    %v1065 = vpop.xlane.xlu0 %1064
    %v1066 = vsel %vm669, %v1054, 0.0
    %1067 = vadd.xlane.f32.xlu0 %v1066
    %v1068 = vpop.xlane.xlu0 %1067
    %v1069 = vsel %vm669, %v1055, 0.0
    %1070 = vadd.xlane.f32.xlu0 %v1069
    %v1071 = vpop.xlane.xlu0 %1070
    %v1072 = vsel %vm669, %v1056, 0.0
    %1073 = vadd.xlane.f32.xlu0 %v1072
    %v1074 = vpop.xlane.xlu0 %1073
    %v1075 = vsel %vm669, %v1057, 0.0
    %1076 = vadd.xlane.f32.xlu0 %v1075
    %v1077 = vpop.xlane.xlu0 %1076
    %v1078 = vsel %vm669, %v1058, 0.0
    %1079 = vadd.xlane.f32.xlu0 %v1078
    %v1080 = vpop.xlane.xlu0 %1079
    %v1081 = vsel %vm669, %v1059, 0.0
    %1082 = vadd.xlane.f32.xlu0 %v1081
    %v1083 = vpop.xlane.xlu0 %1082
    %v1084 = vmul.f32 %v1062, %v224
    %v1085 = vmul.f32 %v1065, %v225
    %v1086 = vmul.f32 %v1068, %v226
    %v1087 = vmul.f32 %v1071, %v227
    %v1088 = vmul.f32 %v1074, %v228
    %v1089 = vmul.f32 %v1077, %v229
    %v1090 = vmul.f32 %v1080, %v230
    %v1091 = vmul.f32 %v1083, %v231
    %1100 = vrot.lane.b32.xlu0 %v1084, 32
    %v1101 = vpop.permute.xlu0 %1100
    %1102 = vrot.lane.b32.xlu0 %v1085, 32
    %v1103 = vpop.permute.xlu0 %1102
    %1104 = vrot.lane.b32.xlu0 %v1086, 32
    %v1105 = vpop.permute.xlu0 %1104
    %1106 = vrot.lane.b32.xlu0 %v1087, 32
    %v1107 = vpop.permute.xlu0 %1106
    %1108 = vrot.lane.b32.xlu0 %v1088, 32
    %v1109 = vpop.permute.xlu0 %1108
    %1110 = vrot.lane.b32.xlu0 %v1089, 32
    %v1111 = vpop.permute.xlu0 %1110
    %1112 = vrot.lane.b32.xlu0 %v1090, 32
    %v1113 = vpop.permute.xlu0 %1112
    %1114 = vrot.lane.b32.xlu0 %v1091, 32
    %v1115 = vpop.permute.xlu0 %1114
    %v1124 = vsel %vm669, %v847, %v1101
    %v1125 = vsel %vm669, %v848, %v1103
    %v1126 = vsel %vm669, %v849, %v1105
    %v1127 = vsel %vm669, %v850, %v1107
    %v1128 = vsel %vm669, %v851, %v1109
    %v1129 = vsel %vm669, %v852, %v1111
    %v1130 = vsel %vm669, %v853, %v1113
    %v1131 = vsel %vm669, %v854, %v1115
    %vm1132 = vcmask 523264
    %v1134 = vsel %vm1132, %v43, 0
    %1136 = vmatprep.subr.mxu0 0.0
    %1137 = vmatpush1.msra.mxu0 0.0
    %1138 = vmatprep.subr.mxu0 0.0
    %1139 = vmatpush1.msra.mxu0 0.0
    %1140 = vmatprep.subr.mxu0 0.0
    %1141 = vmatpush1.msra.mxu0 0.0
    %1142 = vmatprep.subr.mxu0 0.0
    %1143 = vmatpush1.msra.mxu0 0.0
    %1144 = vmatprep.subr.mxu0 0.0
    %1145 = vmatpush1.msra.mxu0 0.0
    %1146 = vmatprep.subr.mxu0 0.0
    %1147 = vmatpush1.msra.mxu0 0.0
    %1148 = vmatprep.subr.mxu0 0.0
    %1149 = vmatpush1.msra.mxu0 0.0
    %1150 = vmatprep.subr.mxu0 0.0
    %1151 = vmatpush1.msra.mxu0 0.0
    %1152 = vmatprep.subr.mxu0 0.0
    %1153 = vmatpush1.msra.mxu0 %v1131
    %1154 = vmatprep.subr.mxu0 0.0
    %1155 = vmatpush1.msra.mxu0 %v1130
    %1156 = vmatprep.subr.mxu0 0.0
    %1157 = vmatpush1.msra.mxu0 %v1129
    %1158 = vmatprep.subr.mxu0 0.0
    %1159 = vmatpush1.msra.mxu0 %v1128
    %1160 = vmatprep.subr.mxu0 0.0
    %1161 = vmatpush1.msra.mxu0 %v1127
    %1162 = vmatprep.subr.mxu0 0.0
    %1163 = vmatpush1.msra.mxu0 %v1126
    %1164 = vmatprep.subr.mxu0 0.0
    %1165 = vmatpush1.msra.mxu0 %v1125
    %1166 = vmatprep.subr.mxu0 0.0
    %1167 = vmatpush1.msra.mxu0 %v1124
    %1168 = vmatprep.subr.mxu0 0.0
    %1169 = vmatpush2.msra.mxu0 0.0
    %1170 = vmatprep.subr.mxu0 0.0
    %1171 = vmatpush2.msra.mxu0 0.0
    %1172 = vmatprep.subr.mxu0 0.0
    %1173 = vmatpush2.msra.mxu0 0.0
    %1174 = vmatprep.subr.mxu0 0.0
    %1175 = vmatpush2.msra.mxu0 0.0
    %1176 = vmatprep.subr.mxu0 0.0
    %1177 = vmatpush2.msra.mxu0 0.0
    %1178 = vmatprep.subr.mxu0 0.0
    %1179 = vmatpush2.msra.mxu0 0.0
    %1180 = vmatprep.subr.mxu0 0.0
    %1181 = vmatpush2.msra.mxu0 0.0
    %1182 = vmatprep.subr.mxu0 0.0
    %1183 = vmatpush2.msra.mxu0 0.0
    %1184 = vmatprep.subr.mxu0 0.0
    %1185 = vmatpush2.msra.mxu0 0.0
    %1186 = vmatprep.subr.mxu0 0.0
    %1187 = vmatpush2.msra.mxu0 0.0
    %1188 = vmatprep.subr.mxu0 0.0
    %1189 = vmatpush2.msra.mxu0 0.0
    %1190 = vmatprep.subr.mxu0 0.0
    %1191 = vmatpush2.msra.mxu0 0.0
    %1192 = vmatprep.subr.mxu0 0.0
    %1193 = vmatpush2.msra.mxu0 0.0
    %1194 = vmatprep.subr.mxu0 0.0
    %1195 = vmatpush2.msra.mxu0 0.0
    %1196 = vmatprep.subr.mxu0 0.0
    %1197 = vmatpush2.msra.mxu0 0.0
    %1198 = vmatprep.subr.mxu0 0.0
    %1199 = vmatpush2.msra.mxu0 0.0
    %1200 = vmatprep.mubr.f32.mxu0 0.0
    %1201 = vmatmul.mubr.f32.gmra.mxu0 %v1134
    %v1202 = vpop.f32.mrf.mxu0
    %v1203 = vadd.f32 0.0, %v1202
    %v1204 = vpop.f32.mrf.mxu0
    %1205 = vdwg.mxu0
    %1207 = vset.pattern.permute.xlu0 0
    %1208 = vperm.xlu0 %1207, %v44
    %v1209 = vpop.permute.xlu0 %1208
    %v1211 = vmul.f32 %v1203, %v1209
    %v1213 = vlaneseq
    %v1214 = vshrl.u32 %v1213, 7
    %v1215 = vsub.s32 0, %v1214
    %v1216 = vrot.slane %v42, %v1215
    %1218 = vrot.lane.b32.xlu0 %v1203, 16
    %v1219 = vpop.permute.xlu0 %1218
    %1221 = vrot.lane.b32.xlu0 %v1216, 48
    %v1222 = vpop.permute.xlu0 %1221
    %v1224 = vsel %vm234, %v40, %v1219
    %vm1225 = vcmask 392192
    %v1226 = vsel %vm1225, %v1224, %v1222
    %v1227 = vld [vmem:[%s7 + $0x60] sm:$0xff]
    %v1228 = vld [vmem:[%s7 + $0x68] sm:$0xff]
    %v1229 = vld [vmem:[%s7 + $0x70] sm:$0xff]
    %v1230 = vld [vmem:[%s7 + $0x78] sm:$0xff]
    %v1231 = vld [vmem:[%s7 + $0x80] sm:$0xff]
    %v1232 = vld [vmem:[%s7 + $0x88] sm:$0xff]
    %v1233 = vld [vmem:[%s7 + $0x90] sm:$0xff]
    %v1234 = vlaneseq
    %v1235 = vshrl.u32 %v1234, 7
    %v1236 = vsub.s32 0, %v1235
    %v1237 = vrot.slane %v50, %v1236
    %vm1238 = vcmask 457728
    %v1240 = vsel %vm1238, %v1226, 0
    %1242 = vmatprep.subr.mxu0 0.0
    %1243 = vmatpush1.msra.mxu0 0.0
    %1244 = vmatprep.subr.mxu0 0.0
    %1245 = vmatpush1.msra.mxu0 0.0
    %1246 = vmatprep.subr.mxu0 0.0
    %1247 = vmatpush1.msra.mxu0 0.0
    %1248 = vmatprep.subr.mxu0 0.0
    %1249 = vmatpush1.msra.mxu0 0.0
    %1250 = vmatprep.subr.mxu0 0.0
    %1251 = vmatpush1.msra.mxu0 0.0
    %1252 = vmatprep.subr.mxu0 0.0
    %1253 = vmatpush1.msra.mxu0 0.0
    %1254 = vmatprep.subr.mxu0 0.0
    %1255 = vmatpush1.msra.mxu0 0.0
    %1256 = vmatprep.subr.mxu0 0.0
    %1257 = vmatpush1.msra.mxu0 0.0
    %1258 = vmatprep.subr.mxu0 0.0
    %1259 = vmatpush1.msra.mxu0 0.0
    %1260 = vmatprep.subr.mxu0 0.0
    %1261 = vmatpush1.msra.mxu0 %v1233
    %1262 = vmatprep.subr.mxu0 0.0
    %1263 = vmatpush1.msra.mxu0 %v1232
    %1264 = vmatprep.subr.mxu0 0.0
    %1265 = vmatpush1.msra.mxu0 %v1231
    %1266 = vmatprep.subr.mxu0 0.0
    %1267 = vmatpush1.msra.mxu0 %v1230
    %1268 = vmatprep.subr.mxu0 0.0
    %1269 = vmatpush1.msra.mxu0 %v1229
    %1270 = vmatprep.subr.mxu0 0.0
    %1271 = vmatpush1.msra.mxu0 %v1228
    %1272 = vmatprep.subr.mxu0 0.0
    %1273 = vmatpush1.msra.mxu0 %v1227
    %1274 = vmatprep.subr.mxu0 0.0
    %1275 = vmatpush2.msra.mxu0 0.0
    %1276 = vmatprep.subr.mxu0 0.0
    %1277 = vmatpush2.msra.mxu0 0.0
    %1278 = vmatprep.subr.mxu0 0.0
    %1279 = vmatpush2.msra.mxu0 0.0
    %1280 = vmatprep.subr.mxu0 0.0
    %1281 = vmatpush2.msra.mxu0 0.0
    %1282 = vmatprep.subr.mxu0 0.0
    %1283 = vmatpush2.msra.mxu0 0.0
    %1284 = vmatprep.subr.mxu0 0.0
    %1285 = vmatpush2.msra.mxu0 0.0
    %1286 = vmatprep.subr.mxu0 0.0
    %1287 = vmatpush2.msra.mxu0 0.0
    %1288 = vmatprep.subr.mxu0 0.0
    %1289 = vmatpush2.msra.mxu0 0.0
    %1290 = vmatprep.subr.mxu0 0.0
    %1291 = vmatpush2.msra.mxu0 0.0
    %1292 = vmatprep.subr.mxu0 0.0
    %1293 = vmatpush2.msra.mxu0 0.0
    %1294 = vmatprep.subr.mxu0 0.0
    %1295 = vmatpush2.msra.mxu0 0.0
    %1296 = vmatprep.subr.mxu0 0.0
    %1297 = vmatpush2.msra.mxu0 0.0
    %1298 = vmatprep.subr.mxu0 0.0
    %1299 = vmatpush2.msra.mxu0 0.0
    %1300 = vmatprep.subr.mxu0 0.0
    %1301 = vmatpush2.msra.mxu0 0.0
    %1302 = vmatprep.subr.mxu0 0.0
    %1303 = vmatpush2.msra.mxu0 0.0
    %1304 = vmatprep.subr.mxu0 0.0
    %1305 = vmatpush2.msra.mxu0 0.0
    %1306 = vmatprep.mubr.f32.mxu0 0.0
    %1307 = vmatmul.mubr.f32.gmra.mxu0 %v1240
    %v1308 = vpop.f32.mrf.mxu0
    %v1309 = vadd.f32 %v1237, %v1308
    %v1310 = vpop.f32.mrf.mxu0
    %1311 = vdwg.mxu0
    %v1312 = vsub.f32 0.0, %v1309
    %v1313 = vmul.f32 %v1312, 1.442695
    %v1314 = vpow.pop %v1313
    %v1315 = vadd.f32 %v1314, 1.0
    %v1316 = vrcp.pop %v1315
    %v1317 = vmul.f32 1.0, %v1316
    %v1318 = vmul.f32 %v1309, %v1317
    %v1319 = vld [vmem:[%s7 + $0xa0] sm:$0xff]
    %v1320 = vld [vmem:[%s7 + $0xa8] sm:$0xff]
    %v1321 = vld [vmem:[%s7 + $0xb0] sm:$0xff]
    %v1322 = vld [vmem:[%s7 + $0xb8] sm:$0xff]
    %v1323 = vlaneseq
    %v1324 = vshrl.u32 %v1323, 7
    %v1325 = vsub.s32 0, %v1324
    %v1326 = vrot.slane %v51, %v1325
    %v1328 = vsel %vm669, %v1318, 0
    %1330 = vmatprep.subr.mxu0 0.0
    %1331 = vmatpush1.msra.mxu0 0.0
    %1332 = vmatprep.subr.mxu0 0.0
    %1333 = vmatpush1.msra.mxu0 0.0
    %1334 = vmatprep.subr.mxu0 0.0
    %1335 = vmatpush1.msra.mxu0 0.0
    %1336 = vmatprep.subr.mxu0 0.0
    %1337 = vmatpush1.msra.mxu0 0.0
    %1338 = vmatprep.subr.mxu0 0.0
    %1339 = vmatpush1.msra.mxu0 0.0
    %1340 = vmatprep.subr.mxu0 0.0
    %1341 = vmatpush1.msra.mxu0 0.0
    %1342 = vmatprep.subr.mxu0 0.0
    %1343 = vmatpush1.msra.mxu0 0.0
    %1344 = vmatprep.subr.mxu0 0.0
    %1345 = vmatpush1.msra.mxu0 0.0
    %1346 = vmatprep.subr.mxu0 0.0
    %1347 = vmatpush1.msra.mxu0 0.0
    %1348 = vmatprep.subr.mxu0 0.0
    %1349 = vmatpush1.msra.mxu0 0.0
    %1350 = vmatprep.subr.mxu0 0.0
    %1351 = vmatpush1.msra.mxu0 0.0
    %1352 = vmatprep.subr.mxu0 0.0
    %1353 = vmatpush1.msra.mxu0 0.0
    %1354 = vmatprep.subr.mxu0 0.0
    %1355 = vmatpush1.msra.mxu0 %v1322
    %1356 = vmatprep.subr.mxu0 0.0
    %1357 = vmatpush1.msra.mxu0 %v1321
    %1358 = vmatprep.subr.mxu0 0.0
    %1359 = vmatpush1.msra.mxu0 %v1320
    %1360 = vmatprep.subr.mxu0 0.0
    %1361 = vmatpush1.msra.mxu0 %v1319
    %1362 = vmatprep.subr.mxu0 0.0
    %1363 = vmatpush2.msra.mxu0 0.0
    %1364 = vmatprep.subr.mxu0 0.0
    %1365 = vmatpush2.msra.mxu0 0.0
    %1366 = vmatprep.subr.mxu0 0.0
    %1367 = vmatpush2.msra.mxu0 0.0
    %1368 = vmatprep.subr.mxu0 0.0
    %1369 = vmatpush2.msra.mxu0 0.0
    %1370 = vmatprep.subr.mxu0 0.0
    %1371 = vmatpush2.msra.mxu0 0.0
    %1372 = vmatprep.subr.mxu0 0.0
    %1373 = vmatpush2.msra.mxu0 0.0
    %1374 = vmatprep.subr.mxu0 0.0
    %1375 = vmatpush2.msra.mxu0 0.0
    %1376 = vmatprep.subr.mxu0 0.0
    %1377 = vmatpush2.msra.mxu0 0.0
    %1378 = vmatprep.subr.mxu0 0.0
    %1379 = vmatpush2.msra.mxu0 0.0
    %1380 = vmatprep.subr.mxu0 0.0
    %1381 = vmatpush2.msra.mxu0 0.0
    %1382 = vmatprep.subr.mxu0 0.0
    %1383 = vmatpush2.msra.mxu0 0.0
    %1384 = vmatprep.subr.mxu0 0.0
    %1385 = vmatpush2.msra.mxu0 0.0
    %1386 = vmatprep.subr.mxu0 0.0
    %1387 = vmatpush2.msra.mxu0 0.0
    %1388 = vmatprep.subr.mxu0 0.0
    %1389 = vmatpush2.msra.mxu0 0.0
    %1390 = vmatprep.subr.mxu0 0.0
    %1391 = vmatpush2.msra.mxu0 0.0
    %1392 = vmatprep.subr.mxu0 0.0
    %1393 = vmatpush2.msra.mxu0 0.0
    %1394 = vmatprep.mubr.f32.mxu0 0.0
    %1395 = vmatmul.mubr.f32.gmra.mxu0 %v1328
    %v1396 = vpop.f32.mrf.mxu0
    %v1397 = vadd.f32 %v1326, %v1396
    %v1398 = vpop.f32.mrf.mxu0
    %1399 = vdwg.mxu0
    %v1400 = vsel %vm669, %v1397, 0.0
    %v1401 = vrot.slane %v1400, 4
    %v1402 = vadd.f32 %v1400, %v1401
    %v1403 = vrot.slane %v1402, 2
    %v1404 = vadd.f32 %v1402, %v1403
    %v1405 = vrot.slane %v1404, 1
    %v1406 = vadd.f32 %v1404, %v1405
    %v1407 = vmul.f32 %v1406, 0.125
    %1409 = vrot.lane.b32.xlu0 %v1407, 8
    %v1410 = vpop.permute.xlu0 %1409
    %vm1412 = vcmask 64512
    %v1413 = vsel %vm1412, %v42, %v1410
    %v1414 = vld [vmem:[%s7 + $0xc0] sm:$0xff]
    %v1415 = vld [vmem:[%s7 + $0xc8] sm:$0xff]
    %v1416 = vld [vmem:[%s7 + $0xd0] sm:$0xff]
    %v1417 = vld [vmem:[%s7 + $0xd8] sm:$0xff]
    %v1418 = vld [vmem:[%s7 + $0xe0] sm:$0xff]
    %vm1419 = vcmask 326656
    %v1421 = vsel %vm1419, %v1413, 0
    %1423 = vmatprep.subr.mxu0 0.0
    %1424 = vmatpush1.msra.mxu0 0.0
    %1425 = vmatprep.subr.mxu0 0.0
    %1426 = vmatpush1.msra.mxu0 0.0
    %1427 = vmatprep.subr.mxu0 0.0
    %1428 = vmatpush1.msra.mxu0 0.0
    %1429 = vmatprep.subr.mxu0 0.0
    %1430 = vmatpush1.msra.mxu0 0.0
    %1431 = vmatprep.subr.mxu0 0.0
    %1432 = vmatpush1.msra.mxu0 0.0
    %1433 = vmatprep.subr.mxu0 0.0
    %1434 = vmatpush1.msra.mxu0 0.0
    %1435 = vmatprep.subr.mxu0 0.0
    %1436 = vmatpush1.msra.mxu0 0.0
    %1437 = vmatprep.subr.mxu0 0.0
    %1438 = vmatpush1.msra.mxu0 0.0
    %1439 = vmatprep.subr.mxu0 0.0
    %1440 = vmatpush1.msra.mxu0 0.0
    %1441 = vmatprep.subr.mxu0 0.0
    %1442 = vmatpush1.msra.mxu0 0.0
    %1443 = vmatprep.subr.mxu0 0.0
    %1444 = vmatpush1.msra.mxu0 0.0
    %1445 = vmatprep.subr.mxu0 0.0
    %1446 = vmatpush1.msra.mxu0 %v1418
    %1447 = vmatprep.subr.mxu0 0.0
    %1448 = vmatpush1.msra.mxu0 %v1417
    %1449 = vmatprep.subr.mxu0 0.0
    %1450 = vmatpush1.msra.mxu0 %v1416
    %1451 = vmatprep.subr.mxu0 0.0
    %1452 = vmatpush1.msra.mxu0 %v1415
    %1453 = vmatprep.subr.mxu0 0.0
    %1454 = vmatpush1.msra.mxu0 %v1414
    %1455 = vmatprep.subr.mxu0 0.0
    %1456 = vmatpush2.msra.mxu0 0.0
    %1457 = vmatprep.subr.mxu0 0.0
    %1458 = vmatpush2.msra.mxu0 0.0
    %1459 = vmatprep.subr.mxu0 0.0
    %1460 = vmatpush2.msra.mxu0 0.0
    %1461 = vmatprep.subr.mxu0 0.0
    %1462 = vmatpush2.msra.mxu0 0.0
    %1463 = vmatprep.subr.mxu0 0.0
    %1464 = vmatpush2.msra.mxu0 0.0
    %1465 = vmatprep.subr.mxu0 0.0
    %1466 = vmatpush2.msra.mxu0 0.0
    %1467 = vmatprep.subr.mxu0 0.0
    %1468 = vmatpush2.msra.mxu0 0.0
    %1469 = vmatprep.subr.mxu0 0.0
    %1470 = vmatpush2.msra.mxu0 0.0
    %1471 = vmatprep.subr.mxu0 0.0
    %1472 = vmatpush2.msra.mxu0 0.0
    %1473 = vmatprep.subr.mxu0 0.0
    %1474 = vmatpush2.msra.mxu0 0.0
    %1475 = vmatprep.subr.mxu0 0.0
    %1476 = vmatpush2.msra.mxu0 0.0
    %1477 = vmatprep.subr.mxu0 0.0
    %1478 = vmatpush2.msra.mxu0 0.0
    %1479 = vmatprep.subr.mxu0 0.0
    %1480 = vmatpush2.msra.mxu0 0.0
    %1481 = vmatprep.subr.mxu0 0.0
    %1482 = vmatpush2.msra.mxu0 0.0
    %1483 = vmatprep.subr.mxu0 0.0
    %1484 = vmatpush2.msra.mxu0 0.0
    %1485 = vmatprep.subr.mxu0 0.0
    %1486 = vmatpush2.msra.mxu0 0.0
    %1487 = vmatprep.mubr.f32.mxu0 0.0
    %1488 = vmatmul.mubr.f32.gmra.mxu0 %v1421
    %v1489 = vpop.f32.mrf.mxu0
    %v1490 = vadd.f32 %v52, %v1489
    %v1491 = vpop.f32.mrf.mxu0
    %1492 = vdwg.mxu0
    %v1493 = vsub.f32 0.0, %v1490
    %v1494 = vmul.f32 %v1493, 1.442695
    %v1495 = vpow.pop %v1494
    %v1496 = vadd.f32 %v1495, 1.0
    %v1497 = vrcp.pop %v1496
    %v1498 = vmul.f32 1.0, %v1497
    %v1499 = vmul.f32 %v1490, %v1498
    %v1500 = vld [vmem:[%s7 + $0xf0] sm:$0xff]
    %v1501 = vld [vmem:[%s7 + $0xf8] sm:$0xff]
    %v1502 = vld [vmem:[%s7 + $0x100] sm:$0xff]
    %v1503 = vld [vmem:[%s7 + $0x108] sm:$0xff]
    %v1505 = vsel %vm669, %v1499, 0
    %1507 = vmatprep.subr.mxu0 0.0
    %1508 = vmatpush1.msra.mxu0 0.0
    %1509 = vmatprep.subr.mxu0 0.0
    %1510 = vmatpush1.msra.mxu0 0.0
    %1511 = vmatprep.subr.mxu0 0.0
    %1512 = vmatpush1.msra.mxu0 0.0
    %1513 = vmatprep.subr.mxu0 0.0
    %1514 = vmatpush1.msra.mxu0 0.0
    %1515 = vmatprep.subr.mxu0 0.0
    %1516 = vmatpush1.msra.mxu0 0.0
    %1517 = vmatprep.subr.mxu0 0.0
    %1518 = vmatpush1.msra.mxu0 0.0
    %1519 = vmatprep.subr.mxu0 0.0
    %1520 = vmatpush1.msra.mxu0 0.0
    %1521 = vmatprep.subr.mxu0 0.0
    %1522 = vmatpush1.msra.mxu0 0.0
    %1523 = vmatprep.subr.mxu0 0.0
    %1524 = vmatpush1.msra.mxu0 0.0
    %1525 = vmatprep.subr.mxu0 0.0
    %1526 = vmatpush1.msra.mxu0 0.0
    %1527 = vmatprep.subr.mxu0 0.0
    %1528 = vmatpush1.msra.mxu0 0.0
    %1529 = vmatprep.subr.mxu0 0.0
    %1530 = vmatpush1.msra.mxu0 0.0
    %1531 = vmatprep.subr.mxu0 0.0
    %1532 = vmatpush1.msra.mxu0 %v1503
    %1533 = vmatprep.subr.mxu0 0.0
    %1534 = vmatpush1.msra.mxu0 %v1502
    %1535 = vmatprep.subr.mxu0 0.0
    %1536 = vmatpush1.msra.mxu0 %v1501
    %1537 = vmatprep.subr.mxu0 0.0
    %1538 = vmatpush1.msra.mxu0 %v1500
    %1539 = vmatprep.subr.mxu0 0.0
    %1540 = vmatpush2.msra.mxu0 0.0
    %1541 = vmatprep.subr.mxu0 0.0
    %1542 = vmatpush2.msra.mxu0 0.0
    %1543 = vmatprep.subr.mxu0 0.0
    %1544 = vmatpush2.msra.mxu0 0.0
    %1545 = vmatprep.subr.mxu0 0.0
    %1546 = vmatpush2.msra.mxu0 0.0
    %1547 = vmatprep.subr.mxu0 0.0
    %1548 = vmatpush2.msra.mxu0 0.0
    %1549 = vmatprep.subr.mxu0 0.0
    %1550 = vmatpush2.msra.mxu0 0.0
    %1551 = vmatprep.subr.mxu0 0.0
    %1552 = vmatpush2.msra.mxu0 0.0
    %1553 = vmatprep.subr.mxu0 0.0
    %1554 = vmatpush2.msra.mxu0 0.0
    %1555 = vmatprep.subr.mxu0 0.0
    %1556 = vmatpush2.msra.mxu0 0.0
    %1557 = vmatprep.subr.mxu0 0.0
    %1558 = vmatpush2.msra.mxu0 0.0
    %1559 = vmatprep.subr.mxu0 0.0
    %1560 = vmatpush2.msra.mxu0 0.0
    %1561 = vmatprep.subr.mxu0 0.0
    %1562 = vmatpush2.msra.mxu0 0.0
    %1563 = vmatprep.subr.mxu0 0.0
    %1564 = vmatpush2.msra.mxu0 0.0
    %1565 = vmatprep.subr.mxu0 0.0
    %1566 = vmatpush2.msra.mxu0 0.0
    %1567 = vmatprep.subr.mxu0 0.0
    %1568 = vmatpush2.msra.mxu0 0.0
    %1569 = vmatprep.subr.mxu0 0.0
    %1570 = vmatpush2.msra.mxu0 0.0
    %1571 = vmatprep.mubr.f32.mxu0 0.0
    %1572 = vmatmul.mubr.f32.gmra.mxu0 %v1505
    %v1573 = vpop.f32.mrf.mxu0
    %v1574 = vadd.f32 0.0, %v1573
    %v1575 = vpop.f32.mrf.mxu0
    %1576 = vdwg.mxu0
    %1578 = vrot.lane.b32.xlu0 %v1211, 96
    %v1579 = vpop.permute.xlu0 %1578
    %v1581 = vadd.f32 %v41, %v1579
    %v1582 = vld [vmem:[%s6 + $0x8] sm:$0x1]
    %v1583 = vld [vmem:[%s6 + $0x9] sm:$0x1]
    %v1584 = vld [vmem:[%s6 + $0xa] sm:$0x1]
    %v1585 = vld [vmem:[%s6 + $0xb] sm:$0x1]
    %v1586 = vld [vmem:[%s6 + $0xc] sm:$0x1]
    %v1587 = vld [vmem:[%s6 + $0xd] sm:$0x1]
    %v1588 = vld [vmem:[%s6 + $0xe] sm:$0x1]
    %v1589 = vld [vmem:[%s6 + $0xf] sm:$0x1]
    %v1591 = vcombine.high %v1581, %v1581
    %v1593 = vunpack.c.l.s4 1966171168
    %v1594 = vunpack.c.0.s8 %v1593
    %v1595 = vlaneseq
    %v1596 = vshrl.u32 %v1595, 7
    %v1597 = vsub.s32 %v1594, %v1596
    %v1598 = vrot.slane %v1581, %v1597
    %v1600 = vunpack.c.l.s4 1966171168
    %v1601 = vunpack.c.0.s8 %v1600
    %v1602 = vlaneseq
    %v1603 = vshrl.u32 %v1602, 7
    %v1604 = vsub.s32 %v1601, %v1603
    %v1605 = vrot.slane %v1591, %v1604
    %v1606 = vcombine.high %v1598, %v1598
    %v1607 = vcombine.high %v1605, %v1605
    %v1609 = vunpack.c.l.s4 1966171168
    %v1610 = vunpack.c.0.s8 %v1609
    %v1611 = vlaneseq
    %v1612 = vshrl.u32 %v1611, 7
    %v1613 = vsub.s32 %v1610, %v1612
    %v1614 = vrot.slane %v1598, %v1613
    %v1616 = vunpack.c.l.s4 1966171168
    %v1617 = vunpack.c.0.s8 %v1616
    %v1618 = vlaneseq
    %v1619 = vshrl.u32 %v1618, 7
    %v1620 = vsub.s32 %v1617, %v1619
    %v1621 = vrot.slane %v1605, %v1620
    %v1623 = vunpack.c.l.s4 1966171168
    %v1624 = vunpack.c.0.s8 %v1623
    %v1625 = vlaneseq
    %v1626 = vshrl.u32 %v1625, 7
    %v1627 = vsub.s32 %v1624, %v1626
    %v1628 = vrot.slane %v1606, %v1627
    %v1630 = vunpack.c.l.s4 1966171168
    %v1631 = vunpack.c.0.s8 %v1630
    %v1632 = vlaneseq
    %v1633 = vshrl.u32 %v1632, 7
    %v1634 = vsub.s32 %v1631, %v1633
    %v1635 = vrot.slane %v1607, %v1634
    %v1636 = vcombine.high %v1614, %v1614
    %v1637 = vcombine.high %v1621, %v1621
    %v1638 = vcombine.high %v1628, %v1628
    %v1639 = vcombine.high %v1635, %v1635
    %v1640 = vlaneseq
    %v1641 = vshrl.u32 %v1640, 7
    %v1642 = vsub.s32 0, %v1641
    %v1643 = vrot.slane %v1614, %v1642
    %v1644 = vlaneseq
    %v1645 = vshrl.u32 %v1644, 7
    %v1646 = vsub.s32 0, %v1645
    %v1647 = vrot.slane %v1628, %v1646
    %v1648 = vlaneseq
    %v1649 = vshrl.u32 %v1648, 7
    %v1650 = vsub.s32 0, %v1649
    %v1651 = vrot.slane %v1636, %v1650
    %v1652 = vlaneseq
    %v1653 = vshrl.u32 %v1652, 7
    %v1654 = vsub.s32 0, %v1653
    %v1655 = vrot.slane %v1638, %v1654
    %v1656 = vlaneseq
    %v1657 = vshrl.u32 %v1656, 7
    %v1658 = vsub.s32 0, %v1657
    %v1659 = vrot.slane %v1621, %v1658
    %v1660 = vlaneseq
    %v1661 = vshrl.u32 %v1660, 7
    %v1662 = vsub.s32 0, %v1661
    %v1663 = vrot.slane %v1635, %v1662
    %v1664 = vlaneseq
    %v1665 = vshrl.u32 %v1664, 7
    %v1666 = vsub.s32 0, %v1665
    %v1667 = vrot.slane %v1637, %v1666
    %v1668 = vlaneseq
    %v1669 = vshrl.u32 %v1668, 7
    %v1670 = vsub.s32 0, %v1669
    %v1671 = vrot.slane %v1639, %v1670
    %v1680 = vsub.f32 %v1581, %v1643
    %v1681 = vsub.f32 %v1581, %v1647
    %v1682 = vsub.f32 %v1581, %v1651
    %v1683 = vsub.f32 %v1581, %v1655
    %v1684 = vsub.f32 %v1581, %v1659
    %v1685 = vsub.f32 %v1581, %v1663
    %v1686 = vsub.f32 %v1581, %v1667
    %v1687 = vsub.f32 %v1581, %v1671
    %v1688 = vadd.f32 %v1680, 0.5
    %v1689 = vadd.f32 %v1681, 0.5
    %v1690 = vadd.f32 %v1682, 0.5
    %v1691 = vadd.f32 %v1683, 0.5
    %v1692 = vadd.f32 %v1684, 0.5
    %v1693 = vadd.f32 %v1685, 0.5
    %v1694 = vadd.f32 %v1686, 0.5
    %v1695 = vadd.f32 %v1687, 0.5
    %v1696 = vfloor.f32 %v1688
    %v1697 = vfloor.f32 %v1689
    %v1698 = vfloor.f32 %v1690
    %v1699 = vfloor.f32 %v1691
    %v1700 = vfloor.f32 %v1692
    %v1701 = vfloor.f32 %v1693
    %v1702 = vfloor.f32 %v1694
    %v1703 = vfloor.f32 %v1695
    %v1704 = vsub.f32 %v1680, %v1696
    %v1705 = vsub.f32 %v1681, %v1697
    %v1706 = vsub.f32 %v1682, %v1698
    %v1707 = vsub.f32 %v1683, %v1699
    %v1708 = vsub.f32 %v1684, %v1700
    %v1709 = vsub.f32 %v1685, %v1701
    %v1710 = vsub.f32 %v1686, %v1702
    %v1711 = vsub.f32 %v1687, %v1703
    %v1712 = vmul.f32 %v1704, %v1704
    %v1713 = vmul.f32 %v1705, %v1705
    %v1714 = vmul.f32 %v1706, %v1706
    %v1715 = vmul.f32 %v1707, %v1707
    %v1716 = vmul.f32 %v1708, %v1708
    %v1717 = vmul.f32 %v1709, %v1709
    %v1718 = vmul.f32 %v1710, %v1710
    %v1719 = vmul.f32 %v1711, %v1711
    %v1720 = vsel %vm183, %v1712, 0.0
    %1721 = vadd.xlane.f32.xlu0 %v1720
    %v1722 = vpop.xlane.xlu0 %1721
    %v1723 = vsel %vm183, %v1713, 0.0
    %1724 = vadd.xlane.f32.xlu0 %v1723
    %v1725 = vpop.xlane.xlu0 %1724
    %v1726 = vsel %vm183, %v1714, 0.0
    %1727 = vadd.xlane.f32.xlu0 %v1726
    %v1728 = vpop.xlane.xlu0 %1727
    %v1729 = vsel %vm183, %v1715, 0.0
    %1730 = vadd.xlane.f32.xlu0 %v1729
    %v1731 = vpop.xlane.xlu0 %1730
    %v1732 = vsel %vm183, %v1716, 0.0
    %1733 = vadd.xlane.f32.xlu0 %v1732
    %v1734 = vpop.xlane.xlu0 %1733
    %v1735 = vsel %vm183, %v1717, 0.0
    %1736 = vadd.xlane.f32.xlu0 %v1735
    %v1737 = vpop.xlane.xlu0 %1736
    %v1738 = vsel %vm183, %v1718, 0.0
    %1739 = vadd.xlane.f32.xlu0 %v1738
    %v1740 = vpop.xlane.xlu0 %1739
    %v1741 = vsel %vm183, %v1719, 0.0
    %1742 = vadd.xlane.f32.xlu0 %v1741
    %v1743 = vpop.xlane.xlu0 %1742
    %v1744 = vadd.f32 %v1722, 1e-30
    %v1745 = vadd.f32 %v1725, 1e-30
    %v1746 = vadd.f32 %v1728, 1e-30
    %v1747 = vadd.f32 %v1731, 1e-30
    %v1748 = vadd.f32 %v1734, 1e-30
    %v1749 = vadd.f32 %v1737, 1e-30
    %v1750 = vadd.f32 %v1740, 1e-30
    %v1751 = vadd.f32 %v1743, 1e-30
    %v1752 = vrsqrt.pop %v1744
    %v1753 = vrsqrt.pop %v1745
    %v1754 = vrsqrt.pop %v1746
    %v1755 = vrsqrt.pop %v1747
    %v1756 = vrsqrt.pop %v1748
    %v1757 = vrsqrt.pop %v1749
    %v1758 = vrsqrt.pop %v1750
    %v1759 = vrsqrt.pop %v1751
    %v1760 = vmul.f32 %v1704, %v1752
    %v1761 = vmul.f32 %v1705, %v1753
    %v1762 = vmul.f32 %v1706, %v1754
    %v1763 = vmul.f32 %v1707, %v1755
    %v1764 = vmul.f32 %v1708, %v1756
    %v1765 = vmul.f32 %v1709, %v1757
    %v1766 = vmul.f32 %v1710, %v1758
    %v1767 = vmul.f32 %v1711, %v1759
    %v1768 = vld [vmem:[%s8] sm:$0xff]
    %v1769 = vld [vmem:[%s8 + $0x8] sm:$0xff]
    %v1770 = vld [vmem:[%s8 + $0x10] sm:$0xff]
    %v1771 = vld [vmem:[%s8 + $0x18] sm:$0xff]
    %v1773 = vsel %vm669, %v1397, 0
    %1775 = vmatprep.subr.mxu0 0.0
    %1776 = vmatpush1.msra.mxu0 0.0
    %1777 = vmatprep.subr.mxu0 0.0
    %1778 = vmatpush1.msra.mxu0 0.0
    %1779 = vmatprep.subr.mxu0 0.0
    %1780 = vmatpush1.msra.mxu0 0.0
    %1781 = vmatprep.subr.mxu0 0.0
    %1782 = vmatpush1.msra.mxu0 0.0
    %1783 = vmatprep.subr.mxu0 0.0
    %1784 = vmatpush1.msra.mxu0 0.0
    %1785 = vmatprep.subr.mxu0 0.0
    %1786 = vmatpush1.msra.mxu0 0.0
    %1787 = vmatprep.subr.mxu0 0.0
    %1788 = vmatpush1.msra.mxu0 0.0
    %1789 = vmatprep.subr.mxu0 0.0
    %1790 = vmatpush1.msra.mxu0 0.0
    %1791 = vmatprep.subr.mxu0 0.0
    %1792 = vmatpush1.msra.mxu0 0.0
    %1793 = vmatprep.subr.mxu0 0.0
    %1794 = vmatpush1.msra.mxu0 0.0
    %1795 = vmatprep.subr.mxu0 0.0
    %1796 = vmatpush1.msra.mxu0 0.0
    %1797 = vmatprep.subr.mxu0 0.0
    %1798 = vmatpush1.msra.mxu0 0.0
    %1799 = vmatprep.subr.mxu0 0.0
    %1800 = vmatpush1.msra.mxu0 %v1771
    %1801 = vmatprep.subr.mxu0 0.0
    %1802 = vmatpush1.msra.mxu0 %v1770
    %1803 = vmatprep.subr.mxu0 0.0
    %1804 = vmatpush1.msra.mxu0 %v1769
    %1805 = vmatprep.subr.mxu0 0.0
    %1806 = vmatpush1.msra.mxu0 %v1768
    %1807 = vmatprep.subr.mxu0 0.0
    %1808 = vmatpush2.msra.mxu0 0.0
    %1809 = vmatprep.subr.mxu0 0.0
    %1810 = vmatpush2.msra.mxu0 0.0
    %1811 = vmatprep.subr.mxu0 0.0
    %1812 = vmatpush2.msra.mxu0 0.0
    %1813 = vmatprep.subr.mxu0 0.0
    %1814 = vmatpush2.msra.mxu0 0.0
    %1815 = vmatprep.subr.mxu0 0.0
    %1816 = vmatpush2.msra.mxu0 0.0
    %1817 = vmatprep.subr.mxu0 0.0
    %1818 = vmatpush2.msra.mxu0 0.0
    %1819 = vmatprep.subr.mxu0 0.0
    %1820 = vmatpush2.msra.mxu0 0.0
    %1821 = vmatprep.subr.mxu0 0.0
    %1822 = vmatpush2.msra.mxu0 0.0
    %1823 = vmatprep.subr.mxu0 0.0
    %1824 = vmatpush2.msra.mxu0 0.0
    %1825 = vmatprep.subr.mxu0 0.0
    %1826 = vmatpush2.msra.mxu0 0.0
    %1827 = vmatprep.subr.mxu0 0.0
    %1828 = vmatpush2.msra.mxu0 0.0
    %1829 = vmatprep.subr.mxu0 0.0
    %1830 = vmatpush2.msra.mxu0 0.0
    %1831 = vmatprep.subr.mxu0 0.0
    %1832 = vmatpush2.msra.mxu0 0.0
    %1833 = vmatprep.subr.mxu0 0.0
    %1834 = vmatpush2.msra.mxu0 0.0
    %1835 = vmatprep.subr.mxu0 0.0
    %1836 = vmatpush2.msra.mxu0 0.0
    %1837 = vmatprep.subr.mxu0 0.0
    %1838 = vmatpush2.msra.mxu0 0.0
    %1839 = vmatprep.mubr.f32.mxu0 0.0
    %1840 = vmatmul.mubr.f32.gmra.mxu0 %v1773
    %v1841 = vpop.f32.mrf.mxu0
    %v1842 = vadd.f32 0.0, %v1841
    %v1843 = vpop.f32.mrf.mxu0
    %1844 = vdwg.mxu0
    %v1846 = vcombine.high %v1842, %v1842
    %v1848 = vunpack.c.l.s4 1966171168
    %v1849 = vunpack.c.0.s8 %v1848
    %v1850 = vlaneseq
    %v1851 = vshrl.u32 %v1850, 7
    %v1852 = vsub.s32 %v1849, %v1851
    %v1853 = vrot.slane %v1842, %v1852
    %v1855 = vunpack.c.l.s4 1966171168
    %v1856 = vunpack.c.0.s8 %v1855
    %v1857 = vlaneseq
    %v1858 = vshrl.u32 %v1857, 7
    %v1859 = vsub.s32 %v1856, %v1858
    %v1860 = vrot.slane %v1846, %v1859
    %v1861 = vcombine.high %v1853, %v1853
    %v1862 = vcombine.high %v1860, %v1860
    %v1864 = vunpack.c.l.s4 1966171168
    %v1865 = vunpack.c.0.s8 %v1864
    %v1866 = vlaneseq
    %v1867 = vshrl.u32 %v1866, 7
    %v1868 = vsub.s32 %v1865, %v1867
    %v1869 = vrot.slane %v1853, %v1868
    %v1871 = vunpack.c.l.s4 1966171168
    %v1872 = vunpack.c.0.s8 %v1871
    %v1873 = vlaneseq
    %v1874 = vshrl.u32 %v1873, 7
    %v1875 = vsub.s32 %v1872, %v1874
    %v1876 = vrot.slane %v1860, %v1875
    %v1878 = vunpack.c.l.s4 1966171168
    %v1879 = vunpack.c.0.s8 %v1878
    %v1880 = vlaneseq
    %v1881 = vshrl.u32 %v1880, 7
    %v1882 = vsub.s32 %v1879, %v1881
    %v1883 = vrot.slane %v1861, %v1882
    %v1885 = vunpack.c.l.s4 1966171168
    %v1886 = vunpack.c.0.s8 %v1885
    %v1887 = vlaneseq
    %v1888 = vshrl.u32 %v1887, 7
    %v1889 = vsub.s32 %v1886, %v1888
    %v1890 = vrot.slane %v1862, %v1889
    %v1891 = vcombine.high %v1869, %v1869
    %v1892 = vcombine.high %v1876, %v1876
    %v1893 = vcombine.high %v1883, %v1883
    %v1894 = vcombine.high %v1890, %v1890
    %v1895 = vlaneseq
    %v1896 = vshrl.u32 %v1895, 7
    %v1897 = vsub.s32 0, %v1896
    %v1898 = vrot.slane %v1869, %v1897
    %v1899 = vlaneseq
    %v1900 = vshrl.u32 %v1899, 7
    %v1901 = vsub.s32 0, %v1900
    %v1902 = vrot.slane %v1883, %v1901
    %v1903 = vlaneseq
    %v1904 = vshrl.u32 %v1903, 7
    %v1905 = vsub.s32 0, %v1904
    %v1906 = vrot.slane %v1891, %v1905
    %v1907 = vlaneseq
    %v1908 = vshrl.u32 %v1907, 7
    %v1909 = vsub.s32 0, %v1908
    %v1910 = vrot.slane %v1893, %v1909
    %v1911 = vlaneseq
    %v1912 = vshrl.u32 %v1911, 7
    %v1913 = vsub.s32 0, %v1912
    %v1914 = vrot.slane %v1876, %v1913
    %v1915 = vlaneseq
    %v1916 = vshrl.u32 %v1915, 7
    %v1917 = vsub.s32 0, %v1916
    %v1918 = vrot.slane %v1890, %v1917
    %v1919 = vlaneseq
    %v1920 = vshrl.u32 %v1919, 7
    %v1921 = vsub.s32 0, %v1920
    %v1922 = vrot.slane %v1892, %v1921
    %v1923 = vlaneseq
    %v1924 = vshrl.u32 %v1923, 7
    %v1925 = vsub.s32 0, %v1924
    %v1926 = vrot.slane %v1894, %v1925
    %1927 = vrot.lane.b32.xlu0 %v1898, 96
    %v1928 = vpop.permute.xlu0 %1927
    %1929 = vrot.lane.b32.xlu0 %v1902, 96
    %v1930 = vpop.permute.xlu0 %1929
    %1931 = vrot.lane.b32.xlu0 %v1906, 96
    %v1932 = vpop.permute.xlu0 %1931
    %1933 = vrot.lane.b32.xlu0 %v1910, 96
    %v1934 = vpop.permute.xlu0 %1933
    %1935 = vrot.lane.b32.xlu0 %v1914, 96
    %v1936 = vpop.permute.xlu0 %1935
    %1937 = vrot.lane.b32.xlu0 %v1918, 96
    %v1938 = vpop.permute.xlu0 %1937
    %1939 = vrot.lane.b32.xlu0 %v1922, 96
    %v1940 = vpop.permute.xlu0 %1939
    %1941 = vrot.lane.b32.xlu0 %v1926, 96
    %v1942 = vpop.permute.xlu0 %1941
    %v1951 = vadd.f32 %v1842, %v1928
    %v1952 = vadd.f32 %v1842, %v1930
    %v1953 = vadd.f32 %v1842, %v1932
    %v1954 = vadd.f32 %v1842, %v1934
    %v1955 = vadd.f32 %v1842, %v1936
    %v1956 = vadd.f32 %v1842, %v1938
    %v1957 = vadd.f32 %v1842, %v1940
    %v1958 = vadd.f32 %v1842, %v1942
    %v1959 = vlaneseq
    %v1960 = vshrl.u32 %v1959, 7
    %v1961 = vsub.s32 0, %v1960
    %v1962 = vrot.slane %v1582, %v1961
    %v1963 = vmul.f32 %v1722, %v1962
    %v1964 = vmul.f32 %v1725, %v1962
    %v1965 = vmul.f32 %v1728, %v1962
    %v1966 = vmul.f32 %v1731, %v1962
    %v1967 = vmul.f32 %v1734, %v1962
    %v1968 = vmul.f32 %v1737, %v1962
    %v1969 = vmul.f32 %v1740, %v1962
    %v1970 = vmul.f32 %v1743, %v1962
    %v1971 = vadd.f32 %v1951, %v1963
    %v1972 = vadd.f32 %v1952, %v1964
    %v1973 = vadd.f32 %v1953, %v1965
    %v1974 = vadd.f32 %v1954, %v1966
    %v1975 = vadd.f32 %v1955, %v1967
    %v1976 = vadd.f32 %v1956, %v1968
    %v1977 = vadd.f32 %v1957, %v1969
    %v1978 = vadd.f32 %v1958, %v1970
    %v1979 = vlaneseq
    %v1980 = vshrl.u32 %v1979, 7
    %v1981 = vsub.s32 0, %v1980
    %v1982 = vrot.slane %v1583, %v1981
    %v1983 = vadd.f32 %v1971, %v1982
    %v1984 = vadd.f32 %v1972, %v1982
    %v1985 = vadd.f32 %v1973, %v1982
    %v1986 = vadd.f32 %v1974, %v1982
    %v1987 = vadd.f32 %v1975, %v1982
    %v1988 = vadd.f32 %v1976, %v1982
    %v1989 = vadd.f32 %v1977, %v1982
    %v1990 = vadd.f32 %v1978, %v1982
    %v1991 = vsub.f32 0.0, %v1983
    %v1992 = vsub.f32 0.0, %v1984
    %v1993 = vsub.f32 0.0, %v1985
    %v1994 = vsub.f32 0.0, %v1986
    %v1995 = vsub.f32 0.0, %v1987
    %v1996 = vsub.f32 0.0, %v1988
    %v1997 = vsub.f32 0.0, %v1989
    %v1998 = vsub.f32 0.0, %v1990
    %v1999 = vmul.f32 %v1991, 1.442695
    %v2000 = vpow.pop %v1999
    %v2001 = vmul.f32 %v1992, 1.442695
    %v2002 = vpow.pop %v2001
    %v2003 = vmul.f32 %v1993, 1.442695
    %v2004 = vpow.pop %v2003
    %v2005 = vmul.f32 %v1994, 1.442695
    %v2006 = vpow.pop %v2005
    %v2007 = vmul.f32 %v1995, 1.442695
    %v2008 = vpow.pop %v2007
    %v2009 = vmul.f32 %v1996, 1.442695
    %v2010 = vpow.pop %v2009
    %v2011 = vmul.f32 %v1997, 1.442695
    %v2012 = vpow.pop %v2011
    %v2013 = vmul.f32 %v1998, 1.442695
    %v2014 = vpow.pop %v2013
    %v2015 = vadd.f32 %v2000, 1.0
    %v2016 = vadd.f32 %v2002, 1.0
    %v2017 = vadd.f32 %v2004, 1.0
    %v2018 = vadd.f32 %v2006, 1.0
    %v2019 = vadd.f32 %v2008, 1.0
    %v2020 = vadd.f32 %v2010, 1.0
    %v2021 = vadd.f32 %v2012, 1.0
    %v2022 = vadd.f32 %v2014, 1.0
    %v2023 = vrcp.pop %v2015
    %v2024 = vmul.f32 1.0, %v2023
    %v2025 = vrcp.pop %v2016
    %v2026 = vmul.f32 1.0, %v2025
    %v2027 = vrcp.pop %v2017
    %v2028 = vmul.f32 1.0, %v2027
    %v2029 = vrcp.pop %v2018
    %v2030 = vmul.f32 1.0, %v2029
    %v2031 = vrcp.pop %v2019
    %v2032 = vmul.f32 1.0, %v2031
    %v2033 = vrcp.pop %v2020
    %v2034 = vmul.f32 1.0, %v2033
    %v2035 = vrcp.pop %v2021
    %v2036 = vmul.f32 1.0, %v2035
    %v2037 = vrcp.pop %v2022
    %v2038 = vmul.f32 1.0, %v2037
    %v2039 = vmul.f32 %v1983, %v2024
    %v2040 = vmul.f32 %v1984, %v2026
    %v2041 = vmul.f32 %v1985, %v2028
    %v2042 = vmul.f32 %v1986, %v2030
    %v2043 = vmul.f32 %v1987, %v2032
    %v2044 = vmul.f32 %v1988, %v2034
    %v2045 = vmul.f32 %v1989, %v2036
    %v2046 = vmul.f32 %v1990, %v2038
    %v2047 = vld [vmem:[%s8 + $0x20] sm:$0xff]
    %v2048 = vld [vmem:[%s8 + $0x28] sm:$0xff]
    %v2049 = vld [vmem:[%s8 + $0x30] sm:$0xff]
    %v2050 = vld [vmem:[%s8 + $0x38] sm:$0xff]
    %v2051 = vlaneseq
    %v2052 = vshrl.u32 %v2051, 7
    %v2053 = vsub.s32 0, %v2052
    %v2054 = vrot.slane %v1584, %v2053
    %v2056 = vsel %vm669, %v2039, 0
    %v2059 = vsel %vm669, %v2040, 0
    %v2062 = vsel %vm669, %v2041, 0
    %v2065 = vsel %vm669, %v2042, 0
    %v2068 = vsel %vm669, %v2043, 0
    %v2071 = vsel %vm669, %v2044, 0
    %v2074 = vsel %vm669, %v2045, 0
    %v2077 = vsel %vm669, %v2046, 0
    %2079 = vmatprep.subr.mxu0 0.0
    %2080 = vmatpush1.msra.mxu0 0.0
    %2081 = vmatprep.subr.mxu0 0.0
    %2082 = vmatpush1.msra.mxu0 0.0
    %2083 = vmatprep.subr.mxu0 0.0
    %2084 = vmatpush1.msra.mxu0 0.0
    %2085 = vmatprep.subr.mxu0 0.0
    %2086 = vmatpush1.msra.mxu0 0.0
    %2087 = vmatprep.subr.mxu0 0.0
    %2088 = vmatpush1.msra.mxu0 0.0
    %2089 = vmatprep.subr.mxu0 0.0
    %2090 = vmatpush1.msra.mxu0 0.0
    %2091 = vmatprep.subr.mxu0 0.0
    %2092 = vmatpush1.msra.mxu0 0.0
    %2093 = vmatprep.subr.mxu0 0.0
    %2094 = vmatpush1.msra.mxu0 0.0
    %2095 = vmatprep.subr.mxu0 0.0
    %2096 = vmatpush1.msra.mxu0 0.0
    %2097 = vmatprep.subr.mxu0 0.0
    %2098 = vmatpush1.msra.mxu0 0.0
    %2099 = vmatprep.subr.mxu0 0.0
    %2100 = vmatpush1.msra.mxu0 0.0
    %2101 = vmatprep.subr.mxu0 0.0
    %2102 = vmatpush1.msra.mxu0 0.0
    %2103 = vmatprep.subr.mxu0 0.0
    %2104 = vmatpush1.msra.mxu0 %v2050
    %2105 = vmatprep.subr.mxu0 0.0
    %2106 = vmatpush1.msra.mxu0 %v2049
    %2107 = vmatprep.subr.mxu0 0.0
    %2108 = vmatpush1.msra.mxu0 %v2048
    %2109 = vmatprep.subr.mxu0 0.0
    %2110 = vmatpush1.msra.mxu0 %v2047
    %2111 = vmatprep.subr.mxu0 0.0
    %2112 = vmatpush2.msra.mxu0 0.0
    %2113 = vmatprep.subr.mxu0 0.0
    %2114 = vmatpush2.msra.mxu0 0.0
    %2115 = vmatprep.subr.mxu0 0.0
    %2116 = vmatpush2.msra.mxu0 0.0
    %2117 = vmatprep.subr.mxu0 0.0
    %2118 = vmatpush2.msra.mxu0 0.0
    %2119 = vmatprep.subr.mxu0 0.0
    %2120 = vmatpush2.msra.mxu0 0.0
    %2121 = vmatprep.subr.mxu0 0.0
    %2122 = vmatpush2.msra.mxu0 0.0
    %2123 = vmatprep.subr.mxu0 0.0
    %2124 = vmatpush2.msra.mxu0 0.0
    %2125 = vmatprep.subr.mxu0 0.0
    %2126 = vmatpush2.msra.mxu0 0.0
    %2127 = vmatprep.subr.mxu0 0.0
    %2128 = vmatpush2.msra.mxu0 0.0
    %2129 = vmatprep.subr.mxu0 0.0
    %2130 = vmatpush2.msra.mxu0 0.0
    %2131 = vmatprep.subr.mxu0 0.0
    %2132 = vmatpush2.msra.mxu0 0.0
    %2133 = vmatprep.subr.mxu0 0.0
    %2134 = vmatpush2.msra.mxu0 0.0
    %2135 = vmatprep.subr.mxu0 0.0
    %2136 = vmatpush2.msra.mxu0 0.0
    %2137 = vmatprep.subr.mxu0 0.0
    %2138 = vmatpush2.msra.mxu0 0.0
    %2139 = vmatprep.subr.mxu0 0.0
    %2140 = vmatpush2.msra.mxu0 0.0
    %2141 = vmatprep.subr.mxu0 0.0
    %2142 = vmatpush2.msra.mxu0 0.0
    %2143 = vmatprep.mubr.f32.mxu0 0.0
    %2144 = vmatmul.mubr.f32.gmra.mxu0 %v2056
    %v2145 = vpop.f32.mrf.mxu0
    %v2146 = vadd.f32 %v2054, %v2145
    %v2147 = vpop.f32.mrf.mxu0
    %2148 = vmatprep.mubr.f32.mxu0 0.0
    %2149 = vmatmul.mubr.f32.gmra.mxu0 %v2059
    %v2150 = vpop.f32.mrf.mxu0
    %v2151 = vadd.f32 %v2054, %v2150
    %v2152 = vpop.f32.mrf.mxu0
    %2153 = vmatprep.mubr.f32.mxu0 0.0
    %2154 = vmatmul.mubr.f32.gmra.mxu0 %v2062
    %v2155 = vpop.f32.mrf.mxu0
    %v2156 = vadd.f32 %v2054, %v2155
    %v2157 = vpop.f32.mrf.mxu0
    %2158 = vmatprep.mubr.f32.mxu0 0.0
    %2159 = vmatmul.mubr.f32.gmra.mxu0 %v2065
    %v2160 = vpop.f32.mrf.mxu0
    %v2161 = vadd.f32 %v2054, %v2160
    %v2162 = vpop.f32.mrf.mxu0
    %2163 = vmatprep.mubr.f32.mxu0 0.0
    %2164 = vmatmul.mubr.f32.gmra.mxu0 %v2068
    %v2165 = vpop.f32.mrf.mxu0
    %v2166 = vadd.f32 %v2054, %v2165
    %v2167 = vpop.f32.mrf.mxu0
    %2168 = vmatprep.mubr.f32.mxu0 0.0
    %2169 = vmatmul.mubr.f32.gmra.mxu0 %v2071
    %v2170 = vpop.f32.mrf.mxu0
    %v2171 = vadd.f32 %v2054, %v2170
    %v2172 = vpop.f32.mrf.mxu0
    %2173 = vmatprep.mubr.f32.mxu0 0.0
    %2174 = vmatmul.mubr.f32.gmra.mxu0 %v2074
    %v2175 = vpop.f32.mrf.mxu0
    %v2176 = vadd.f32 %v2054, %v2175
    %v2177 = vpop.f32.mrf.mxu0
    %2178 = vmatprep.mubr.f32.mxu0 0.0
    %2179 = vmatmul.mubr.f32.gmra.mxu0 %v2077
    %v2180 = vpop.f32.mrf.mxu0
    %v2181 = vadd.f32 %v2054, %v2180
    %v2182 = vpop.f32.mrf.mxu0
    %2183 = vdwg.mxu0
    %v2184 = vsub.f32 0.0, %v2146
    %v2185 = vsub.f32 0.0, %v2151
    %v2186 = vsub.f32 0.0, %v2156
    %v2187 = vsub.f32 0.0, %v2161
    %v2188 = vsub.f32 0.0, %v2166
    %v2189 = vsub.f32 0.0, %v2171
    %v2190 = vsub.f32 0.0, %v2176
    %v2191 = vsub.f32 0.0, %v2181
    %v2192 = vmul.f32 %v2184, 1.442695
    %v2193 = vpow.pop %v2192
    %v2194 = vmul.f32 %v2185, 1.442695
    %v2195 = vpow.pop %v2194
    %v2196 = vmul.f32 %v2186, 1.442695
    %v2197 = vpow.pop %v2196
    %v2198 = vmul.f32 %v2187, 1.442695
    %v2199 = vpow.pop %v2198
    %v2200 = vmul.f32 %v2188, 1.442695
    %v2201 = vpow.pop %v2200
    %v2202 = vmul.f32 %v2189, 1.442695
    %v2203 = vpow.pop %v2202
    %v2204 = vmul.f32 %v2190, 1.442695
    %v2205 = vpow.pop %v2204
    %v2206 = vmul.f32 %v2191, 1.442695
    %v2207 = vpow.pop %v2206
    %v2208 = vadd.f32 %v2193, 1.0
    %v2209 = vadd.f32 %v2195, 1.0
    %v2210 = vadd.f32 %v2197, 1.0
    %v2211 = vadd.f32 %v2199, 1.0
    %v2212 = vadd.f32 %v2201, 1.0
    %v2213 = vadd.f32 %v2203, 1.0
    %v2214 = vadd.f32 %v2205, 1.0
    %v2215 = vadd.f32 %v2207, 1.0
    %v2216 = vrcp.pop %v2208
    %v2217 = vmul.f32 1.0, %v2216
    %v2218 = vrcp.pop %v2209
    %v2219 = vmul.f32 1.0, %v2218
    %v2220 = vrcp.pop %v2210
    %v2221 = vmul.f32 1.0, %v2220
    %v2222 = vrcp.pop %v2211
    %v2223 = vmul.f32 1.0, %v2222
    %v2224 = vrcp.pop %v2212
    %v2225 = vmul.f32 1.0, %v2224
    %v2226 = vrcp.pop %v2213
    %v2227 = vmul.f32 1.0, %v2226
    %v2228 = vrcp.pop %v2214
    %v2229 = vmul.f32 1.0, %v2228
    %v2230 = vrcp.pop %v2215
    %v2231 = vmul.f32 1.0, %v2230
    %v2232 = vmul.f32 %v2146, %v2217
    %v2233 = vmul.f32 %v2151, %v2219
    %v2234 = vmul.f32 %v2156, %v2221
    %v2235 = vmul.f32 %v2161, %v2223
    %v2236 = vmul.f32 %v2166, %v2225
    %v2237 = vmul.f32 %v2171, %v2227
    %v2238 = vmul.f32 %v2176, %v2229
    %v2239 = vmul.f32 %v2181, %v2231
    %v2240 = vld [vmem:[%s8 + $0x40] sm:$0xff]
    %v2241 = vld [vmem:[%s8 + $0x48] sm:$0xff]
    %v2242 = vld [vmem:[%s8 + $0x50] sm:$0xff]
    %v2243 = vld [vmem:[%s8 + $0x58] sm:$0xff]
    %v2244 = vlaneseq
    %v2245 = vshrl.u32 %v2244, 7
    %v2246 = vsub.s32 0, %v2245
    %v2247 = vrot.slane %v1585, %v2246
    %v2249 = vsel %vm669, %v2232, 0
    %v2252 = vsel %vm669, %v2233, 0
    %v2255 = vsel %vm669, %v2234, 0
    %v2258 = vsel %vm669, %v2235, 0
    %v2261 = vsel %vm669, %v2236, 0
    %v2264 = vsel %vm669, %v2237, 0
    %v2267 = vsel %vm669, %v2238, 0
    %v2270 = vsel %vm669, %v2239, 0
    %2272 = vmatprep.subr.mxu0 0.0
    %2273 = vmatpush1.msra.mxu0 0.0
    %2274 = vmatprep.subr.mxu0 0.0
    %2275 = vmatpush1.msra.mxu0 0.0
    %2276 = vmatprep.subr.mxu0 0.0
    %2277 = vmatpush1.msra.mxu0 0.0
    %2278 = vmatprep.subr.mxu0 0.0
    %2279 = vmatpush1.msra.mxu0 0.0
    %2280 = vmatprep.subr.mxu0 0.0
    %2281 = vmatpush1.msra.mxu0 0.0
    %2282 = vmatprep.subr.mxu0 0.0
    %2283 = vmatpush1.msra.mxu0 0.0
    %2284 = vmatprep.subr.mxu0 0.0
    %2285 = vmatpush1.msra.mxu0 0.0
    %2286 = vmatprep.subr.mxu0 0.0
    %2287 = vmatpush1.msra.mxu0 0.0
    %2288 = vmatprep.subr.mxu0 0.0
    %2289 = vmatpush1.msra.mxu0 0.0
    %2290 = vmatprep.subr.mxu0 0.0
    %2291 = vmatpush1.msra.mxu0 0.0
    %2292 = vmatprep.subr.mxu0 0.0
    %2293 = vmatpush1.msra.mxu0 0.0
    %2294 = vmatprep.subr.mxu0 0.0
    %2295 = vmatpush1.msra.mxu0 0.0
    %2296 = vmatprep.subr.mxu0 0.0
    %2297 = vmatpush1.msra.mxu0 %v2243
    %2298 = vmatprep.subr.mxu0 0.0
    %2299 = vmatpush1.msra.mxu0 %v2242
    %2300 = vmatprep.subr.mxu0 0.0
    %2301 = vmatpush1.msra.mxu0 %v2241
    %2302 = vmatprep.subr.mxu0 0.0
    %2303 = vmatpush1.msra.mxu0 %v2240
    %2304 = vmatprep.subr.mxu0 0.0
    %2305 = vmatpush2.msra.mxu0 0.0
    %2306 = vmatprep.subr.mxu0 0.0
    %2307 = vmatpush2.msra.mxu0 0.0
    %2308 = vmatprep.subr.mxu0 0.0
    %2309 = vmatpush2.msra.mxu0 0.0
    %2310 = vmatprep.subr.mxu0 0.0
    %2311 = vmatpush2.msra.mxu0 0.0
    %2312 = vmatprep.subr.mxu0 0.0
    %2313 = vmatpush2.msra.mxu0 0.0
    %2314 = vmatprep.subr.mxu0 0.0
    %2315 = vmatpush2.msra.mxu0 0.0
    %2316 = vmatprep.subr.mxu0 0.0
    %2317 = vmatpush2.msra.mxu0 0.0
    %2318 = vmatprep.subr.mxu0 0.0
    %2319 = vmatpush2.msra.mxu0 0.0
    %2320 = vmatprep.subr.mxu0 0.0
    %2321 = vmatpush2.msra.mxu0 0.0
    %2322 = vmatprep.subr.mxu0 0.0
    %2323 = vmatpush2.msra.mxu0 0.0
    %2324 = vmatprep.subr.mxu0 0.0
    %2325 = vmatpush2.msra.mxu0 0.0
    %2326 = vmatprep.subr.mxu0 0.0
    %2327 = vmatpush2.msra.mxu0 0.0
    %2328 = vmatprep.subr.mxu0 0.0
    %2329 = vmatpush2.msra.mxu0 0.0
    %2330 = vmatprep.subr.mxu0 0.0
    %2331 = vmatpush2.msra.mxu0 0.0
    %2332 = vmatprep.subr.mxu0 0.0
    %2333 = vmatpush2.msra.mxu0 0.0
    %2334 = vmatprep.subr.mxu0 0.0
    %2335 = vmatpush2.msra.mxu0 0.0
    %2336 = vmatprep.mubr.f32.mxu0 0.0
    %2337 = vmatmul.mubr.f32.gmra.mxu0 %v2249
    %v2338 = vpop.f32.mrf.mxu0
    %v2339 = vadd.f32 %v2247, %v2338
    %v2340 = vpop.f32.mrf.mxu0
    %2341 = vmatprep.mubr.f32.mxu0 0.0
    %2342 = vmatmul.mubr.f32.gmra.mxu0 %v2252
    %v2343 = vpop.f32.mrf.mxu0
    %v2344 = vadd.f32 %v2247, %v2343
    %v2345 = vpop.f32.mrf.mxu0
    %2346 = vmatprep.mubr.f32.mxu0 0.0
    %2347 = vmatmul.mubr.f32.gmra.mxu0 %v2255
    %v2348 = vpop.f32.mrf.mxu0
    %v2349 = vadd.f32 %v2247, %v2348
    %v2350 = vpop.f32.mrf.mxu0
    %2351 = vmatprep.mubr.f32.mxu0 0.0
    %2352 = vmatmul.mubr.f32.gmra.mxu0 %v2258
    %v2353 = vpop.f32.mrf.mxu0
    %v2354 = vadd.f32 %v2247, %v2353
    %v2355 = vpop.f32.mrf.mxu0
    %2356 = vmatprep.mubr.f32.mxu0 0.0
    %2357 = vmatmul.mubr.f32.gmra.mxu0 %v2261
    %v2358 = vpop.f32.mrf.mxu0
    %v2359 = vadd.f32 %v2247, %v2358
    %v2360 = vpop.f32.mrf.mxu0
    %2361 = vmatprep.mubr.f32.mxu0 0.0
    %2362 = vmatmul.mubr.f32.gmra.mxu0 %v2264
    %v2363 = vpop.f32.mrf.mxu0
    %v2364 = vadd.f32 %v2247, %v2363
    %v2365 = vpop.f32.mrf.mxu0
    %2366 = vmatprep.mubr.f32.mxu0 0.0
    %2367 = vmatmul.mubr.f32.gmra.mxu0 %v2267
    %v2368 = vpop.f32.mrf.mxu0
    %v2369 = vadd.f32 %v2247, %v2368
    %v2370 = vpop.f32.mrf.mxu0
    %2371 = vmatprep.mubr.f32.mxu0 0.0
    %2372 = vmatmul.mubr.f32.gmra.mxu0 %v2270
    %v2373 = vpop.f32.mrf.mxu0
    %v2374 = vadd.f32 %v2247, %v2373
    %v2375 = vpop.f32.mrf.mxu0
    %2376 = vdwg.mxu0
    %v2377 = vsub.f32 0.0, %v2339
    %v2378 = vsub.f32 0.0, %v2344
    %v2379 = vsub.f32 0.0, %v2349
    %v2380 = vsub.f32 0.0, %v2354
    %v2381 = vsub.f32 0.0, %v2359
    %v2382 = vsub.f32 0.0, %v2364
    %v2383 = vsub.f32 0.0, %v2369
    %v2384 = vsub.f32 0.0, %v2374
    %v2385 = vmul.f32 %v2377, 1.442695
    %v2386 = vpow.pop %v2385
    %v2387 = vmul.f32 %v2378, 1.442695
    %v2388 = vpow.pop %v2387
    %v2389 = vmul.f32 %v2379, 1.442695
    %v2390 = vpow.pop %v2389
    %v2391 = vmul.f32 %v2380, 1.442695
    %v2392 = vpow.pop %v2391
    %v2393 = vmul.f32 %v2381, 1.442695
    %v2394 = vpow.pop %v2393
    %v2395 = vmul.f32 %v2382, 1.442695
    %v2396 = vpow.pop %v2395
    %v2397 = vmul.f32 %v2383, 1.442695
    %v2398 = vpow.pop %v2397
    %v2399 = vmul.f32 %v2384, 1.442695
    %v2400 = vpow.pop %v2399
    %v2401 = vadd.f32 %v2386, 1.0
    %v2402 = vadd.f32 %v2388, 1.0
    %v2403 = vadd.f32 %v2390, 1.0
    %v2404 = vadd.f32 %v2392, 1.0
    %v2405 = vadd.f32 %v2394, 1.0
    %v2406 = vadd.f32 %v2396, 1.0
    %v2407 = vadd.f32 %v2398, 1.0
    %v2408 = vadd.f32 %v2400, 1.0
    %v2409 = vrcp.pop %v2401
    %v2410 = vmul.f32 1.0, %v2409
    %v2411 = vrcp.pop %v2402
    %v2412 = vmul.f32 1.0, %v2411
    %v2413 = vrcp.pop %v2403
    %v2414 = vmul.f32 1.0, %v2413
    %v2415 = vrcp.pop %v2404
    %v2416 = vmul.f32 1.0, %v2415
    %v2417 = vrcp.pop %v2405
    %v2418 = vmul.f32 1.0, %v2417
    %v2419 = vrcp.pop %v2406
    %v2420 = vmul.f32 1.0, %v2419
    %v2421 = vrcp.pop %v2407
    %v2422 = vmul.f32 1.0, %v2421
    %v2423 = vrcp.pop %v2408
    %v2424 = vmul.f32 1.0, %v2423
    %v2425 = vmul.f32 %v2339, %v2410
    %v2426 = vmul.f32 %v2344, %v2412
    %v2427 = vmul.f32 %v2349, %v2414
    %v2428 = vmul.f32 %v2354, %v2416
    %v2429 = vmul.f32 %v2359, %v2418
    %v2430 = vmul.f32 %v2364, %v2420
    %v2431 = vmul.f32 %v2369, %v2422
    %v2432 = vmul.f32 %v2374, %v2424
    %v2433 = vlaneseq
    %v2434 = vshrl.u32 %v2433, 7
    %v2435 = vsub.s32 0, %v2434
    %v2436 = vrot.slane %v1586, %v2435
    %v2437 = vmul.f32 %v2425, %v2436
    %v2438 = vmul.f32 %v2426, %v2436
    %v2439 = vmul.f32 %v2427, %v2436
    %v2440 = vmul.f32 %v2428, %v2436
    %v2441 = vmul.f32 %v2429, %v2436
    %v2442 = vmul.f32 %v2430, %v2436
    %v2443 = vmul.f32 %v2431, %v2436
    %v2444 = vmul.f32 %v2432, %v2436
    %v2445 = vsel %vm669, %v2437, 0.0
    %2446 = vadd.xlane.f32.xlu0 %v2445
    %v2447 = vpop.xlane.xlu0 %2446
    %v2448 = vsel %vm669, %v2438, 0.0
    %2449 = vadd.xlane.f32.xlu0 %v2448
    %v2450 = vpop.xlane.xlu0 %2449
    %v2451 = vsel %vm669, %v2439, 0.0
    %2452 = vadd.xlane.f32.xlu0 %v2451
    %v2453 = vpop.xlane.xlu0 %2452
    %v2454 = vsel %vm669, %v2440, 0.0
    %2455 = vadd.xlane.f32.xlu0 %v2454
    %v2456 = vpop.xlane.xlu0 %2455
    %v2457 = vsel %vm669, %v2441, 0.0
    %2458 = vadd.xlane.f32.xlu0 %v2457
    %v2459 = vpop.xlane.xlu0 %2458
    %v2460 = vsel %vm669, %v2442, 0.0
    %2461 = vadd.xlane.f32.xlu0 %v2460
    %v2462 = vpop.xlane.xlu0 %2461
    %v2463 = vsel %vm669, %v2443, 0.0
    %2464 = vadd.xlane.f32.xlu0 %v2463
    %v2465 = vpop.xlane.xlu0 %2464
    %v2466 = vsel %vm669, %v2444, 0.0
    %2467 = vadd.xlane.f32.xlu0 %v2466
    %v2468 = vpop.xlane.xlu0 %2467
    %v2469 = vmul.f32 %v2447, %v1760
    %v2470 = vmul.f32 %v2450, %v1761
    %v2471 = vmul.f32 %v2453, %v1762
    %v2472 = vmul.f32 %v2456, %v1763
    %v2473 = vmul.f32 %v2459, %v1764
    %v2474 = vmul.f32 %v2462, %v1765
    %v2475 = vmul.f32 %v2465, %v1766
    %v2476 = vmul.f32 %v2468, %v1767
    %2485 = vrot.lane.b32.xlu0 %v2469, 32
    %v2486 = vpop.permute.xlu0 %2485
    %2487 = vrot.lane.b32.xlu0 %v2470, 32
    %v2488 = vpop.permute.xlu0 %2487
    %2489 = vrot.lane.b32.xlu0 %v2471, 32
    %v2490 = vpop.permute.xlu0 %2489
    %2491 = vrot.lane.b32.xlu0 %v2472, 32
    %v2492 = vpop.permute.xlu0 %2491
    %2493 = vrot.lane.b32.xlu0 %v2473, 32
    %v2494 = vpop.permute.xlu0 %2493
    %2495 = vrot.lane.b32.xlu0 %v2474, 32
    %v2496 = vpop.permute.xlu0 %2495
    %2497 = vrot.lane.b32.xlu0 %v2475, 32
    %v2498 = vpop.permute.xlu0 %2497
    %2499 = vrot.lane.b32.xlu0 %v2476, 32
    %v2500 = vpop.permute.xlu0 %2499
    %v2509 = vsel %vm669, %v2232, %v2486
    %v2510 = vsel %vm669, %v2233, %v2488
    %v2511 = vsel %vm669, %v2234, %v2490
    %v2512 = vsel %vm669, %v2235, %v2492
    %v2513 = vsel %vm669, %v2236, %v2494
    %v2514 = vsel %vm669, %v2237, %v2496
    %v2515 = vsel %vm669, %v2238, %v2498
    %v2516 = vsel %vm669, %v2239, %v2500
    %2517 = vmatprep.subr.mxu0 0.0
    %2518 = vmatpush1.msra.mxu0 0.0
    %2519 = vmatprep.subr.mxu0 0.0
    %2520 = vmatpush1.msra.mxu0 0.0
    %2521 = vmatprep.subr.mxu0 0.0
    %2522 = vmatpush1.msra.mxu0 0.0
    %2523 = vmatprep.subr.mxu0 0.0
    %2524 = vmatpush1.msra.mxu0 0.0
    %2525 = vmatprep.subr.mxu0 0.0
    %2526 = vmatpush1.msra.mxu0 0.0
    %2527 = vmatprep.subr.mxu0 0.0
    %2528 = vmatpush1.msra.mxu0 0.0
    %2529 = vmatprep.subr.mxu0 0.0
    %2530 = vmatpush1.msra.mxu0 0.0
    %2531 = vmatprep.subr.mxu0 0.0
    %2532 = vmatpush1.msra.mxu0 0.0
    %2533 = vmatprep.subr.mxu0 0.0
    %2534 = vmatpush1.msra.mxu0 %v2516
    %2535 = vmatprep.subr.mxu0 0.0
    %2536 = vmatpush1.msra.mxu0 %v2515
    %2537 = vmatprep.subr.mxu0 0.0
    %2538 = vmatpush1.msra.mxu0 %v2514
    %2539 = vmatprep.subr.mxu0 0.0
    %2540 = vmatpush1.msra.mxu0 %v2513
    %2541 = vmatprep.subr.mxu0 0.0
    %2542 = vmatpush1.msra.mxu0 %v2512
    %2543 = vmatprep.subr.mxu0 0.0
    %2544 = vmatpush1.msra.mxu0 %v2511
    %2545 = vmatprep.subr.mxu0 0.0
    %2546 = vmatpush1.msra.mxu0 %v2510
    %2547 = vmatprep.subr.mxu0 0.0
    %2548 = vmatpush1.msra.mxu0 %v2509
    %2549 = vmatprep.subr.mxu0 0.0
    %2550 = vmatpush2.msra.mxu0 0.0
    %2551 = vmatprep.subr.mxu0 0.0
    %2552 = vmatpush2.msra.mxu0 0.0
    %2553 = vmatprep.subr.mxu0 0.0
    %2554 = vmatpush2.msra.mxu0 0.0
    %2555 = vmatprep.subr.mxu0 0.0
    %2556 = vmatpush2.msra.mxu0 0.0
    %2557 = vmatprep.subr.mxu0 0.0
    %2558 = vmatpush2.msra.mxu0 0.0
    %2559 = vmatprep.subr.mxu0 0.0
    %2560 = vmatpush2.msra.mxu0 0.0
    %2561 = vmatprep.subr.mxu0 0.0
    %2562 = vmatpush2.msra.mxu0 0.0
    %2563 = vmatprep.subr.mxu0 0.0
    %2564 = vmatpush2.msra.mxu0 0.0
    %2565 = vmatprep.subr.mxu0 0.0
    %2566 = vmatpush2.msra.mxu0 0.0
    %2567 = vmatprep.subr.mxu0 0.0
    %2568 = vmatpush2.msra.mxu0 0.0
    %2569 = vmatprep.subr.mxu0 0.0
    %2570 = vmatpush2.msra.mxu0 0.0
    %2571 = vmatprep.subr.mxu0 0.0
    %2572 = vmatpush2.msra.mxu0 0.0
    %2573 = vmatprep.subr.mxu0 0.0
    %2574 = vmatpush2.msra.mxu0 0.0
    %2575 = vmatprep.subr.mxu0 0.0
    %2576 = vmatpush2.msra.mxu0 0.0
    %2577 = vmatprep.subr.mxu0 0.0
    %2578 = vmatpush2.msra.mxu0 0.0
    %2579 = vmatprep.subr.mxu0 0.0
    %2580 = vmatpush2.msra.mxu0 0.0
    %2581 = vmatprep.mubr.f32.mxu0 0.0
    %2582 = vmatmul.mubr.f32.gmra.mxu0 %v1134
    %v2583 = vpop.f32.mrf.mxu0
    %v2584 = vadd.f32 0.0, %v2583
    %v2585 = vpop.f32.mrf.mxu0
    %2586 = vdwg.mxu0
    %v2587 = vmul.f32 %v2584, %v1209
    %v2588 = vlaneseq
    %v2589 = vshrl.u32 %v2588, 7
    %v2590 = vsub.s32 0, %v2589
    %v2591 = vrot.slane %v1574, %v2590
    %2593 = vrot.lane.b32.xlu0 %v2584, 32
    %v2594 = vpop.permute.xlu0 %2593
    %2597 = vrot.lane.b32.xlu0 %v2591, 64
    %v2598 = vpop.permute.xlu0 %2597
    %v2600 = vsel %vm669, %v1397, %v2594
    %v2601 = vsel %vm1132, %v2600, %v2598
    %v2602 = vld [vmem:[%s8 + $0x60] sm:$0xff]
    %v2603 = vld [vmem:[%s8 + $0x68] sm:$0xff]
    %v2604 = vld [vmem:[%s8 + $0x70] sm:$0xff]
    %v2605 = vld [vmem:[%s8 + $0x78] sm:$0xff]
    %v2606 = vld [vmem:[%s8 + $0x80] sm:$0xff]
    %v2607 = vld [vmem:[%s8 + $0x88] sm:$0xff]
    %v2608 = vld [vmem:[%s8 + $0x90] sm:$0xff]
    %v2609 = vld [vmem:[%s8 + $0x98] sm:$0xff]
    %v2610 = vld [vmem:[%s8 + $0xa0] sm:$0xff]
    %v2611 = vld [vmem:[%s8 + $0xa8] sm:$0xff]
    %v2612 = vld [vmem:[%s8 + $0xb0] sm:$0xff]
    %v2613 = vld [vmem:[%s8 + $0xb8] sm:$0xff]
    %v2614 = vlaneseq
    %v2615 = vshrl.u32 %v2614, 7
    %v2616 = vsub.s32 0, %v2615
    %v2617 = vrot.slane %v1587, %v2616
    %vm2618 = vcmask 785408
    %v2620 = vsel %vm2618, %v2601, 0
    %2622 = vmatprep.subr.mxu0 0.0
    %2623 = vmatpush1.msra.mxu0 0.0
    %2624 = vmatprep.subr.mxu0 0.0
    %2625 = vmatpush1.msra.mxu0 0.0
    %2626 = vmatprep.subr.mxu0 0.0
    %2627 = vmatpush1.msra.mxu0 0.0
    %2628 = vmatprep.subr.mxu0 0.0
    %2629 = vmatpush1.msra.mxu0 0.0
    %2630 = vmatprep.subr.mxu0 0.0
    %2631 = vmatpush1.msra.mxu0 %v2613
    %2632 = vmatprep.subr.mxu0 0.0
    %2633 = vmatpush1.msra.mxu0 %v2612
    %2634 = vmatprep.subr.mxu0 0.0
    %2635 = vmatpush1.msra.mxu0 %v2611
    %2636 = vmatprep.subr.mxu0 0.0
    %2637 = vmatpush1.msra.mxu0 %v2610
    %2638 = vmatprep.subr.mxu0 0.0
    %2639 = vmatpush1.msra.mxu0 %v2609
    %2640 = vmatprep.subr.mxu0 0.0
    %2641 = vmatpush1.msra.mxu0 %v2608
    %2642 = vmatprep.subr.mxu0 0.0
    %2643 = vmatpush1.msra.mxu0 %v2607
    %2644 = vmatprep.subr.mxu0 0.0
    %2645 = vmatpush1.msra.mxu0 %v2606
    %2646 = vmatprep.subr.mxu0 0.0
    %2647 = vmatpush1.msra.mxu0 %v2605
    %2648 = vmatprep.subr.mxu0 0.0
    %2649 = vmatpush1.msra.mxu0 %v2604
    %2650 = vmatprep.subr.mxu0 0.0
    %2651 = vmatpush1.msra.mxu0 %v2603
    %2652 = vmatprep.subr.mxu0 0.0
    %2653 = vmatpush1.msra.mxu0 %v2602
    %2654 = vmatprep.subr.mxu0 0.0
    %2655 = vmatpush2.msra.mxu0 0.0
    %2656 = vmatprep.subr.mxu0 0.0
    %2657 = vmatpush2.msra.mxu0 0.0
    %2658 = vmatprep.subr.mxu0 0.0
    %2659 = vmatpush2.msra.mxu0 0.0
    %2660 = vmatprep.subr.mxu0 0.0
    %2661 = vmatpush2.msra.mxu0 0.0
    %2662 = vmatprep.subr.mxu0 0.0
    %2663 = vmatpush2.msra.mxu0 0.0
    %2664 = vmatprep.subr.mxu0 0.0
    %2665 = vmatpush2.msra.mxu0 0.0
    %2666 = vmatprep.subr.mxu0 0.0
    %2667 = vmatpush2.msra.mxu0 0.0
    %2668 = vmatprep.subr.mxu0 0.0
    %2669 = vmatpush2.msra.mxu0 0.0
    %2670 = vmatprep.subr.mxu0 0.0
    %2671 = vmatpush2.msra.mxu0 0.0
    %2672 = vmatprep.subr.mxu0 0.0
    %2673 = vmatpush2.msra.mxu0 0.0
    %2674 = vmatprep.subr.mxu0 0.0
    %2675 = vmatpush2.msra.mxu0 0.0
    %2676 = vmatprep.subr.mxu0 0.0
    %2677 = vmatpush2.msra.mxu0 0.0
    %2678 = vmatprep.subr.mxu0 0.0
    %2679 = vmatpush2.msra.mxu0 0.0
    %2680 = vmatprep.subr.mxu0 0.0
    %2681 = vmatpush2.msra.mxu0 0.0
    %2682 = vmatprep.subr.mxu0 0.0
    %2683 = vmatpush2.msra.mxu0 0.0
    %2684 = vmatprep.subr.mxu0 0.0
    %2685 = vmatpush2.msra.mxu0 0.0
    %2686 = vmatprep.mubr.f32.mxu0 0.0
    %2687 = vmatmul.mubr.f32.gmra.mxu0 %v2620
    %v2688 = vpop.f32.mrf.mxu0
    %v2689 = vadd.f32 %v2617, %v2688
    %v2690 = vpop.f32.mrf.mxu0
    %2691 = vdwg.mxu0
    %v2692 = vsub.f32 0.0, %v2689
    %v2693 = vmul.f32 %v2692, 1.442695
    %v2694 = vpow.pop %v2693
    %v2695 = vadd.f32 %v2694, 1.0
    %v2696 = vrcp.pop %v2695
    %v2697 = vmul.f32 1.0, %v2696
    %v2698 = vmul.f32 %v2689, %v2697
    %v2699 = vld [vmem:[%s8 + $0xc0] sm:$0xff]
    %v2700 = vld [vmem:[%s8 + $0xc8] sm:$0xff]
    %v2701 = vld [vmem:[%s8 + $0xd0] sm:$0xff]
    %v2702 = vld [vmem:[%s8 + $0xd8] sm:$0xff]
    %v2703 = vlaneseq
    %v2704 = vshrl.u32 %v2703, 7
    %v2705 = vsub.s32 0, %v2704
    %v2706 = vrot.slane %v1588, %v2705
    %v2708 = vsel %vm669, %v2698, 0
    %2710 = vmatprep.subr.mxu0 0.0
    %2711 = vmatpush1.msra.mxu0 0.0
    %2712 = vmatprep.subr.mxu0 0.0
    %2713 = vmatpush1.msra.mxu0 0.0
    %2714 = vmatprep.subr.mxu0 0.0
    %2715 = vmatpush1.msra.mxu0 0.0
    %2716 = vmatprep.subr.mxu0 0.0
    %2717 = vmatpush1.msra.mxu0 0.0
    %2718 = vmatprep.subr.mxu0 0.0
    %2719 = vmatpush1.msra.mxu0 0.0
    %2720 = vmatprep.subr.mxu0 0.0
    %2721 = vmatpush1.msra.mxu0 0.0
    %2722 = vmatprep.subr.mxu0 0.0
    %2723 = vmatpush1.msra.mxu0 0.0
    %2724 = vmatprep.subr.mxu0 0.0
    %2725 = vmatpush1.msra.mxu0 0.0
    %2726 = vmatprep.subr.mxu0 0.0
    %2727 = vmatpush1.msra.mxu0 0.0
    %2728 = vmatprep.subr.mxu0 0.0
    %2729 = vmatpush1.msra.mxu0 0.0
    %2730 = vmatprep.subr.mxu0 0.0
    %2731 = vmatpush1.msra.mxu0 0.0
    %2732 = vmatprep.subr.mxu0 0.0
    %2733 = vmatpush1.msra.mxu0 0.0
    %2734 = vmatprep.subr.mxu0 0.0
    %2735 = vmatpush1.msra.mxu0 %v2702
    %2736 = vmatprep.subr.mxu0 0.0
    %2737 = vmatpush1.msra.mxu0 %v2701
    %2738 = vmatprep.subr.mxu0 0.0
    %2739 = vmatpush1.msra.mxu0 %v2700
    %2740 = vmatprep.subr.mxu0 0.0
    %2741 = vmatpush1.msra.mxu0 %v2699
    %2742 = vmatprep.subr.mxu0 0.0
    %2743 = vmatpush2.msra.mxu0 0.0
    %2744 = vmatprep.subr.mxu0 0.0
    %2745 = vmatpush2.msra.mxu0 0.0
    %2746 = vmatprep.subr.mxu0 0.0
    %2747 = vmatpush2.msra.mxu0 0.0
    %2748 = vmatprep.subr.mxu0 0.0
    %2749 = vmatpush2.msra.mxu0 0.0
    %2750 = vmatprep.subr.mxu0 0.0
    %2751 = vmatpush2.msra.mxu0 0.0
    %2752 = vmatprep.subr.mxu0 0.0
    %2753 = vmatpush2.msra.mxu0 0.0
    %2754 = vmatprep.subr.mxu0 0.0
    %2755 = vmatpush2.msra.mxu0 0.0
    %2756 = vmatprep.subr.mxu0 0.0
    %2757 = vmatpush2.msra.mxu0 0.0
    %2758 = vmatprep.subr.mxu0 0.0
    %2759 = vmatpush2.msra.mxu0 0.0
    %2760 = vmatprep.subr.mxu0 0.0
    %2761 = vmatpush2.msra.mxu0 0.0
    %2762 = vmatprep.subr.mxu0 0.0
    %2763 = vmatpush2.msra.mxu0 0.0
    %2764 = vmatprep.subr.mxu0 0.0
    %2765 = vmatpush2.msra.mxu0 0.0
    %2766 = vmatprep.subr.mxu0 0.0
    %2767 = vmatpush2.msra.mxu0 0.0
    %2768 = vmatprep.subr.mxu0 0.0
    %2769 = vmatpush2.msra.mxu0 0.0
    %2770 = vmatprep.subr.mxu0 0.0
    %2771 = vmatpush2.msra.mxu0 0.0
    %2772 = vmatprep.subr.mxu0 0.0
    %2773 = vmatpush2.msra.mxu0 0.0
    %2774 = vmatprep.mubr.f32.mxu0 0.0
    %2775 = vmatmul.mubr.f32.gmra.mxu0 %v2708
    %v2776 = vpop.f32.mrf.mxu0
    %v2777 = vadd.f32 %v2706, %v2776
    %v2778 = vpop.f32.mrf.mxu0
    %2779 = vdwg.mxu0
    %v2780 = vsel %vm669, %v2777, 0.0
    %v2781 = vrot.slane %v2780, 4
    %v2782 = vadd.f32 %v2780, %v2781
    %v2783 = vrot.slane %v2782, 2
    %v2784 = vadd.f32 %v2782, %v2783
    %v2785 = vrot.slane %v2784, 1
    %v2786 = vadd.f32 %v2784, %v2785
    %v2787 = vmul.f32 %v2786, 0.125
    %2789 = vrot.lane.b32.xlu0 %v2787, 32
    %v2790 = vpop.permute.xlu0 %2789
    %v2792 = vsel %vm669, %v1574, %v2790
    %v2793 = vld [vmem:[%s8 + $0xe0] sm:$0xff]
    %v2794 = vld [vmem:[%s8 + $0xe8] sm:$0xff]
    %v2795 = vld [vmem:[%s8 + $0xf0] sm:$0xff]
    %v2796 = vld [vmem:[%s8 + $0xf8] sm:$0xff]
    %v2797 = vld [vmem:[%s8 + $0x100] sm:$0xff]
    %v2798 = vld [vmem:[%s8 + $0x108] sm:$0xff]
    %v2799 = vld [vmem:[%s8 + $0x110] sm:$0xff]
    %v2800 = vld [vmem:[%s8 + $0x118] sm:$0xff]
    %v2802 = vsel %vm1132, %v2792, 0
    %2804 = vmatprep.subr.mxu0 0.0
    %2805 = vmatpush1.msra.mxu0 0.0
    %2806 = vmatprep.subr.mxu0 0.0
    %2807 = vmatpush1.msra.mxu0 0.0
    %2808 = vmatprep.subr.mxu0 0.0
    %2809 = vmatpush1.msra.mxu0 0.0
    %2810 = vmatprep.subr.mxu0 0.0
    %2811 = vmatpush1.msra.mxu0 0.0
    %2812 = vmatprep.subr.mxu0 0.0
    %2813 = vmatpush1.msra.mxu0 0.0
    %2814 = vmatprep.subr.mxu0 0.0
    %2815 = vmatpush1.msra.mxu0 0.0
    %2816 = vmatprep.subr.mxu0 0.0
    %2817 = vmatpush1.msra.mxu0 0.0
    %2818 = vmatprep.subr.mxu0 0.0
    %2819 = vmatpush1.msra.mxu0 0.0
    %2820 = vmatprep.subr.mxu0 0.0
    %2821 = vmatpush1.msra.mxu0 %v2800
    %2822 = vmatprep.subr.mxu0 0.0
    %2823 = vmatpush1.msra.mxu0 %v2799
    %2824 = vmatprep.subr.mxu0 0.0
    %2825 = vmatpush1.msra.mxu0 %v2798
    %2826 = vmatprep.subr.mxu0 0.0
    %2827 = vmatpush1.msra.mxu0 %v2797
    %2828 = vmatprep.subr.mxu0 0.0
    %2829 = vmatpush1.msra.mxu0 %v2796
    %2830 = vmatprep.subr.mxu0 0.0
    %2831 = vmatpush1.msra.mxu0 %v2795
    %2832 = vmatprep.subr.mxu0 0.0
    %2833 = vmatpush1.msra.mxu0 %v2794
    %2834 = vmatprep.subr.mxu0 0.0
    %2835 = vmatpush1.msra.mxu0 %v2793
    %2836 = vmatprep.subr.mxu0 0.0
    %2837 = vmatpush2.msra.mxu0 0.0
    %2838 = vmatprep.subr.mxu0 0.0
    %2839 = vmatpush2.msra.mxu0 0.0
    %2840 = vmatprep.subr.mxu0 0.0
    %2841 = vmatpush2.msra.mxu0 0.0
    %2842 = vmatprep.subr.mxu0 0.0
    %2843 = vmatpush2.msra.mxu0 0.0
    %2844 = vmatprep.subr.mxu0 0.0
    %2845 = vmatpush2.msra.mxu0 0.0
    %2846 = vmatprep.subr.mxu0 0.0
    %2847 = vmatpush2.msra.mxu0 0.0
    %2848 = vmatprep.subr.mxu0 0.0
    %2849 = vmatpush2.msra.mxu0 0.0
    %2850 = vmatprep.subr.mxu0 0.0
    %2851 = vmatpush2.msra.mxu0 0.0
    %2852 = vmatprep.subr.mxu0 0.0
    %2853 = vmatpush2.msra.mxu0 0.0
    %2854 = vmatprep.subr.mxu0 0.0
    %2855 = vmatpush2.msra.mxu0 0.0
    %2856 = vmatprep.subr.mxu0 0.0
    %2857 = vmatpush2.msra.mxu0 0.0
    %2858 = vmatprep.subr.mxu0 0.0
    %2859 = vmatpush2.msra.mxu0 0.0
    %2860 = vmatprep.subr.mxu0 0.0
    %2861 = vmatpush2.msra.mxu0 0.0
    %2862 = vmatprep.subr.mxu0 0.0
    %2863 = vmatpush2.msra.mxu0 0.0
    %2864 = vmatprep.subr.mxu0 0.0
    %2865 = vmatpush2.msra.mxu0 0.0
    %2866 = vmatprep.subr.mxu0 0.0
    %2867 = vmatpush2.msra.mxu0 0.0
    %2868 = vmatprep.mubr.f32.mxu0 0.0
    %2869 = vmatmul.mubr.f32.gmra.mxu0 %v2802
    %v2870 = vpop.f32.mrf.mxu0
    %v2871 = vadd.f32 %v1589, %v2870
    %v2872 = vpop.f32.mrf.mxu0
    %2873 = vdwg.mxu0
    %v2874 = vsub.f32 0.0, %v2871
    %v2875 = vmul.f32 %v2874, 1.442695
    %v2876 = vpow.pop %v2875
    %v2877 = vadd.f32 %v2876, 1.0
    %v2878 = vrcp.pop %v2877
    %v2879 = vmul.f32 1.0, %v2878
    %v2880 = vmul.f32 %v2871, %v2879
    %v2881 = vld [vmem:[%s8 + $0x120] sm:$0xff]
    %v2882 = vld [vmem:[%s8 + $0x128] sm:$0xff]
    %v2883 = vld [vmem:[%s8 + $0x130] sm:$0xff]
    %v2884 = vld [vmem:[%s8 + $0x138] sm:$0xff]
    %v2886 = vsel %vm669, %v2880, 0
    %2888 = vmatprep.subr.mxu0 0.0
    %2889 = vmatpush1.msra.mxu0 0.0
    %2890 = vmatprep.subr.mxu0 0.0
    %2891 = vmatpush1.msra.mxu0 0.0
    %2892 = vmatprep.subr.mxu0 0.0
    %2893 = vmatpush1.msra.mxu0 0.0
    %2894 = vmatprep.subr.mxu0 0.0
    %2895 = vmatpush1.msra.mxu0 0.0
    %2896 = vmatprep.subr.mxu0 0.0
    %2897 = vmatpush1.msra.mxu0 0.0
    %2898 = vmatprep.subr.mxu0 0.0
    %2899 = vmatpush1.msra.mxu0 0.0
    %2900 = vmatprep.subr.mxu0 0.0
    %2901 = vmatpush1.msra.mxu0 0.0
    %2902 = vmatprep.subr.mxu0 0.0
    %2903 = vmatpush1.msra.mxu0 0.0
    %2904 = vmatprep.subr.mxu0 0.0
    %2905 = vmatpush1.msra.mxu0 0.0
    %2906 = vmatprep.subr.mxu0 0.0
    %2907 = vmatpush1.msra.mxu0 0.0
    %2908 = vmatprep.subr.mxu0 0.0
    %2909 = vmatpush1.msra.mxu0 0.0
    %2910 = vmatprep.subr.mxu0 0.0
    %2911 = vmatpush1.msra.mxu0 0.0
    %2912 = vmatprep.subr.mxu0 0.0
    %2913 = vmatpush1.msra.mxu0 %v2884
    %2914 = vmatprep.subr.mxu0 0.0
    %2915 = vmatpush1.msra.mxu0 %v2883
    %2916 = vmatprep.subr.mxu0 0.0
    %2917 = vmatpush1.msra.mxu0 %v2882
    %2918 = vmatprep.subr.mxu0 0.0
    %2919 = vmatpush1.msra.mxu0 %v2881
    %2920 = vmatprep.subr.mxu0 0.0
    %2921 = vmatpush2.msra.mxu0 0.0
    %2922 = vmatprep.subr.mxu0 0.0
    %2923 = vmatpush2.msra.mxu0 0.0
    %2924 = vmatprep.subr.mxu0 0.0
    %2925 = vmatpush2.msra.mxu0 0.0
    %2926 = vmatprep.subr.mxu0 0.0
    %2927 = vmatpush2.msra.mxu0 0.0
    %2928 = vmatprep.subr.mxu0 0.0
    %2929 = vmatpush2.msra.mxu0 0.0
    %2930 = vmatprep.subr.mxu0 0.0
    %2931 = vmatpush2.msra.mxu0 0.0
    %2932 = vmatprep.subr.mxu0 0.0
    %2933 = vmatpush2.msra.mxu0 0.0
    %2934 = vmatprep.subr.mxu0 0.0
    %2935 = vmatpush2.msra.mxu0 0.0
    %2936 = vmatprep.subr.mxu0 0.0
    %2937 = vmatpush2.msra.mxu0 0.0
    %2938 = vmatprep.subr.mxu0 0.0
    %2939 = vmatpush2.msra.mxu0 0.0
    %2940 = vmatprep.subr.mxu0 0.0
    %2941 = vmatpush2.msra.mxu0 0.0
    %2942 = vmatprep.subr.mxu0 0.0
    %2943 = vmatpush2.msra.mxu0 0.0
    %2944 = vmatprep.subr.mxu0 0.0
    %2945 = vmatpush2.msra.mxu0 0.0
    %2946 = vmatprep.subr.mxu0 0.0
    %2947 = vmatpush2.msra.mxu0 0.0
    %2948 = vmatprep.subr.mxu0 0.0
    %2949 = vmatpush2.msra.mxu0 0.0
    %2950 = vmatprep.subr.mxu0 0.0
    %2951 = vmatpush2.msra.mxu0 0.0
    %2952 = vmatprep.mubr.f32.mxu0 0.0
    %2953 = vmatmul.mubr.f32.gmra.mxu0 %v2886
    %v2954 = vpop.f32.mrf.mxu0
    %v2955 = vadd.f32 0.0, %v2954
    %v2956 = vpop.f32.mrf.mxu0
    %2957 = vdwg.mxu0
    %2959 = vrot.lane.b32.xlu0 %v2587, 96
    %v2960 = vpop.permute.xlu0 %2959
    %v2962 = vadd.f32 %v1581, %v2960
    %v2963 = vld [vmem:[%s6 + $0x10] sm:$0x1]
    %v2964 = vld [vmem:[%s6 + $0x11] sm:$0x1]
    %v2965 = vld [vmem:[%s6 + $0x12] sm:$0x1]
    %v2966 = vld [vmem:[%s6 + $0x13] sm:$0x1]
    %v2967 = vld [vmem:[%s6 + $0x14] sm:$0x1]
    %v2968 = vld [vmem:[%s6 + $0x15] sm:$0x1]
    %v2969 = vld [vmem:[%s6 + $0x16] sm:$0x1]
    %v2970 = vld [vmem:[%s6 + $0x17] sm:$0x1]
    %v2972 = vcombine.high %v2962, %v2962
    %v2974 = vunpack.c.l.s4 1966171168
    %v2975 = vunpack.c.0.s8 %v2974
    %v2976 = vlaneseq
    %v2977 = vshrl.u32 %v2976, 7
    %v2978 = vsub.s32 %v2975, %v2977
    %v2979 = vrot.slane %v2962, %v2978
    %v2981 = vunpack.c.l.s4 1966171168
    %v2982 = vunpack.c.0.s8 %v2981
    %v2983 = vlaneseq
    %v2984 = vshrl.u32 %v2983, 7
    %v2985 = vsub.s32 %v2982, %v2984
    %v2986 = vrot.slane %v2972, %v2985
    %v2987 = vcombine.high %v2979, %v2979
    %v2988 = vcombine.high %v2986, %v2986
    %v2990 = vunpack.c.l.s4 1966171168
    %v2991 = vunpack.c.0.s8 %v2990
    %v2992 = vlaneseq
    %v2993 = vshrl.u32 %v2992, 7
    %v2994 = vsub.s32 %v2991, %v2993
    %v2995 = vrot.slane %v2979, %v2994
    %v2997 = vunpack.c.l.s4 1966171168
    %v2998 = vunpack.c.0.s8 %v2997
    %v2999 = vlaneseq
    %v3000 = vshrl.u32 %v2999, 7
    %v3001 = vsub.s32 %v2998, %v3000
    %v3002 = vrot.slane %v2986, %v3001
    %v3004 = vunpack.c.l.s4 1966171168
    %v3005 = vunpack.c.0.s8 %v3004
    %v3006 = vlaneseq
    %v3007 = vshrl.u32 %v3006, 7
    %v3008 = vsub.s32 %v3005, %v3007
    %v3009 = vrot.slane %v2987, %v3008
    %v3011 = vunpack.c.l.s4 1966171168
    %v3012 = vunpack.c.0.s8 %v3011
    %v3013 = vlaneseq
    %v3014 = vshrl.u32 %v3013, 7
    %v3015 = vsub.s32 %v3012, %v3014
    %v3016 = vrot.slane %v2988, %v3015
    %v3017 = vcombine.high %v2995, %v2995
    %v3018 = vcombine.high %v3002, %v3002
    %v3019 = vcombine.high %v3009, %v3009
    %v3020 = vcombine.high %v3016, %v3016
    %v3021 = vlaneseq
    %v3022 = vshrl.u32 %v3021, 7
    %v3023 = vsub.s32 0, %v3022
    %v3024 = vrot.slane %v2995, %v3023
    %v3025 = vlaneseq
    %v3026 = vshrl.u32 %v3025, 7
    %v3027 = vsub.s32 0, %v3026
    %v3028 = vrot.slane %v3009, %v3027
    %v3029 = vlaneseq
    %v3030 = vshrl.u32 %v3029, 7
    %v3031 = vsub.s32 0, %v3030
    %v3032 = vrot.slane %v3017, %v3031
    %v3033 = vlaneseq
    %v3034 = vshrl.u32 %v3033, 7
    %v3035 = vsub.s32 0, %v3034
    %v3036 = vrot.slane %v3019, %v3035
    %v3037 = vlaneseq
    %v3038 = vshrl.u32 %v3037, 7
    %v3039 = vsub.s32 0, %v3038
    %v3040 = vrot.slane %v3002, %v3039
    %v3041 = vlaneseq
    %v3042 = vshrl.u32 %v3041, 7
    %v3043 = vsub.s32 0, %v3042
    %v3044 = vrot.slane %v3016, %v3043
    %v3045 = vlaneseq
    %v3046 = vshrl.u32 %v3045, 7
    %v3047 = vsub.s32 0, %v3046
    %v3048 = vrot.slane %v3018, %v3047
    %v3049 = vlaneseq
    %v3050 = vshrl.u32 %v3049, 7
    %v3051 = vsub.s32 0, %v3050
    %v3052 = vrot.slane %v3020, %v3051
    %v3061 = vsub.f32 %v2962, %v3024
    %v3062 = vsub.f32 %v2962, %v3028
    %v3063 = vsub.f32 %v2962, %v3032
    %v3064 = vsub.f32 %v2962, %v3036
    %v3065 = vsub.f32 %v2962, %v3040
    %v3066 = vsub.f32 %v2962, %v3044
    %v3067 = vsub.f32 %v2962, %v3048
    %v3068 = vsub.f32 %v2962, %v3052
    %v3069 = vadd.f32 %v3061, 0.5
    %v3070 = vadd.f32 %v3062, 0.5
    %v3071 = vadd.f32 %v3063, 0.5
    %v3072 = vadd.f32 %v3064, 0.5
    %v3073 = vadd.f32 %v3065, 0.5
    %v3074 = vadd.f32 %v3066, 0.5
    %v3075 = vadd.f32 %v3067, 0.5
    %v3076 = vadd.f32 %v3068, 0.5
    %v3077 = vfloor.f32 %v3069
    %v3078 = vfloor.f32 %v3070
    %v3079 = vfloor.f32 %v3071
    %v3080 = vfloor.f32 %v3072
    %v3081 = vfloor.f32 %v3073
    %v3082 = vfloor.f32 %v3074
    %v3083 = vfloor.f32 %v3075
    %v3084 = vfloor.f32 %v3076
    %v3085 = vsub.f32 %v3061, %v3077
    %v3086 = vsub.f32 %v3062, %v3078
    %v3087 = vsub.f32 %v3063, %v3079
    %v3088 = vsub.f32 %v3064, %v3080
    %v3089 = vsub.f32 %v3065, %v3081
    %v3090 = vsub.f32 %v3066, %v3082
    %v3091 = vsub.f32 %v3067, %v3083
    %v3092 = vsub.f32 %v3068, %v3084
    %v3093 = vmul.f32 %v3085, %v3085
    %v3094 = vmul.f32 %v3086, %v3086
    %v3095 = vmul.f32 %v3087, %v3087
    %v3096 = vmul.f32 %v3088, %v3088
    %v3097 = vmul.f32 %v3089, %v3089
    %v3098 = vmul.f32 %v3090, %v3090
    %v3099 = vmul.f32 %v3091, %v3091
    %v3100 = vmul.f32 %v3092, %v3092
    %v3101 = vsel %vm183, %v3093, 0.0
    %3102 = vadd.xlane.f32.xlu0 %v3101
    %v3103 = vpop.xlane.xlu0 %3102
    %v3104 = vsel %vm183, %v3094, 0.0
    %3105 = vadd.xlane.f32.xlu0 %v3104
    %v3106 = vpop.xlane.xlu0 %3105
    %v3107 = vsel %vm183, %v3095, 0.0
    %3108 = vadd.xlane.f32.xlu0 %v3107
    %v3109 = vpop.xlane.xlu0 %3108
    %v3110 = vsel %vm183, %v3096, 0.0
    %3111 = vadd.xlane.f32.xlu0 %v3110
    %v3112 = vpop.xlane.xlu0 %3111
    %v3113 = vsel %vm183, %v3097, 0.0
    %3114 = vadd.xlane.f32.xlu0 %v3113
    %v3115 = vpop.xlane.xlu0 %3114
    %v3116 = vsel %vm183, %v3098, 0.0
    %3117 = vadd.xlane.f32.xlu0 %v3116
    %v3118 = vpop.xlane.xlu0 %3117
    %v3119 = vsel %vm183, %v3099, 0.0
    %3120 = vadd.xlane.f32.xlu0 %v3119
    %v3121 = vpop.xlane.xlu0 %3120
    %v3122 = vsel %vm183, %v3100, 0.0
    %3123 = vadd.xlane.f32.xlu0 %v3122
    %v3124 = vpop.xlane.xlu0 %3123
    %v3125 = vadd.f32 %v3103, 1e-30
    %v3126 = vadd.f32 %v3106, 1e-30
    %v3127 = vadd.f32 %v3109, 1e-30
    %v3128 = vadd.f32 %v3112, 1e-30
    %v3129 = vadd.f32 %v3115, 1e-30
    %v3130 = vadd.f32 %v3118, 1e-30
    %v3131 = vadd.f32 %v3121, 1e-30
    %v3132 = vadd.f32 %v3124, 1e-30
    %v3133 = vrsqrt.pop %v3125
    %v3134 = vrsqrt.pop %v3126
    %v3135 = vrsqrt.pop %v3127
    %v3136 = vrsqrt.pop %v3128
    %v3137 = vrsqrt.pop %v3129
    %v3138 = vrsqrt.pop %v3130
    %v3139 = vrsqrt.pop %v3131
    %v3140 = vrsqrt.pop %v3132
    %v3141 = vmul.f32 %v3085, %v3133
    %v3142 = vmul.f32 %v3086, %v3134
    %v3143 = vmul.f32 %v3087, %v3135
    %v3144 = vmul.f32 %v3088, %v3136
    %v3145 = vmul.f32 %v3089, %v3137
    %v3146 = vmul.f32 %v3090, %v3138
    %v3147 = vmul.f32 %v3091, %v3139
    %v3148 = vmul.f32 %v3092, %v3140
    %v3149 = vld [vmem:[%s9] sm:$0xff]
    %v3150 = vld [vmem:[%s9 + $0x8] sm:$0xff]
    %v3151 = vld [vmem:[%s9 + $0x10] sm:$0xff]
    %v3152 = vld [vmem:[%s9 + $0x18] sm:$0xff]
    %v3154 = vsel %vm669, %v2777, 0
    %3156 = vmatprep.subr.mxu0 0.0
    %3157 = vmatpush1.msra.mxu0 0.0
    %3158 = vmatprep.subr.mxu0 0.0
    %3159 = vmatpush1.msra.mxu0 0.0
    %3160 = vmatprep.subr.mxu0 0.0
    %3161 = vmatpush1.msra.mxu0 0.0
    %3162 = vmatprep.subr.mxu0 0.0
    %3163 = vmatpush1.msra.mxu0 0.0
    %3164 = vmatprep.subr.mxu0 0.0
    %3165 = vmatpush1.msra.mxu0 0.0
    %3166 = vmatprep.subr.mxu0 0.0
    %3167 = vmatpush1.msra.mxu0 0.0
    %3168 = vmatprep.subr.mxu0 0.0
    %3169 = vmatpush1.msra.mxu0 0.0
    %3170 = vmatprep.subr.mxu0 0.0
    %3171 = vmatpush1.msra.mxu0 0.0
    %3172 = vmatprep.subr.mxu0 0.0
    %3173 = vmatpush1.msra.mxu0 0.0
    %3174 = vmatprep.subr.mxu0 0.0
    %3175 = vmatpush1.msra.mxu0 0.0
    %3176 = vmatprep.subr.mxu0 0.0
    %3177 = vmatpush1.msra.mxu0 0.0
    %3178 = vmatprep.subr.mxu0 0.0
    %3179 = vmatpush1.msra.mxu0 0.0
    %3180 = vmatprep.subr.mxu0 0.0
    %3181 = vmatpush1.msra.mxu0 %v3152
    %3182 = vmatprep.subr.mxu0 0.0
    %3183 = vmatpush1.msra.mxu0 %v3151
    %3184 = vmatprep.subr.mxu0 0.0
    %3185 = vmatpush1.msra.mxu0 %v3150
    %3186 = vmatprep.subr.mxu0 0.0
    %3187 = vmatpush1.msra.mxu0 %v3149
    %3188 = vmatprep.subr.mxu0 0.0
    %3189 = vmatpush2.msra.mxu0 0.0
    %3190 = vmatprep.subr.mxu0 0.0
    %3191 = vmatpush2.msra.mxu0 0.0
    %3192 = vmatprep.subr.mxu0 0.0
    %3193 = vmatpush2.msra.mxu0 0.0
    %3194 = vmatprep.subr.mxu0 0.0
    %3195 = vmatpush2.msra.mxu0 0.0
    %3196 = vmatprep.subr.mxu0 0.0
    %3197 = vmatpush2.msra.mxu0 0.0
    %3198 = vmatprep.subr.mxu0 0.0
    %3199 = vmatpush2.msra.mxu0 0.0
    %3200 = vmatprep.subr.mxu0 0.0
    %3201 = vmatpush2.msra.mxu0 0.0
    %3202 = vmatprep.subr.mxu0 0.0
    %3203 = vmatpush2.msra.mxu0 0.0
    %3204 = vmatprep.subr.mxu0 0.0
    %3205 = vmatpush2.msra.mxu0 0.0
    %3206 = vmatprep.subr.mxu0 0.0
    %3207 = vmatpush2.msra.mxu0 0.0
    %3208 = vmatprep.subr.mxu0 0.0
    %3209 = vmatpush2.msra.mxu0 0.0
    %3210 = vmatprep.subr.mxu0 0.0
    %3211 = vmatpush2.msra.mxu0 0.0
    %3212 = vmatprep.subr.mxu0 0.0
    %3213 = vmatpush2.msra.mxu0 0.0
    %3214 = vmatprep.subr.mxu0 0.0
    %3215 = vmatpush2.msra.mxu0 0.0
    %3216 = vmatprep.subr.mxu0 0.0
    %3217 = vmatpush2.msra.mxu0 0.0
    %3218 = vmatprep.subr.mxu0 0.0
    %3219 = vmatpush2.msra.mxu0 0.0
    %3220 = vmatprep.mubr.f32.mxu0 0.0
    %3221 = vmatmul.mubr.f32.gmra.mxu0 %v3154
    %v3222 = vpop.f32.mrf.mxu0
    %v3223 = vadd.f32 0.0, %v3222
    %v3224 = vpop.f32.mrf.mxu0
    %3225 = vdwg.mxu0
    %v3227 = vcombine.high %v3223, %v3223
    %v3229 = vunpack.c.l.s4 1966171168
    %v3230 = vunpack.c.0.s8 %v3229
    %v3231 = vlaneseq
    %v3232 = vshrl.u32 %v3231, 7
    %v3233 = vsub.s32 %v3230, %v3232
    %v3234 = vrot.slane %v3223, %v3233
    %v3236 = vunpack.c.l.s4 1966171168
    %v3237 = vunpack.c.0.s8 %v3236
    %v3238 = vlaneseq
    %v3239 = vshrl.u32 %v3238, 7
    %v3240 = vsub.s32 %v3237, %v3239
    %v3241 = vrot.slane %v3227, %v3240
    %v3242 = vcombine.high %v3234, %v3234
    %v3243 = vcombine.high %v3241, %v3241
    %v3245 = vunpack.c.l.s4 1966171168
    %v3246 = vunpack.c.0.s8 %v3245
    %v3247 = vlaneseq
    %v3248 = vshrl.u32 %v3247, 7
    %v3249 = vsub.s32 %v3246, %v3248
    %v3250 = vrot.slane %v3234, %v3249
    %v3252 = vunpack.c.l.s4 1966171168
    %v3253 = vunpack.c.0.s8 %v3252
    %v3254 = vlaneseq
    %v3255 = vshrl.u32 %v3254, 7
    %v3256 = vsub.s32 %v3253, %v3255
    %v3257 = vrot.slane %v3241, %v3256
    %v3259 = vunpack.c.l.s4 1966171168
    %v3260 = vunpack.c.0.s8 %v3259
    %v3261 = vlaneseq
    %v3262 = vshrl.u32 %v3261, 7
    %v3263 = vsub.s32 %v3260, %v3262
    %v3264 = vrot.slane %v3242, %v3263
    %v3266 = vunpack.c.l.s4 1966171168
    %v3267 = vunpack.c.0.s8 %v3266
    %v3268 = vlaneseq
    %v3269 = vshrl.u32 %v3268, 7
    %v3270 = vsub.s32 %v3267, %v3269
    %v3271 = vrot.slane %v3243, %v3270
    %v3272 = vcombine.high %v3250, %v3250
    %v3273 = vcombine.high %v3257, %v3257
    %v3274 = vcombine.high %v3264, %v3264
    %v3275 = vcombine.high %v3271, %v3271
    %v3276 = vlaneseq
    %v3277 = vshrl.u32 %v3276, 7
    %v3278 = vsub.s32 0, %v3277
    %v3279 = vrot.slane %v3250, %v3278
    %v3280 = vlaneseq
    %v3281 = vshrl.u32 %v3280, 7
    %v3282 = vsub.s32 0, %v3281
    %v3283 = vrot.slane %v3264, %v3282
    %v3284 = vlaneseq
    %v3285 = vshrl.u32 %v3284, 7
    %v3286 = vsub.s32 0, %v3285
    %v3287 = vrot.slane %v3272, %v3286
    %v3288 = vlaneseq
    %v3289 = vshrl.u32 %v3288, 7
    %v3290 = vsub.s32 0, %v3289
    %v3291 = vrot.slane %v3274, %v3290
    %v3292 = vlaneseq
    %v3293 = vshrl.u32 %v3292, 7
    %v3294 = vsub.s32 0, %v3293
    %v3295 = vrot.slane %v3257, %v3294
    %v3296 = vlaneseq
    %v3297 = vshrl.u32 %v3296, 7
    %v3298 = vsub.s32 0, %v3297
    %v3299 = vrot.slane %v3271, %v3298
    %v3300 = vlaneseq
    %v3301 = vshrl.u32 %v3300, 7
    %v3302 = vsub.s32 0, %v3301
    %v3303 = vrot.slane %v3273, %v3302
    %v3304 = vlaneseq
    %v3305 = vshrl.u32 %v3304, 7
    %v3306 = vsub.s32 0, %v3305
    %v3307 = vrot.slane %v3275, %v3306
    %3308 = vrot.lane.b32.xlu0 %v3279, 96
    %v3309 = vpop.permute.xlu0 %3308
    %3310 = vrot.lane.b32.xlu0 %v3283, 96
    %v3311 = vpop.permute.xlu0 %3310
    %3312 = vrot.lane.b32.xlu0 %v3287, 96
    %v3313 = vpop.permute.xlu0 %3312
    %3314 = vrot.lane.b32.xlu0 %v3291, 96
    %v3315 = vpop.permute.xlu0 %3314
    %3316 = vrot.lane.b32.xlu0 %v3295, 96
    %v3317 = vpop.permute.xlu0 %3316
    %3318 = vrot.lane.b32.xlu0 %v3299, 96
    %v3319 = vpop.permute.xlu0 %3318
    %3320 = vrot.lane.b32.xlu0 %v3303, 96
    %v3321 = vpop.permute.xlu0 %3320
    %3322 = vrot.lane.b32.xlu0 %v3307, 96
    %v3323 = vpop.permute.xlu0 %3322
    %v3332 = vadd.f32 %v3223, %v3309
    %v3333 = vadd.f32 %v3223, %v3311
    %v3334 = vadd.f32 %v3223, %v3313
    %v3335 = vadd.f32 %v3223, %v3315
    %v3336 = vadd.f32 %v3223, %v3317
    %v3337 = vadd.f32 %v3223, %v3319
    %v3338 = vadd.f32 %v3223, %v3321
    %v3339 = vadd.f32 %v3223, %v3323
    %v3340 = vlaneseq
    %v3341 = vshrl.u32 %v3340, 7
    %v3342 = vsub.s32 0, %v3341
    %v3343 = vrot.slane %v2963, %v3342
    %v3344 = vmul.f32 %v3103, %v3343
    %v3345 = vmul.f32 %v3106, %v3343
    %v3346 = vmul.f32 %v3109, %v3343
    %v3347 = vmul.f32 %v3112, %v3343
    %v3348 = vmul.f32 %v3115, %v3343
    %v3349 = vmul.f32 %v3118, %v3343
    %v3350 = vmul.f32 %v3121, %v3343
    %v3351 = vmul.f32 %v3124, %v3343
    %v3352 = vadd.f32 %v3332, %v3344
    %v3353 = vadd.f32 %v3333, %v3345
    %v3354 = vadd.f32 %v3334, %v3346
    %v3355 = vadd.f32 %v3335, %v3347
    %v3356 = vadd.f32 %v3336, %v3348
    %v3357 = vadd.f32 %v3337, %v3349
    %v3358 = vadd.f32 %v3338, %v3350
    %v3359 = vadd.f32 %v3339, %v3351
    %v3360 = vlaneseq
    %v3361 = vshrl.u32 %v3360, 7
    %v3362 = vsub.s32 0, %v3361
    %v3363 = vrot.slane %v2964, %v3362
    %v3364 = vadd.f32 %v3352, %v3363
    %v3365 = vadd.f32 %v3353, %v3363
    %v3366 = vadd.f32 %v3354, %v3363
    %v3367 = vadd.f32 %v3355, %v3363
    %v3368 = vadd.f32 %v3356, %v3363
    %v3369 = vadd.f32 %v3357, %v3363
    %v3370 = vadd.f32 %v3358, %v3363
    %v3371 = vadd.f32 %v3359, %v3363
    %v3372 = vsub.f32 0.0, %v3364
    %v3373 = vsub.f32 0.0, %v3365
    %v3374 = vsub.f32 0.0, %v3366
    %v3375 = vsub.f32 0.0, %v3367
    %v3376 = vsub.f32 0.0, %v3368
    %v3377 = vsub.f32 0.0, %v3369
    %v3378 = vsub.f32 0.0, %v3370
    %v3379 = vsub.f32 0.0, %v3371
    %v3380 = vmul.f32 %v3372, 1.442695
    %v3381 = vpow.pop %v3380
    %v3382 = vmul.f32 %v3373, 1.442695
    %v3383 = vpow.pop %v3382
    %v3384 = vmul.f32 %v3374, 1.442695
    %v3385 = vpow.pop %v3384
    %v3386 = vmul.f32 %v3375, 1.442695
    %v3387 = vpow.pop %v3386
    %v3388 = vmul.f32 %v3376, 1.442695
    %v3389 = vpow.pop %v3388
    %v3390 = vmul.f32 %v3377, 1.442695
    %v3391 = vpow.pop %v3390
    %v3392 = vmul.f32 %v3378, 1.442695
    %v3393 = vpow.pop %v3392
    %v3394 = vmul.f32 %v3379, 1.442695
    %v3395 = vpow.pop %v3394
    %v3396 = vadd.f32 %v3381, 1.0
    %v3397 = vadd.f32 %v3383, 1.0
    %v3398 = vadd.f32 %v3385, 1.0
    %v3399 = vadd.f32 %v3387, 1.0
    %v3400 = vadd.f32 %v3389, 1.0
    %v3401 = vadd.f32 %v3391, 1.0
    %v3402 = vadd.f32 %v3393, 1.0
    %v3403 = vadd.f32 %v3395, 1.0
    %v3404 = vrcp.pop %v3396
    %v3405 = vmul.f32 1.0, %v3404
    %v3406 = vrcp.pop %v3397
    %v3407 = vmul.f32 1.0, %v3406
    %v3408 = vrcp.pop %v3398
    %v3409 = vmul.f32 1.0, %v3408
    %v3410 = vrcp.pop %v3399
    %v3411 = vmul.f32 1.0, %v3410
    %v3412 = vrcp.pop %v3400
    %v3413 = vmul.f32 1.0, %v3412
    %v3414 = vrcp.pop %v3401
    %v3415 = vmul.f32 1.0, %v3414
    %v3416 = vrcp.pop %v3402
    %v3417 = vmul.f32 1.0, %v3416
    %v3418 = vrcp.pop %v3403
    %v3419 = vmul.f32 1.0, %v3418
    %v3420 = vmul.f32 %v3364, %v3405
    %v3421 = vmul.f32 %v3365, %v3407
    %v3422 = vmul.f32 %v3366, %v3409
    %v3423 = vmul.f32 %v3367, %v3411
    %v3424 = vmul.f32 %v3368, %v3413
    %v3425 = vmul.f32 %v3369, %v3415
    %v3426 = vmul.f32 %v3370, %v3417
    %v3427 = vmul.f32 %v3371, %v3419
    %v3428 = vld [vmem:[%s9 + $0x20] sm:$0xff]
    %v3429 = vld [vmem:[%s9 + $0x28] sm:$0xff]
    %v3430 = vld [vmem:[%s9 + $0x30] sm:$0xff]
    %v3431 = vld [vmem:[%s9 + $0x38] sm:$0xff]
    %v3432 = vlaneseq
    %v3433 = vshrl.u32 %v3432, 7
    %v3434 = vsub.s32 0, %v3433
    %v3435 = vrot.slane %v2965, %v3434
    %v3437 = vsel %vm669, %v3420, 0
    %v3440 = vsel %vm669, %v3421, 0
    %v3443 = vsel %vm669, %v3422, 0
    %v3446 = vsel %vm669, %v3423, 0
    %v3449 = vsel %vm669, %v3424, 0
    %v3452 = vsel %vm669, %v3425, 0
    %v3455 = vsel %vm669, %v3426, 0
    %v3458 = vsel %vm669, %v3427, 0
    %3460 = vmatprep.subr.mxu0 0.0
    %3461 = vmatpush1.msra.mxu0 0.0
    %3462 = vmatprep.subr.mxu0 0.0
    %3463 = vmatpush1.msra.mxu0 0.0
    %3464 = vmatprep.subr.mxu0 0.0
    %3465 = vmatpush1.msra.mxu0 0.0
    %3466 = vmatprep.subr.mxu0 0.0
    %3467 = vmatpush1.msra.mxu0 0.0
    %3468 = vmatprep.subr.mxu0 0.0
    %3469 = vmatpush1.msra.mxu0 0.0
    %3470 = vmatprep.subr.mxu0 0.0
    %3471 = vmatpush1.msra.mxu0 0.0
    %3472 = vmatprep.subr.mxu0 0.0
    %3473 = vmatpush1.msra.mxu0 0.0
    %3474 = vmatprep.subr.mxu0 0.0
    %3475 = vmatpush1.msra.mxu0 0.0
    %3476 = vmatprep.subr.mxu0 0.0
    %3477 = vmatpush1.msra.mxu0 0.0
    %3478 = vmatprep.subr.mxu0 0.0
    %3479 = vmatpush1.msra.mxu0 0.0
    %3480 = vmatprep.subr.mxu0 0.0
    %3481 = vmatpush1.msra.mxu0 0.0
    %3482 = vmatprep.subr.mxu0 0.0
    %3483 = vmatpush1.msra.mxu0 0.0
    %3484 = vmatprep.subr.mxu0 0.0
    %3485 = vmatpush1.msra.mxu0 %v3431
    %3486 = vmatprep.subr.mxu0 0.0
    %3487 = vmatpush1.msra.mxu0 %v3430
    %3488 = vmatprep.subr.mxu0 0.0
    %3489 = vmatpush1.msra.mxu0 %v3429
    %3490 = vmatprep.subr.mxu0 0.0
    %3491 = vmatpush1.msra.mxu0 %v3428
    %3492 = vmatprep.subr.mxu0 0.0
    %3493 = vmatpush2.msra.mxu0 0.0
    %3494 = vmatprep.subr.mxu0 0.0
    %3495 = vmatpush2.msra.mxu0 0.0
    %3496 = vmatprep.subr.mxu0 0.0
    %3497 = vmatpush2.msra.mxu0 0.0
    %3498 = vmatprep.subr.mxu0 0.0
    %3499 = vmatpush2.msra.mxu0 0.0
    %3500 = vmatprep.subr.mxu0 0.0
    %3501 = vmatpush2.msra.mxu0 0.0
    %3502 = vmatprep.subr.mxu0 0.0
    %3503 = vmatpush2.msra.mxu0 0.0
    %3504 = vmatprep.subr.mxu0 0.0
    %3505 = vmatpush2.msra.mxu0 0.0
    %3506 = vmatprep.subr.mxu0 0.0
    %3507 = vmatpush2.msra.mxu0 0.0
    %3508 = vmatprep.subr.mxu0 0.0
    %3509 = vmatpush2.msra.mxu0 0.0
    %3510 = vmatprep.subr.mxu0 0.0
    %3511 = vmatpush2.msra.mxu0 0.0
    %3512 = vmatprep.subr.mxu0 0.0
    %3513 = vmatpush2.msra.mxu0 0.0
    %3514 = vmatprep.subr.mxu0 0.0
    %3515 = vmatpush2.msra.mxu0 0.0
    %3516 = vmatprep.subr.mxu0 0.0
    %3517 = vmatpush2.msra.mxu0 0.0
    %3518 = vmatprep.subr.mxu0 0.0
    %3519 = vmatpush2.msra.mxu0 0.0
    %3520 = vmatprep.subr.mxu0 0.0
    %3521 = vmatpush2.msra.mxu0 0.0
    %3522 = vmatprep.subr.mxu0 0.0
    %3523 = vmatpush2.msra.mxu0 0.0
    %3524 = vmatprep.mubr.f32.mxu0 0.0
    %3525 = vmatmul.mubr.f32.gmra.mxu0 %v3437
    %v3526 = vpop.f32.mrf.mxu0
    %v3527 = vadd.f32 %v3435, %v3526
    %v3528 = vpop.f32.mrf.mxu0
    %3529 = vmatprep.mubr.f32.mxu0 0.0
    %3530 = vmatmul.mubr.f32.gmra.mxu0 %v3440
    %v3531 = vpop.f32.mrf.mxu0
    %v3532 = vadd.f32 %v3435, %v3531
    %v3533 = vpop.f32.mrf.mxu0
    %3534 = vmatprep.mubr.f32.mxu0 0.0
    %3535 = vmatmul.mubr.f32.gmra.mxu0 %v3443
    %v3536 = vpop.f32.mrf.mxu0
    %v3537 = vadd.f32 %v3435, %v3536
    %v3538 = vpop.f32.mrf.mxu0
    %3539 = vmatprep.mubr.f32.mxu0 0.0
    %3540 = vmatmul.mubr.f32.gmra.mxu0 %v3446
    %v3541 = vpop.f32.mrf.mxu0
    %v3542 = vadd.f32 %v3435, %v3541
    %v3543 = vpop.f32.mrf.mxu0
    %3544 = vmatprep.mubr.f32.mxu0 0.0
    %3545 = vmatmul.mubr.f32.gmra.mxu0 %v3449
    %v3546 = vpop.f32.mrf.mxu0
    %v3547 = vadd.f32 %v3435, %v3546
    %v3548 = vpop.f32.mrf.mxu0
    %3549 = vmatprep.mubr.f32.mxu0 0.0
    %3550 = vmatmul.mubr.f32.gmra.mxu0 %v3452
    %v3551 = vpop.f32.mrf.mxu0
    %v3552 = vadd.f32 %v3435, %v3551
    %v3553 = vpop.f32.mrf.mxu0
    %3554 = vmatprep.mubr.f32.mxu0 0.0
    %3555 = vmatmul.mubr.f32.gmra.mxu0 %v3455
    %v3556 = vpop.f32.mrf.mxu0
    %v3557 = vadd.f32 %v3435, %v3556
    %v3558 = vpop.f32.mrf.mxu0
    %3559 = vmatprep.mubr.f32.mxu0 0.0
    %3560 = vmatmul.mubr.f32.gmra.mxu0 %v3458
    %v3561 = vpop.f32.mrf.mxu0
    %v3562 = vadd.f32 %v3435, %v3561
    %v3563 = vpop.f32.mrf.mxu0
    %3564 = vdwg.mxu0
    %v3565 = vsub.f32 0.0, %v3527
    %v3566 = vsub.f32 0.0, %v3532
    %v3567 = vsub.f32 0.0, %v3537
    %v3568 = vsub.f32 0.0, %v3542
    %v3569 = vsub.f32 0.0, %v3547
    %v3570 = vsub.f32 0.0, %v3552
    %v3571 = vsub.f32 0.0, %v3557
    %v3572 = vsub.f32 0.0, %v3562
    %v3573 = vmul.f32 %v3565, 1.442695
    %v3574 = vpow.pop %v3573
    %v3575 = vmul.f32 %v3566, 1.442695
    %v3576 = vpow.pop %v3575
    %v3577 = vmul.f32 %v3567, 1.442695
    %v3578 = vpow.pop %v3577
    %v3579 = vmul.f32 %v3568, 1.442695
    %v3580 = vpow.pop %v3579
    %v3581 = vmul.f32 %v3569, 1.442695
    %v3582 = vpow.pop %v3581
    %v3583 = vmul.f32 %v3570, 1.442695
    %v3584 = vpow.pop %v3583
    %v3585 = vmul.f32 %v3571, 1.442695
    %v3586 = vpow.pop %v3585
    %v3587 = vmul.f32 %v3572, 1.442695
    %v3588 = vpow.pop %v3587
    %v3589 = vadd.f32 %v3574, 1.0
    %v3590 = vadd.f32 %v3576, 1.0
    %v3591 = vadd.f32 %v3578, 1.0
    %v3592 = vadd.f32 %v3580, 1.0
    %v3593 = vadd.f32 %v3582, 1.0
    %v3594 = vadd.f32 %v3584, 1.0
    %v3595 = vadd.f32 %v3586, 1.0
    %v3596 = vadd.f32 %v3588, 1.0
    %v3597 = vrcp.pop %v3589
    %v3598 = vmul.f32 1.0, %v3597
    %v3599 = vrcp.pop %v3590
    %v3600 = vmul.f32 1.0, %v3599
    %v3601 = vrcp.pop %v3591
    %v3602 = vmul.f32 1.0, %v3601
    %v3603 = vrcp.pop %v3592
    %v3604 = vmul.f32 1.0, %v3603
    %v3605 = vrcp.pop %v3593
    %v3606 = vmul.f32 1.0, %v3605
    %v3607 = vrcp.pop %v3594
    %v3608 = vmul.f32 1.0, %v3607
    %v3609 = vrcp.pop %v3595
    %v3610 = vmul.f32 1.0, %v3609
    %v3611 = vrcp.pop %v3596
    %v3612 = vmul.f32 1.0, %v3611
    %v3613 = vmul.f32 %v3527, %v3598
    %v3614 = vmul.f32 %v3532, %v3600
    %v3615 = vmul.f32 %v3537, %v3602
    %v3616 = vmul.f32 %v3542, %v3604
    %v3617 = vmul.f32 %v3547, %v3606
    %v3618 = vmul.f32 %v3552, %v3608
    %v3619 = vmul.f32 %v3557, %v3610
    %v3620 = vmul.f32 %v3562, %v3612
    %v3621 = vld [vmem:[%s9 + $0x40] sm:$0xff]
    %v3622 = vld [vmem:[%s9 + $0x48] sm:$0xff]
    %v3623 = vld [vmem:[%s9 + $0x50] sm:$0xff]
    %v3624 = vld [vmem:[%s9 + $0x58] sm:$0xff]
    %v3625 = vlaneseq
    %v3626 = vshrl.u32 %v3625, 7
    %v3627 = vsub.s32 0, %v3626
    %v3628 = vrot.slane %v2966, %v3627
    %v3630 = vsel %vm669, %v3613, 0
    %v3633 = vsel %vm669, %v3614, 0
    %v3636 = vsel %vm669, %v3615, 0
    %v3639 = vsel %vm669, %v3616, 0
    %v3642 = vsel %vm669, %v3617, 0
    %v3645 = vsel %vm669, %v3618, 0
    %v3648 = vsel %vm669, %v3619, 0
    %v3651 = vsel %vm669, %v3620, 0
    %3653 = vmatprep.subr.mxu0 0.0
    %3654 = vmatpush1.msra.mxu0 0.0
    %3655 = vmatprep.subr.mxu0 0.0
    %3656 = vmatpush1.msra.mxu0 0.0
    %3657 = vmatprep.subr.mxu0 0.0
    %3658 = vmatpush1.msra.mxu0 0.0
    %3659 = vmatprep.subr.mxu0 0.0
    %3660 = vmatpush1.msra.mxu0 0.0
    %3661 = vmatprep.subr.mxu0 0.0
    %3662 = vmatpush1.msra.mxu0 0.0
    %3663 = vmatprep.subr.mxu0 0.0
    %3664 = vmatpush1.msra.mxu0 0.0
    %3665 = vmatprep.subr.mxu0 0.0
    %3666 = vmatpush1.msra.mxu0 0.0
    %3667 = vmatprep.subr.mxu0 0.0
    %3668 = vmatpush1.msra.mxu0 0.0
    %3669 = vmatprep.subr.mxu0 0.0
    %3670 = vmatpush1.msra.mxu0 0.0
    %3671 = vmatprep.subr.mxu0 0.0
    %3672 = vmatpush1.msra.mxu0 0.0
    %3673 = vmatprep.subr.mxu0 0.0
    %3674 = vmatpush1.msra.mxu0 0.0
    %3675 = vmatprep.subr.mxu0 0.0
    %3676 = vmatpush1.msra.mxu0 0.0
    %3677 = vmatprep.subr.mxu0 0.0
    %3678 = vmatpush1.msra.mxu0 %v3624
    %3679 = vmatprep.subr.mxu0 0.0
    %3680 = vmatpush1.msra.mxu0 %v3623
    %3681 = vmatprep.subr.mxu0 0.0
    %3682 = vmatpush1.msra.mxu0 %v3622
    %3683 = vmatprep.subr.mxu0 0.0
    %3684 = vmatpush1.msra.mxu0 %v3621
    %3685 = vmatprep.subr.mxu0 0.0
    %3686 = vmatpush2.msra.mxu0 0.0
    %3687 = vmatprep.subr.mxu0 0.0
    %3688 = vmatpush2.msra.mxu0 0.0
    %3689 = vmatprep.subr.mxu0 0.0
    %3690 = vmatpush2.msra.mxu0 0.0
    %3691 = vmatprep.subr.mxu0 0.0
    %3692 = vmatpush2.msra.mxu0 0.0
    %3693 = vmatprep.subr.mxu0 0.0
    %3694 = vmatpush2.msra.mxu0 0.0
    %3695 = vmatprep.subr.mxu0 0.0
    %3696 = vmatpush2.msra.mxu0 0.0
    %3697 = vmatprep.subr.mxu0 0.0
    %3698 = vmatpush2.msra.mxu0 0.0
    %3699 = vmatprep.subr.mxu0 0.0
    %3700 = vmatpush2.msra.mxu0 0.0
    %3701 = vmatprep.subr.mxu0 0.0
    %3702 = vmatpush2.msra.mxu0 0.0
    %3703 = vmatprep.subr.mxu0 0.0
    %3704 = vmatpush2.msra.mxu0 0.0
    %3705 = vmatprep.subr.mxu0 0.0
    %3706 = vmatpush2.msra.mxu0 0.0
    %3707 = vmatprep.subr.mxu0 0.0
    %3708 = vmatpush2.msra.mxu0 0.0
    %3709 = vmatprep.subr.mxu0 0.0
    %3710 = vmatpush2.msra.mxu0 0.0
    %3711 = vmatprep.subr.mxu0 0.0
    %3712 = vmatpush2.msra.mxu0 0.0
    %3713 = vmatprep.subr.mxu0 0.0
    %3714 = vmatpush2.msra.mxu0 0.0
    %3715 = vmatprep.subr.mxu0 0.0
    %3716 = vmatpush2.msra.mxu0 0.0
    %3717 = vmatprep.mubr.f32.mxu0 0.0
    %3718 = vmatmul.mubr.f32.gmra.mxu0 %v3630
    %v3719 = vpop.f32.mrf.mxu0
    %v3720 = vadd.f32 %v3628, %v3719
    %v3721 = vpop.f32.mrf.mxu0
    %3722 = vmatprep.mubr.f32.mxu0 0.0
    %3723 = vmatmul.mubr.f32.gmra.mxu0 %v3633
    %v3724 = vpop.f32.mrf.mxu0
    %v3725 = vadd.f32 %v3628, %v3724
    %v3726 = vpop.f32.mrf.mxu0
    %3727 = vmatprep.mubr.f32.mxu0 0.0
    %3728 = vmatmul.mubr.f32.gmra.mxu0 %v3636
    %v3729 = vpop.f32.mrf.mxu0
    %v3730 = vadd.f32 %v3628, %v3729
    %v3731 = vpop.f32.mrf.mxu0
    %3732 = vmatprep.mubr.f32.mxu0 0.0
    %3733 = vmatmul.mubr.f32.gmra.mxu0 %v3639
    %v3734 = vpop.f32.mrf.mxu0
    %v3735 = vadd.f32 %v3628, %v3734
    %v3736 = vpop.f32.mrf.mxu0
    %3737 = vmatprep.mubr.f32.mxu0 0.0
    %3738 = vmatmul.mubr.f32.gmra.mxu0 %v3642
    %v3739 = vpop.f32.mrf.mxu0
    %v3740 = vadd.f32 %v3628, %v3739
    %v3741 = vpop.f32.mrf.mxu0
    %3742 = vmatprep.mubr.f32.mxu0 0.0
    %3743 = vmatmul.mubr.f32.gmra.mxu0 %v3645
    %v3744 = vpop.f32.mrf.mxu0
    %v3745 = vadd.f32 %v3628, %v3744
    %v3746 = vpop.f32.mrf.mxu0
    %3747 = vmatprep.mubr.f32.mxu0 0.0
    %3748 = vmatmul.mubr.f32.gmra.mxu0 %v3648
    %v3749 = vpop.f32.mrf.mxu0
    %v3750 = vadd.f32 %v3628, %v3749
    %v3751 = vpop.f32.mrf.mxu0
    %3752 = vmatprep.mubr.f32.mxu0 0.0
    %3753 = vmatmul.mubr.f32.gmra.mxu0 %v3651
    %v3754 = vpop.f32.mrf.mxu0
    %v3755 = vadd.f32 %v3628, %v3754
    %v3756 = vpop.f32.mrf.mxu0
    %3757 = vdwg.mxu0
    %v3758 = vsub.f32 0.0, %v3720
    %v3759 = vsub.f32 0.0, %v3725
    %v3760 = vsub.f32 0.0, %v3730
    %v3761 = vsub.f32 0.0, %v3735
    %v3762 = vsub.f32 0.0, %v3740
    %v3763 = vsub.f32 0.0, %v3745
    %v3764 = vsub.f32 0.0, %v3750
    %v3765 = vsub.f32 0.0, %v3755
    %v3766 = vmul.f32 %v3758, 1.442695
    %v3767 = vpow.pop %v3766
    %v3768 = vmul.f32 %v3759, 1.442695
    %v3769 = vpow.pop %v3768
    %v3770 = vmul.f32 %v3760, 1.442695
    %v3771 = vpow.pop %v3770
    %v3772 = vmul.f32 %v3761, 1.442695
    %v3773 = vpow.pop %v3772
    %v3774 = vmul.f32 %v3762, 1.442695
    %v3775 = vpow.pop %v3774
    %v3776 = vmul.f32 %v3763, 1.442695
    %v3777 = vpow.pop %v3776
    %v3778 = vmul.f32 %v3764, 1.442695
    %v3779 = vpow.pop %v3778
    %v3780 = vmul.f32 %v3765, 1.442695
    %v3781 = vpow.pop %v3780
    %v3782 = vadd.f32 %v3767, 1.0
    %v3783 = vadd.f32 %v3769, 1.0
    %v3784 = vadd.f32 %v3771, 1.0
    %v3785 = vadd.f32 %v3773, 1.0
    %v3786 = vadd.f32 %v3775, 1.0
    %v3787 = vadd.f32 %v3777, 1.0
    %v3788 = vadd.f32 %v3779, 1.0
    %v3789 = vadd.f32 %v3781, 1.0
    %v3790 = vrcp.pop %v3782
    %v3791 = vmul.f32 1.0, %v3790
    %v3792 = vrcp.pop %v3783
    %v3793 = vmul.f32 1.0, %v3792
    %v3794 = vrcp.pop %v3784
    %v3795 = vmul.f32 1.0, %v3794
    %v3796 = vrcp.pop %v3785
    %v3797 = vmul.f32 1.0, %v3796
    %v3798 = vrcp.pop %v3786
    %v3799 = vmul.f32 1.0, %v3798
    %v3800 = vrcp.pop %v3787
    %v3801 = vmul.f32 1.0, %v3800
    %v3802 = vrcp.pop %v3788
    %v3803 = vmul.f32 1.0, %v3802
    %v3804 = vrcp.pop %v3789
    %v3805 = vmul.f32 1.0, %v3804
    %v3806 = vmul.f32 %v3720, %v3791
    %v3807 = vmul.f32 %v3725, %v3793
    %v3808 = vmul.f32 %v3730, %v3795
    %v3809 = vmul.f32 %v3735, %v3797
    %v3810 = vmul.f32 %v3740, %v3799
    %v3811 = vmul.f32 %v3745, %v3801
    %v3812 = vmul.f32 %v3750, %v3803
    %v3813 = vmul.f32 %v3755, %v3805
    %v3814 = vlaneseq
    %v3815 = vshrl.u32 %v3814, 7
    %v3816 = vsub.s32 0, %v3815
    %v3817 = vrot.slane %v2967, %v3816
    %v3818 = vmul.f32 %v3806, %v3817
    %v3819 = vmul.f32 %v3807, %v3817
    %v3820 = vmul.f32 %v3808, %v3817
    %v3821 = vmul.f32 %v3809, %v3817
    %v3822 = vmul.f32 %v3810, %v3817
    %v3823 = vmul.f32 %v3811, %v3817
    %v3824 = vmul.f32 %v3812, %v3817
    %v3825 = vmul.f32 %v3813, %v3817
    %v3826 = vsel %vm669, %v3818, 0.0
    %3827 = vadd.xlane.f32.xlu0 %v3826
    %v3828 = vpop.xlane.xlu0 %3827
    %v3829 = vsel %vm669, %v3819, 0.0
    %3830 = vadd.xlane.f32.xlu0 %v3829
    %v3831 = vpop.xlane.xlu0 %3830
    %v3832 = vsel %vm669, %v3820, 0.0
    %3833 = vadd.xlane.f32.xlu0 %v3832
    %v3834 = vpop.xlane.xlu0 %3833
    %v3835 = vsel %vm669, %v3821, 0.0
    %3836 = vadd.xlane.f32.xlu0 %v3835
    %v3837 = vpop.xlane.xlu0 %3836
    %v3838 = vsel %vm669, %v3822, 0.0
    %3839 = vadd.xlane.f32.xlu0 %v3838
    %v3840 = vpop.xlane.xlu0 %3839
    %v3841 = vsel %vm669, %v3823, 0.0
    %3842 = vadd.xlane.f32.xlu0 %v3841
    %v3843 = vpop.xlane.xlu0 %3842
    %v3844 = vsel %vm669, %v3824, 0.0
    %3845 = vadd.xlane.f32.xlu0 %v3844
    %v3846 = vpop.xlane.xlu0 %3845
    %v3847 = vsel %vm669, %v3825, 0.0
    %3848 = vadd.xlane.f32.xlu0 %v3847
    %v3849 = vpop.xlane.xlu0 %3848
    %v3850 = vmul.f32 %v3828, %v3141
    %v3851 = vmul.f32 %v3831, %v3142
    %v3852 = vmul.f32 %v3834, %v3143
    %v3853 = vmul.f32 %v3837, %v3144
    %v3854 = vmul.f32 %v3840, %v3145
    %v3855 = vmul.f32 %v3843, %v3146
    %v3856 = vmul.f32 %v3846, %v3147
    %v3857 = vmul.f32 %v3849, %v3148
    %3866 = vrot.lane.b32.xlu0 %v3850, 32
    %v3867 = vpop.permute.xlu0 %3866
    %3868 = vrot.lane.b32.xlu0 %v3851, 32
    %v3869 = vpop.permute.xlu0 %3868
    %3870 = vrot.lane.b32.xlu0 %v3852, 32
    %v3871 = vpop.permute.xlu0 %3870
    %3872 = vrot.lane.b32.xlu0 %v3853, 32
    %v3873 = vpop.permute.xlu0 %3872
    %3874 = vrot.lane.b32.xlu0 %v3854, 32
    %v3875 = vpop.permute.xlu0 %3874
    %3876 = vrot.lane.b32.xlu0 %v3855, 32
    %v3877 = vpop.permute.xlu0 %3876
    %3878 = vrot.lane.b32.xlu0 %v3856, 32
    %v3879 = vpop.permute.xlu0 %3878
    %3880 = vrot.lane.b32.xlu0 %v3857, 32
    %v3881 = vpop.permute.xlu0 %3880
    %v3890 = vsel %vm669, %v3613, %v3867
    %v3891 = vsel %vm669, %v3614, %v3869
    %v3892 = vsel %vm669, %v3615, %v3871
    %v3893 = vsel %vm669, %v3616, %v3873
    %v3894 = vsel %vm669, %v3617, %v3875
    %v3895 = vsel %vm669, %v3618, %v3877
    %v3896 = vsel %vm669, %v3619, %v3879
    %v3897 = vsel %vm669, %v3620, %v3881
    %3898 = vmatprep.subr.mxu0 0.0
    %3899 = vmatpush1.msra.mxu0 0.0
    %3900 = vmatprep.subr.mxu0 0.0
    %3901 = vmatpush1.msra.mxu0 0.0
    %3902 = vmatprep.subr.mxu0 0.0
    %3903 = vmatpush1.msra.mxu0 0.0
    %3904 = vmatprep.subr.mxu0 0.0
    %3905 = vmatpush1.msra.mxu0 0.0
    %3906 = vmatprep.subr.mxu0 0.0
    %3907 = vmatpush1.msra.mxu0 0.0
    %3908 = vmatprep.subr.mxu0 0.0
    %3909 = vmatpush1.msra.mxu0 0.0
    %3910 = vmatprep.subr.mxu0 0.0
    %3911 = vmatpush1.msra.mxu0 0.0
    %3912 = vmatprep.subr.mxu0 0.0
    %3913 = vmatpush1.msra.mxu0 0.0
    %3914 = vmatprep.subr.mxu0 0.0
    %3915 = vmatpush1.msra.mxu0 %v3897
    %3916 = vmatprep.subr.mxu0 0.0
    %3917 = vmatpush1.msra.mxu0 %v3896
    %3918 = vmatprep.subr.mxu0 0.0
    %3919 = vmatpush1.msra.mxu0 %v3895
    %3920 = vmatprep.subr.mxu0 0.0
    %3921 = vmatpush1.msra.mxu0 %v3894
    %3922 = vmatprep.subr.mxu0 0.0
    %3923 = vmatpush1.msra.mxu0 %v3893
    %3924 = vmatprep.subr.mxu0 0.0
    %3925 = vmatpush1.msra.mxu0 %v3892
    %3926 = vmatprep.subr.mxu0 0.0
    %3927 = vmatpush1.msra.mxu0 %v3891
    %3928 = vmatprep.subr.mxu0 0.0
    %3929 = vmatpush1.msra.mxu0 %v3890
    %3930 = vmatprep.subr.mxu0 0.0
    %3931 = vmatpush2.msra.mxu0 0.0
    %3932 = vmatprep.subr.mxu0 0.0
    %3933 = vmatpush2.msra.mxu0 0.0
    %3934 = vmatprep.subr.mxu0 0.0
    %3935 = vmatpush2.msra.mxu0 0.0
    %3936 = vmatprep.subr.mxu0 0.0
    %3937 = vmatpush2.msra.mxu0 0.0
    %3938 = vmatprep.subr.mxu0 0.0
    %3939 = vmatpush2.msra.mxu0 0.0
    %3940 = vmatprep.subr.mxu0 0.0
    %3941 = vmatpush2.msra.mxu0 0.0
    %3942 = vmatprep.subr.mxu0 0.0
    %3943 = vmatpush2.msra.mxu0 0.0
    %3944 = vmatprep.subr.mxu0 0.0
    %3945 = vmatpush2.msra.mxu0 0.0
    %3946 = vmatprep.subr.mxu0 0.0
    %3947 = vmatpush2.msra.mxu0 0.0
    %3948 = vmatprep.subr.mxu0 0.0
    %3949 = vmatpush2.msra.mxu0 0.0
    %3950 = vmatprep.subr.mxu0 0.0
    %3951 = vmatpush2.msra.mxu0 0.0
    %3952 = vmatprep.subr.mxu0 0.0
    %3953 = vmatpush2.msra.mxu0 0.0
    %3954 = vmatprep.subr.mxu0 0.0
    %3955 = vmatpush2.msra.mxu0 0.0
    %3956 = vmatprep.subr.mxu0 0.0
    %3957 = vmatpush2.msra.mxu0 0.0
    %3958 = vmatprep.subr.mxu0 0.0
    %3959 = vmatpush2.msra.mxu0 0.0
    %3960 = vmatprep.subr.mxu0 0.0
    %3961 = vmatpush2.msra.mxu0 0.0
    %3962 = vmatprep.mubr.f32.mxu0 0.0
    %3963 = vmatmul.mubr.f32.gmra.mxu0 %v1134
    %v3964 = vpop.f32.mrf.mxu0
    %v3965 = vadd.f32 0.0, %v3964
    %v3966 = vpop.f32.mrf.mxu0
    %3967 = vdwg.mxu0
    %v3968 = vmul.f32 %v3965, %v1209
    %v3969 = vlaneseq
    %v3970 = vshrl.u32 %v3969, 7
    %v3971 = vsub.s32 0, %v3970
    %v3972 = vrot.slane %v2955, %v3971
    %3974 = vrot.lane.b32.xlu0 %v3965, 32
    %v3975 = vpop.permute.xlu0 %3974
    %3978 = vrot.lane.b32.xlu0 %v3972, 64
    %v3979 = vpop.permute.xlu0 %3978
    %v3981 = vsel %vm669, %v2777, %v3975
    %v3982 = vsel %vm1132, %v3981, %v3979
    %v3983 = vld [vmem:[%s9 + $0x60] sm:$0xff]
    %v3984 = vld [vmem:[%s9 + $0x68] sm:$0xff]
    %v3985 = vld [vmem:[%s9 + $0x70] sm:$0xff]
    %v3986 = vld [vmem:[%s9 + $0x78] sm:$0xff]
    %v3987 = vld [vmem:[%s9 + $0x80] sm:$0xff]
    %v3988 = vld [vmem:[%s9 + $0x88] sm:$0xff]
    %v3989 = vld [vmem:[%s9 + $0x90] sm:$0xff]
    %v3990 = vld [vmem:[%s9 + $0x98] sm:$0xff]
    %v3991 = vld [vmem:[%s9 + $0xa0] sm:$0xff]
    %v3992 = vld [vmem:[%s9 + $0xa8] sm:$0xff]
    %v3993 = vld [vmem:[%s9 + $0xb0] sm:$0xff]
    %v3994 = vld [vmem:[%s9 + $0xb8] sm:$0xff]
    %v3995 = vlaneseq
    %v3996 = vshrl.u32 %v3995, 7
    %v3997 = vsub.s32 0, %v3996
    %v3998 = vrot.slane %v2968, %v3997
    %v4000 = vsel %vm2618, %v3982, 0
    %4002 = vmatprep.subr.mxu0 0.0
    %4003 = vmatpush1.msra.mxu0 0.0
    %4004 = vmatprep.subr.mxu0 0.0
    %4005 = vmatpush1.msra.mxu0 0.0
    %4006 = vmatprep.subr.mxu0 0.0
    %4007 = vmatpush1.msra.mxu0 0.0
    %4008 = vmatprep.subr.mxu0 0.0
    %4009 = vmatpush1.msra.mxu0 0.0
    %4010 = vmatprep.subr.mxu0 0.0
    %4011 = vmatpush1.msra.mxu0 %v3994
    %4012 = vmatprep.subr.mxu0 0.0
    %4013 = vmatpush1.msra.mxu0 %v3993
    %4014 = vmatprep.subr.mxu0 0.0
    %4015 = vmatpush1.msra.mxu0 %v3992
    %4016 = vmatprep.subr.mxu0 0.0
    %4017 = vmatpush1.msra.mxu0 %v3991
    %4018 = vmatprep.subr.mxu0 0.0
    %4019 = vmatpush1.msra.mxu0 %v3990
    %4020 = vmatprep.subr.mxu0 0.0
    %4021 = vmatpush1.msra.mxu0 %v3989
    %4022 = vmatprep.subr.mxu0 0.0
    %4023 = vmatpush1.msra.mxu0 %v3988
    %4024 = vmatprep.subr.mxu0 0.0
    %4025 = vmatpush1.msra.mxu0 %v3987
    %4026 = vmatprep.subr.mxu0 0.0
    %4027 = vmatpush1.msra.mxu0 %v3986
    %4028 = vmatprep.subr.mxu0 0.0
    %4029 = vmatpush1.msra.mxu0 %v3985
    %4030 = vmatprep.subr.mxu0 0.0
    %4031 = vmatpush1.msra.mxu0 %v3984
    %4032 = vmatprep.subr.mxu0 0.0
    %4033 = vmatpush1.msra.mxu0 %v3983
    %4034 = vmatprep.subr.mxu0 0.0
    %4035 = vmatpush2.msra.mxu0 0.0
    %4036 = vmatprep.subr.mxu0 0.0
    %4037 = vmatpush2.msra.mxu0 0.0
    %4038 = vmatprep.subr.mxu0 0.0
    %4039 = vmatpush2.msra.mxu0 0.0
    %4040 = vmatprep.subr.mxu0 0.0
    %4041 = vmatpush2.msra.mxu0 0.0
    %4042 = vmatprep.subr.mxu0 0.0
    %4043 = vmatpush2.msra.mxu0 0.0
    %4044 = vmatprep.subr.mxu0 0.0
    %4045 = vmatpush2.msra.mxu0 0.0
    %4046 = vmatprep.subr.mxu0 0.0
    %4047 = vmatpush2.msra.mxu0 0.0
    %4048 = vmatprep.subr.mxu0 0.0
    %4049 = vmatpush2.msra.mxu0 0.0
    %4050 = vmatprep.subr.mxu0 0.0
    %4051 = vmatpush2.msra.mxu0 0.0
    %4052 = vmatprep.subr.mxu0 0.0
    %4053 = vmatpush2.msra.mxu0 0.0
    %4054 = vmatprep.subr.mxu0 0.0
    %4055 = vmatpush2.msra.mxu0 0.0
    %4056 = vmatprep.subr.mxu0 0.0
    %4057 = vmatpush2.msra.mxu0 0.0
    %4058 = vmatprep.subr.mxu0 0.0
    %4059 = vmatpush2.msra.mxu0 0.0
    %4060 = vmatprep.subr.mxu0 0.0
    %4061 = vmatpush2.msra.mxu0 0.0
    %4062 = vmatprep.subr.mxu0 0.0
    %4063 = vmatpush2.msra.mxu0 0.0
    %4064 = vmatprep.subr.mxu0 0.0
    %4065 = vmatpush2.msra.mxu0 0.0
    %4066 = vmatprep.mubr.f32.mxu0 0.0
    %4067 = vmatmul.mubr.f32.gmra.mxu0 %v4000
    %v4068 = vpop.f32.mrf.mxu0
    %v4069 = vadd.f32 %v3998, %v4068
    %v4070 = vpop.f32.mrf.mxu0
    %4071 = vdwg.mxu0
    %v4072 = vsub.f32 0.0, %v4069
    %v4073 = vmul.f32 %v4072, 1.442695
    %v4074 = vpow.pop %v4073
    %v4075 = vadd.f32 %v4074, 1.0
    %v4076 = vrcp.pop %v4075
    %v4077 = vmul.f32 1.0, %v4076
    %v4078 = vmul.f32 %v4069, %v4077
    %v4079 = vld [vmem:[%s9 + $0xc0] sm:$0xff]
    %v4080 = vld [vmem:[%s9 + $0xc8] sm:$0xff]
    %v4081 = vld [vmem:[%s9 + $0xd0] sm:$0xff]
    %v4082 = vld [vmem:[%s9 + $0xd8] sm:$0xff]
    %v4083 = vlaneseq
    %v4084 = vshrl.u32 %v4083, 7
    %v4085 = vsub.s32 0, %v4084
    %v4086 = vrot.slane %v2969, %v4085
    %v4088 = vsel %vm669, %v4078, 0
    %4090 = vmatprep.subr.mxu0 0.0
    %4091 = vmatpush1.msra.mxu0 0.0
    %4092 = vmatprep.subr.mxu0 0.0
    %4093 = vmatpush1.msra.mxu0 0.0
    %4094 = vmatprep.subr.mxu0 0.0
    %4095 = vmatpush1.msra.mxu0 0.0
    %4096 = vmatprep.subr.mxu0 0.0
    %4097 = vmatpush1.msra.mxu0 0.0
    %4098 = vmatprep.subr.mxu0 0.0
    %4099 = vmatpush1.msra.mxu0 0.0
    %4100 = vmatprep.subr.mxu0 0.0
    %4101 = vmatpush1.msra.mxu0 0.0
    %4102 = vmatprep.subr.mxu0 0.0
    %4103 = vmatpush1.msra.mxu0 0.0
    %4104 = vmatprep.subr.mxu0 0.0
    %4105 = vmatpush1.msra.mxu0 0.0
    %4106 = vmatprep.subr.mxu0 0.0
    %4107 = vmatpush1.msra.mxu0 0.0
    %4108 = vmatprep.subr.mxu0 0.0
    %4109 = vmatpush1.msra.mxu0 0.0
    %4110 = vmatprep.subr.mxu0 0.0
    %4111 = vmatpush1.msra.mxu0 0.0
    %4112 = vmatprep.subr.mxu0 0.0
    %4113 = vmatpush1.msra.mxu0 0.0
    %4114 = vmatprep.subr.mxu0 0.0
    %4115 = vmatpush1.msra.mxu0 %v4082
    %4116 = vmatprep.subr.mxu0 0.0
    %4117 = vmatpush1.msra.mxu0 %v4081
    %4118 = vmatprep.subr.mxu0 0.0
    %4119 = vmatpush1.msra.mxu0 %v4080
    %4120 = vmatprep.subr.mxu0 0.0
    %4121 = vmatpush1.msra.mxu0 %v4079
    %4122 = vmatprep.subr.mxu0 0.0
    %4123 = vmatpush2.msra.mxu0 0.0
    %4124 = vmatprep.subr.mxu0 0.0
    %4125 = vmatpush2.msra.mxu0 0.0
    %4126 = vmatprep.subr.mxu0 0.0
    %4127 = vmatpush2.msra.mxu0 0.0
    %4128 = vmatprep.subr.mxu0 0.0
    %4129 = vmatpush2.msra.mxu0 0.0
    %4130 = vmatprep.subr.mxu0 0.0
    %4131 = vmatpush2.msra.mxu0 0.0
    %4132 = vmatprep.subr.mxu0 0.0
    %4133 = vmatpush2.msra.mxu0 0.0
    %4134 = vmatprep.subr.mxu0 0.0
    %4135 = vmatpush2.msra.mxu0 0.0
    %4136 = vmatprep.subr.mxu0 0.0
    %4137 = vmatpush2.msra.mxu0 0.0
    %4138 = vmatprep.subr.mxu0 0.0
    %4139 = vmatpush2.msra.mxu0 0.0
    %4140 = vmatprep.subr.mxu0 0.0
    %4141 = vmatpush2.msra.mxu0 0.0
    %4142 = vmatprep.subr.mxu0 0.0
    %4143 = vmatpush2.msra.mxu0 0.0
    %4144 = vmatprep.subr.mxu0 0.0
    %4145 = vmatpush2.msra.mxu0 0.0
    %4146 = vmatprep.subr.mxu0 0.0
    %4147 = vmatpush2.msra.mxu0 0.0
    %4148 = vmatprep.subr.mxu0 0.0
    %4149 = vmatpush2.msra.mxu0 0.0
    %4150 = vmatprep.subr.mxu0 0.0
    %4151 = vmatpush2.msra.mxu0 0.0
    %4152 = vmatprep.subr.mxu0 0.0
    %4153 = vmatpush2.msra.mxu0 0.0
    %4154 = vmatprep.mubr.f32.mxu0 0.0
    %4155 = vmatmul.mubr.f32.gmra.mxu0 %v4088
    %v4156 = vpop.f32.mrf.mxu0
    %v4157 = vadd.f32 %v4086, %v4156
    %v4158 = vpop.f32.mrf.mxu0
    %4159 = vdwg.mxu0
    %v4160 = vsel %vm669, %v4157, 0.0
    %v4161 = vrot.slane %v4160, 4
    %v4162 = vadd.f32 %v4160, %v4161
    %v4163 = vrot.slane %v4162, 2
    %v4164 = vadd.f32 %v4162, %v4163
    %v4165 = vrot.slane %v4164, 1
    %v4166 = vadd.f32 %v4164, %v4165
    %v4167 = vmul.f32 %v4166, 0.125
    %4169 = vrot.lane.b32.xlu0 %v4167, 32
    %v4170 = vpop.permute.xlu0 %4169
    %v4172 = vsel %vm669, %v2955, %v4170
    %v4173 = vld [vmem:[%s9 + $0xe0] sm:$0xff]
    %v4174 = vld [vmem:[%s9 + $0xe8] sm:$0xff]
    %v4175 = vld [vmem:[%s9 + $0xf0] sm:$0xff]
    %v4176 = vld [vmem:[%s9 + $0xf8] sm:$0xff]
    %v4177 = vld [vmem:[%s9 + $0x100] sm:$0xff]
    %v4178 = vld [vmem:[%s9 + $0x108] sm:$0xff]
    %v4179 = vld [vmem:[%s9 + $0x110] sm:$0xff]
    %v4180 = vld [vmem:[%s9 + $0x118] sm:$0xff]
    %v4182 = vsel %vm1132, %v4172, 0
    %4184 = vmatprep.subr.mxu0 0.0
    %4185 = vmatpush1.msra.mxu0 0.0
    %4186 = vmatprep.subr.mxu0 0.0
    %4187 = vmatpush1.msra.mxu0 0.0
    %4188 = vmatprep.subr.mxu0 0.0
    %4189 = vmatpush1.msra.mxu0 0.0
    %4190 = vmatprep.subr.mxu0 0.0
    %4191 = vmatpush1.msra.mxu0 0.0
    %4192 = vmatprep.subr.mxu0 0.0
    %4193 = vmatpush1.msra.mxu0 0.0
    %4194 = vmatprep.subr.mxu0 0.0
    %4195 = vmatpush1.msra.mxu0 0.0
    %4196 = vmatprep.subr.mxu0 0.0
    %4197 = vmatpush1.msra.mxu0 0.0
    %4198 = vmatprep.subr.mxu0 0.0
    %4199 = vmatpush1.msra.mxu0 0.0
    %4200 = vmatprep.subr.mxu0 0.0
    %4201 = vmatpush1.msra.mxu0 %v4180
    %4202 = vmatprep.subr.mxu0 0.0
    %4203 = vmatpush1.msra.mxu0 %v4179
    %4204 = vmatprep.subr.mxu0 0.0
    %4205 = vmatpush1.msra.mxu0 %v4178
    %4206 = vmatprep.subr.mxu0 0.0
    %4207 = vmatpush1.msra.mxu0 %v4177
    %4208 = vmatprep.subr.mxu0 0.0
    %4209 = vmatpush1.msra.mxu0 %v4176
    %4210 = vmatprep.subr.mxu0 0.0
    %4211 = vmatpush1.msra.mxu0 %v4175
    %4212 = vmatprep.subr.mxu0 0.0
    %4213 = vmatpush1.msra.mxu0 %v4174
    %4214 = vmatprep.subr.mxu0 0.0
    %4215 = vmatpush1.msra.mxu0 %v4173
    %4216 = vmatprep.subr.mxu0 0.0
    %4217 = vmatpush2.msra.mxu0 0.0
    %4218 = vmatprep.subr.mxu0 0.0
    %4219 = vmatpush2.msra.mxu0 0.0
    %4220 = vmatprep.subr.mxu0 0.0
    %4221 = vmatpush2.msra.mxu0 0.0
    %4222 = vmatprep.subr.mxu0 0.0
    %4223 = vmatpush2.msra.mxu0 0.0
    %4224 = vmatprep.subr.mxu0 0.0
    %4225 = vmatpush2.msra.mxu0 0.0
    %4226 = vmatprep.subr.mxu0 0.0
    %4227 = vmatpush2.msra.mxu0 0.0
    %4228 = vmatprep.subr.mxu0 0.0
    %4229 = vmatpush2.msra.mxu0 0.0
    %4230 = vmatprep.subr.mxu0 0.0
    %4231 = vmatpush2.msra.mxu0 0.0
    %4232 = vmatprep.subr.mxu0 0.0
    %4233 = vmatpush2.msra.mxu0 0.0
    %4234 = vmatprep.subr.mxu0 0.0
    %4235 = vmatpush2.msra.mxu0 0.0
    %4236 = vmatprep.subr.mxu0 0.0
    %4237 = vmatpush2.msra.mxu0 0.0
    %4238 = vmatprep.subr.mxu0 0.0
    %4239 = vmatpush2.msra.mxu0 0.0
    %4240 = vmatprep.subr.mxu0 0.0
    %4241 = vmatpush2.msra.mxu0 0.0
    %4242 = vmatprep.subr.mxu0 0.0
    %4243 = vmatpush2.msra.mxu0 0.0
    %4244 = vmatprep.subr.mxu0 0.0
    %4245 = vmatpush2.msra.mxu0 0.0
    %4246 = vmatprep.subr.mxu0 0.0
    %4247 = vmatpush2.msra.mxu0 0.0
    %4248 = vmatprep.mubr.f32.mxu0 0.0
    %4249 = vmatmul.mubr.f32.gmra.mxu0 %v4182
    %v4250 = vpop.f32.mrf.mxu0
    %v4251 = vadd.f32 %v2970, %v4250
    %v4252 = vpop.f32.mrf.mxu0
    %4253 = vdwg.mxu0
    %v4254 = vsub.f32 0.0, %v4251
    %v4255 = vmul.f32 %v4254, 1.442695
    %v4256 = vpow.pop %v4255
    %v4257 = vadd.f32 %v4256, 1.0
    %v4258 = vrcp.pop %v4257
    %v4259 = vmul.f32 1.0, %v4258
    %v4260 = vmul.f32 %v4251, %v4259
    %v4261 = vld [vmem:[%s9 + $0x120] sm:$0xff]
    %v4262 = vld [vmem:[%s9 + $0x128] sm:$0xff]
    %v4263 = vld [vmem:[%s9 + $0x130] sm:$0xff]
    %v4264 = vld [vmem:[%s9 + $0x138] sm:$0xff]
    %v4266 = vsel %vm669, %v4260, 0
    %4268 = vmatprep.subr.mxu0 0.0
    %4269 = vmatpush1.msra.mxu0 0.0
    %4270 = vmatprep.subr.mxu0 0.0
    %4271 = vmatpush1.msra.mxu0 0.0
    %4272 = vmatprep.subr.mxu0 0.0
    %4273 = vmatpush1.msra.mxu0 0.0
    %4274 = vmatprep.subr.mxu0 0.0
    %4275 = vmatpush1.msra.mxu0 0.0
    %4276 = vmatprep.subr.mxu0 0.0
    %4277 = vmatpush1.msra.mxu0 0.0
    %4278 = vmatprep.subr.mxu0 0.0
    %4279 = vmatpush1.msra.mxu0 0.0
    %4280 = vmatprep.subr.mxu0 0.0
    %4281 = vmatpush1.msra.mxu0 0.0
    %4282 = vmatprep.subr.mxu0 0.0
    %4283 = vmatpush1.msra.mxu0 0.0
    %4284 = vmatprep.subr.mxu0 0.0
    %4285 = vmatpush1.msra.mxu0 0.0
    %4286 = vmatprep.subr.mxu0 0.0
    %4287 = vmatpush1.msra.mxu0 0.0
    %4288 = vmatprep.subr.mxu0 0.0
    %4289 = vmatpush1.msra.mxu0 0.0
    %4290 = vmatprep.subr.mxu0 0.0
    %4291 = vmatpush1.msra.mxu0 0.0
    %4292 = vmatprep.subr.mxu0 0.0
    %4293 = vmatpush1.msra.mxu0 %v4264
    %4294 = vmatprep.subr.mxu0 0.0
    %4295 = vmatpush1.msra.mxu0 %v4263
    %4296 = vmatprep.subr.mxu0 0.0
    %4297 = vmatpush1.msra.mxu0 %v4262
    %4298 = vmatprep.subr.mxu0 0.0
    %4299 = vmatpush1.msra.mxu0 %v4261
    %4300 = vmatprep.subr.mxu0 0.0
    %4301 = vmatpush2.msra.mxu0 0.0
    %4302 = vmatprep.subr.mxu0 0.0
    %4303 = vmatpush2.msra.mxu0 0.0
    %4304 = vmatprep.subr.mxu0 0.0
    %4305 = vmatpush2.msra.mxu0 0.0
    %4306 = vmatprep.subr.mxu0 0.0
    %4307 = vmatpush2.msra.mxu0 0.0
    %4308 = vmatprep.subr.mxu0 0.0
    %4309 = vmatpush2.msra.mxu0 0.0
    %4310 = vmatprep.subr.mxu0 0.0
    %4311 = vmatpush2.msra.mxu0 0.0
    %4312 = vmatprep.subr.mxu0 0.0
    %4313 = vmatpush2.msra.mxu0 0.0
    %4314 = vmatprep.subr.mxu0 0.0
    %4315 = vmatpush2.msra.mxu0 0.0
    %4316 = vmatprep.subr.mxu0 0.0
    %4317 = vmatpush2.msra.mxu0 0.0
    %4318 = vmatprep.subr.mxu0 0.0
    %4319 = vmatpush2.msra.mxu0 0.0
    %4320 = vmatprep.subr.mxu0 0.0
    %4321 = vmatpush2.msra.mxu0 0.0
    %4322 = vmatprep.subr.mxu0 0.0
    %4323 = vmatpush2.msra.mxu0 0.0
    %4324 = vmatprep.subr.mxu0 0.0
    %4325 = vmatpush2.msra.mxu0 0.0
    %4326 = vmatprep.subr.mxu0 0.0
    %4327 = vmatpush2.msra.mxu0 0.0
    %4328 = vmatprep.subr.mxu0 0.0
    %4329 = vmatpush2.msra.mxu0 0.0
    %4330 = vmatprep.subr.mxu0 0.0
    %4331 = vmatpush2.msra.mxu0 0.0
    %4332 = vmatprep.mubr.f32.mxu0 0.0
    %4333 = vmatmul.mubr.f32.gmra.mxu0 %v4266
    %v4334 = vpop.f32.mrf.mxu0
    %v4335 = vadd.f32 0.0, %v4334
    %v4336 = vpop.f32.mrf.mxu0
    %4337 = vdwg.mxu0
    %4339 = vrot.lane.b32.xlu0 %v3968, 96
    %v4340 = vpop.permute.xlu0 %4339
    %v4342 = vadd.f32 %v2962, %v4340
    %4343 = vst.msk [vmem:[#allocation2] sm:$0xff] %vm669, %v4157
    %4344 = vst.msk [vmem:[%s11] sm:$0xff] %vm183, %v4342
    %vm4345 = vcmask 253952
    %4346 = vst.msk [vmem:[#allocation4] sm:$0x1] %vm4345, %v4335
    // Predicated region
    $region42: #{_lambda_.1} parent=1 // pred_check
      _
    $region43: #{_lambda_.1} parent=1 // pred_check_branch
      %4348 = sbr.rel (0) target = $region45
    $region44: #{_lambda_.1} parent=1 // pred_region
      %s4350 = ssub.s32 128, 128
      %4351 = vsyncadd [#allocation3], %s4350
      %s4353 = sshll.u32 [#allocation2], 4
      %s4354 = int_to_ptr.vmem [resolvable:$true] %s4353
      %4356 = dma.vmem_to_hbm [thread:$0]  %s4354, 128, %s10, [#allocation3]
    $region45: #{_lambda_.1} parent=1 // pred_fallthru
      _
    // Predicated region
    $region46: #{_lambda_.1} parent=1 // pred_check
      _
    $region47: #{_lambda_.1} parent=1 // pred_check_branch
      %4358 = sbr.rel (0) target = $region49
    $region48: #{_lambda_.1} parent=1 // pred_region
      _
    $region49: #{_lambda_.1} parent=1 // pred_fallthru
      _
    // Predicated region
    $region50: #{_lambda_.1} parent=1 // pred_check
      _
    $region51: #{_lambda_.1} parent=1 // pred_check_branch
      %4360 = sbr.rel (0) target = $region53
    $region52: #{_lambda_.1} parent=1 // pred_region
      %s4362 = ssub.s32 16, 16
      %4363 = vsyncadd [#allocation5], %s4362
      %s4365 = sshll.u32 [#allocation4], 4
      %s4366 = int_to_ptr.vmem [resolvable:$true] %s4365
      %4368 = dma.vmem_to_hbm [thread:$0]  %s4366, 16, %s12, [#allocation5]
    $region53: #{_lambda_.1} parent=1 // pred_fallthru
      _
    // Predicated region
    $region54: #{_lambda_.1} parent=1 // pred_check
      _
    $region55: #{_lambda_.1} parent=1 // pred_check_branch
      %4370 = sbr.rel (0) target = $region57
    $region56: #{_lambda_.1} parent=1 // pred_region
      %4371 = dma.done [#allocation3], 128
    $region57: #{_lambda_.1} parent=1 // pred_fallthru
      _
    // Predicated region
    $region58: #{_lambda_.1} parent=1 // pred_check
      _
    $region59: #{_lambda_.1} parent=1 // pred_check_branch
      %4373 = sbr.rel (0) target = $region61
    $region60: #{_lambda_.1} parent=1 // pred_region
      _
    $region61: #{_lambda_.1} parent=1 // pred_fallthru
      _
    // Predicated region
    $region62: #{_lambda_.1} parent=1 // pred_check
      _
    $region63: #{_lambda_.1} parent=1 // pred_check_branch
      %4375 = sbr.rel (0) target = $region65
    $region64: #{_lambda_.1} parent=1 // pred_region
      %4376 = dma.done [#allocation5], 16
    $region65: #{_lambda_.1} parent=1 // pred_fallthru
      _
    %4377 = vsyncpa [#allocation3], 1
    %4378 = vsyncpa [#allocation5], 1

</llo_original>
